<compile_context>
chip_gen: v7x
topology: tpu7x:2x2x1
jax: 0.10.0
libtpu: 0.0.40
codegen_flags: <defaults>
</compile_context>

<pallas_src>
import jax
import jax.numpy as jnp
import numpy as np
from jax.experimental import pallas as pl
from jax.experimental.pallas import tpu as pltpu

EXPANSION = 4
BN_EPS = 1e-5
LANE = 128


def _round_up(x, m):
    return (x + m - 1) // m * m


def _fold_bn(gamma, beta, mean, var):
    scale = gamma / jnp.sqrt(var + BN_EPS)
    bias = beta - mean * scale
    return scale.astype(jnp.float32), bias.astype(jnp.float32)


def _make_kernel(stride, has_proj, spare, Ho, Wo, Hf, Wp, Pp, Coutp):
    """Fused Bottleneck kernel for one image (one grid step)."""
    R = Hf * Wp                         # flat rows of the padded input frame
    if stride == 1:
        M = Ho * Wp                     # conv2/3 rows (2 junk cols per row)
    else:
        M = Ho * Wo

    def kernel(*refs):
        it = iter(refs)
        x_ref = next(it)
        xsc_ref = next(it) if stride != 1 else None
        mask_ref = None if spare else next(it)
        w1_ref = next(it)
        b1_ref = None if spare else next(it)
        w2_ref = next(it)
        b2_ref = next(it)
        w3_ref = next(it)
        b3_ref = next(it)
        wsc_ref = next(it) if has_proj else None
        bsc_ref = next(it) if has_proj else None
        out_ref = next(it)

        # ---- conv1 (1x1) + folded BN + ReLU over the zero-padded frame -----
        x = x_ref[...].reshape(R, -1)                     # bf16, layout-free
        o1 = jnp.dot(x, w1_ref[...], preferred_element_type=jnp.float32)
        if spare:
            # bias arrives via the interior-indicator channel, so the border
            # is exactly zero after the ReLU (it is conv2's zero padding).
            o1 = jnp.maximum(o1, 0.0)
        else:
            o1 = jnp.maximum(o1 + b1_ref[...], 0.0) * mask_ref[...]
        o1 = o1.astype(jnp.bfloat16)                      # (R, Pp)

        # ---- conv2 (3x3, stride): 3 accumulating matmuls, K = 3*Pp ---------
        o2 = None
        for kh in range(3):
            if stride == 1:
                base = kh * Wp
                taps = [jax.lax.slice_in_dim(o1, base + kw, base + kw + M,
                                             axis=0)
                        for kw in range(3)]
            else:
                # relayout-heavy fallback (only hit for strided blocks)
                o1_3d = o1.reshape(Hf, Wp, Pp)
                span_h = (Ho - 1) * stride + 1
                span_w = (Wo - 1) * stride + 1
                taps = [jax.lax.slice(o1_3d, (kh, kw, 0),
                                      (kh + span_h, kw + span_w, Pp),
                                      (stride, stride, 1)).reshape(M, Pp)
                        for kw in range(3)]
            grp = jnp.concatenate(taps, axis=-1)          # (M, 3*Pp) bf16
            part = jnp.dot(grp, w2_ref[kh],
                           preferred_element_type=jnp.float32)
            o2 = part if o2 is None else o2 + part
        o2 = jnp.maximum(o2 + b2_ref[...], 0.0).astype(jnp.bfloat16)

        # ---- conv3 (1x1) + folded BN ----------------------------------------
        o3 = jnp.dot(o2, w3_ref[...], preferred_element_type=jnp.float32)
        o3 = o3 + b3_ref[...]                             # (M, Coutp) f32

        # ---- shortcut (identity or 1x1 projection) ---------------------------
        if stride == 1:
            # interior of the already-resident padded input (no extra DMA)
            xs = jax.lax.slice_in_dim(x, Wp + 1, Wp + 1 + M, axis=0)
        else:
            xs = xsc_ref[...].reshape(M, -1)
        if has_proj:
            sc = jnp.dot(xs, wsc_ref[...],
                         preferred_element_type=jnp.float32)
            sc = sc + bsc_ref[...]
        else:
            sc = xs                                       # bf16 -> f32 add

        out = jnp.maximum(o3 + sc, 0.0).astype(out_ref.dtype)
        if stride == 1:
            out = out.reshape(Ho, Wp, Coutp)[:, :Wo, :]   # drop 2 junk cols
        else:
            out = out.reshape(Ho, Wo, Coutp)
        out_ref[...] = out.reshape(1, Ho, Wo, Coutp)

    return kernel


def bottleneck_forward(x_nchw, params, in_planes, planes, stride=1,
                       out_dtype=jnp.bfloat16):
    """x_nchw: (N, Cin, H, W) f32 -> (N, 4*planes, Ho, Wo) f32 (inference BN)."""
    N, Cin, H, W = x_nchw.shape
    assert Cin == in_planes
    P = planes
    Cout = EXPANSION * P
    has_proj = (stride != 1) or (in_planes != Cout)
    Ho = (H - 1) // stride + 1
    Wo = (W - 1) // stride + 1
    Wp = W + 2
    # stride==1: one extra zero bottom row so every conv2 tap is a plain
    # in-bounds row-offset slice of the flat conv1 output.
    Hf = H + 3 if stride == 1 else H + 2
    R = Hf * Wp

    Cin_p = _round_up(Cin, LANE)
    P_p = _round_up(P, LANE)
    Cout_p = _round_up(Cout, LANE)
    spare = Cin_p > Cin               # spare input lane carries the conv1 bias

    x = jnp.transpose(x_nchw, (0, 2, 3, 1)).astype(jnp.float32)     # NHWC

    s1, b1 = _fold_bn(*params["bn1"])
    s2, b2 = _fold_bn(*params["bn2"])
    s3, b3 = _fold_bn(*params["bn3"])

    def pad2(w, r, c):
        return jnp.pad(w, ((0, r - w.shape[0]), (0, c - w.shape[1])))

    def pad_bias(b, c):
        return jnp.pad(b, (0, c - b.shape[0])).reshape(1, c).astype(jnp.float32)

    # BN scales folded into weights host-side, channels padded, bf16 operands.
    w1p = pad2(params["w1"] * s1[None, :], Cin_p, P_p)
    if spare:
        w1p = w1p.at[Cin, :P].set(b1)     # conv1 bias via indicator channel
    w1p = w1p.astype(jnp.bfloat16)
    w2s = params["w2"] * s2[None, None, None, :]                 # (3,3,P,P)
    w2p = jnp.pad(w2s, ((0, 0), (0, 0), (0, P_p - P), (0, P_p - P)))
    w2g = w2p.reshape(3, 3 * P_p, P_p).astype(jnp.bfloat16)      # per-kh groups
    w3p = pad2(params["w3"] * s3[None, :], P_p, Cout_p).astype(jnp.bfloat16)
    b2p, b3p = pad_bias(b2, P_p), pad_bias(b3, Cout_p)

    # Padded input frame: spatial zero border + channel padding, flattened to
    # (rows, C) so the in-kernel view is layout-free; bf16 for the MXU.
    x_p = jnp.pad(x, ((0, 0), (1, Hf - H - 1), (1, 1), (0, Cin_p - Cin)))
    hi = np.arange(Hf)[:, None]
    wi = np.arange(Wp)[None, :]
    interior = (hi >= 1) & (hi <= H) & (wi >= 1) & (wi <= W)
    if spare:
        x_p = x_p.at[:, :, :, Cin].set(jnp.asarray(interior, jnp.float32))
    x_pad = x_p.astype(jnp.bfloat16).reshape(N, R, Cin_p)

    kernel = _make_kernel(stride, has_proj, spare, Ho, Wo, Hf, Wp, P_p, Cout_p)

    const2 = lambda n: (0, 0)
    const3 = lambda n: (0, 0, 0)

    in_specs = [pl.BlockSpec((1, R, Cin_p), lambda n: (n, 0, 0))]
    args = [x_pad]

    if stride != 1:
        # bf16 subsampled shortcut input (only needed for strided blocks)
        x_sc = x[:, ::stride, ::stride, :]
        x_sc = jnp.pad(x_sc, ((0, 0), (0, 0), (0, 0), (0, Cin_p - Cin)))
        x_sc = x_sc.astype(jnp.bfloat16).reshape(N, Ho * Wo, Cin_p)
        in_specs.append(pl.BlockSpec((1, Ho * Wo, Cin_p), lambda n: (n, 0, 0)))
        args.append(x_sc)

    if not spare:
        # Cin is already a lane multiple: fall back to an explicit border mask.
        mask = jnp.asarray(interior.reshape(R, 1), jnp.float32)
        in_specs.append(pl.BlockSpec((R, 1), const2))
        args.append(mask)

    in_specs.append(pl.BlockSpec((Cin_p, P_p), const2)); args.append(w1p)
    if not spare:
        in_specs.append(pl.BlockSpec((1, P_p), const2))
        args.append(pad_bias(b1, P_p))
    in_specs += [pl.BlockSpec((3, 3 * P_p, P_p), const3),
                 pl.BlockSpec((1, P_p), const2),
                 pl.BlockSpec((P_p, Cout_p), const2),
                 pl.BlockSpec((1, Cout_p), const2)]
    args += [w2g, b2p, w3p, b3p]

    if has_proj:
        ssc, bsc = _fold_bn(*params["bnsc"])
        wscp = pad2(params["wsc"] * ssc[None, :], Cin_p,
                    Cout_p).astype(jnp.bfloat16)
        in_specs += [pl.BlockSpec((Cin_p, Cout_p), const2),
                     pl.BlockSpec((1, Cout_p), const2)]
        args += [wscp, pad_bias(bsc, Cout_p)]

    out_nhwc = pl.pallas_call(
        kernel,
        out_shape=jax.ShapeDtypeStruct((N, Ho, Wo, Cout_p), out_dtype),
        grid=(N,),
        in_specs=in_specs,
        out_specs=pl.BlockSpec((1, Ho, Wo, Cout_p), lambda n: (n, 0, 0, 0)),
        compiler_params=pltpu.CompilerParams(
            dimension_semantics=("parallel",),
            vmem_limit_bytes=64 * 1024 * 1024),
    )(*args)

    # TODO(synk): when chaining Bottleneck blocks, keep padded NHWC bf16 and
    # skip the slice / transpose / f32 cast below.
    out = out_nhwc if Cout_p == Cout else out_nhwc[:, :, :, :Cout]
    return jnp.transpose(out, (0, 3, 1, 2)).astype(jnp.float32)


# ---------------- parameter init (matches the torch module's shapes) ----------
def init_params(key, in_planes, planes):
    cout = EXPANSION * planes
    ks = jax.random.split(key, 16)

    def conv_w(k, shape):
        return jax.random.normal(k, shape, jnp.float32) * 0.1

    def bn(k, c):
        k1, k2, k3, k4 = jax.random.split(k, 4)
        gamma = 1.0 + 0.1 * jax.random.normal(k1, (c,), jnp.float32)
        beta = 0.1 * jax.random.normal(k2, (c,), jnp.float32)
        mean = 0.1 * jax.random.normal(k3, (c,), jnp.float32)
        var = 1.0 + 0.1 * jax.random.uniform(k4, (c,), jnp.float32)
        return gamma, beta, mean, var

    return {
        "w1": conv_w(ks[0], (in_planes, planes)),          # (Cin, P)
        "bn1": bn(ks[1], planes),
        "w2": conv_w(ks[2], (3, 3, planes, planes)),       # HWIO
        "bn2": bn(ks[3], planes),
        "w3": conv_w(ks[4], (planes, cout)),               # (P, 4P)
        "bn3": bn(ks[5], cout),
        "wsc": conv_w(ks[6], (in_planes, cout)),           # (Cin, 4P)
        "bnsc": bn(ks[7], cout),
    }


# ---------------- pure-JAX reference (for sanity checking) --------------------
def _reference(x_nchw, params, in_planes, planes, stride):
    x = jnp.transpose(x_nchw, (0, 2, 3, 1)).astype(jnp.float32)
    Cout = EXPANSION * planes
    dn = ("NHWC", "HWIO", "NHWC")

    def conv(inp, w, strd, pad):
        return jax.lax.conv_general_dilated(inp, w, (strd, strd), pad,
                                            dimension_numbers=dn)

    s1, b1 = _fold_bn(*params["bn1"])
    s2, b2 = _fold_bn(*params["bn2"])
    s3, b3 = _fold_bn(*params["bn3"])

    o = conv(x, params["w1"][None, None], 1, [(0, 0), (0, 0)])
    o = jnp.maximum(o * s1 + b1, 0.0)
    o = conv(o, params["w2"], stride, [(1, 1), (1, 1)])
    o = jnp.maximum(o * s2 + b2, 0.0)
    o = conv(o, params["w3"][None, None], 1, [(0, 0), (0, 0)])
    o = o * s3 + b3

    if stride != 1 or in_planes != Cout:
        ssc, bsc = _fold_bn(*params["bnsc"])
        sc = conv(x, params["wsc"][None, None], stride, [(0, 0), (0, 0)])
        sc = sc * ssc + bsc
    else:
        sc = x
    out = jnp.maximum(o + sc, 0.0)
    return jnp.transpose(out, (0, 3, 1, 2))


if __name__ == "__main__":
    key = jax.random.PRNGKey(0)
    fwd = jax.jit(bottleneck_forward, static_argnums=(2, 3, 4))

    configs = [
        # (N, in_planes, H, W, planes, stride)
        (2, 4, 16, 16, 4, 1),     # projection-shortcut block (spec's example)
        (2, 16, 16, 16, 4, 1),    # identity-shortcut block
    ]
    for (N, cin, H, W, P, s) in configs:
        kx, kp, key = jax.random.split(key, 3)
        x = jax.random.normal(kx, (N, cin, H, W), jnp.float32)
        params = init_params(kp, cin, P)

        out = jax.block_until_ready(fwd(x, params, cin, P, s))
        ref = jax.block_until_ready(_reference(x, params, cin, P, s))
        # bf16 matmul operands / bf16 output (f32 MXU accumulation)
        np.testing.assert_allclose(np.asarray(out), np.asarray(ref),
                                   rtol=2e-2, atol=2e-2)

    print("KERNEL_OK")
</pallas_src>

<mosaic_0001>
module attributes {stable_mosaic.version = 11 : i64} {
  func.func @kernel(%arg0: i32, %arg1: memref<1x342x128xbf16, #tpu.memory_space<vmem>>, %arg2: memref<128x128xbf16, #tpu.memory_space<vmem>>, %arg3: memref<3x384x128xbf16, #tpu.memory_space<vmem>>, %arg4: memref<1x128xf32, #tpu.memory_space<vmem>>, %arg5: memref<128x128xbf16, #tpu.memory_space<vmem>>, %arg6: memref<1x128xf32, #tpu.memory_space<vmem>>, %arg7: memref<128x128xbf16, #tpu.memory_space<vmem>>, %arg8: memref<1x128xf32, #tpu.memory_space<vmem>>, %arg9: memref<1x16x16x128xbf16, #tpu.memory_space<vmem>>) attributes {dimension_semantics = [#tpu.dimension_semantics<parallel>], iteration_bounds = array<i64: 2>, scalar_prefetch = 0 : i64, scratch_operands = 0 : i64, tpu.core_type = #tpu.core_type<tc>, window_params = [{transform_indices = @transform_0, window_bounds = array<i64: 1, 342, 128>}, {pipeline_mode = #tpu.pipeline_mode<synchronous>, transform_indices = @transform_1, window_bounds = array<i64: 128, 128>}, {pipeline_mode = #tpu.pipeline_mode<synchronous>, transform_indices = @transform_2, window_bounds = array<i64: 3, 384, 128>}, {pipeline_mode = #tpu.pipeline_mode<synchronous>, transform_indices = @transform_3, window_bounds = array<i64: 1, 128>}, {pipeline_mode = #tpu.pipeline_mode<synchronous>, transform_indices = @transform_4, window_bounds = array<i64: 128, 128>}, {pipeline_mode = #tpu.pipeline_mode<synchronous>, transform_indices = @transform_5, window_bounds = array<i64: 1, 128>}, {pipeline_mode = #tpu.pipeline_mode<synchronous>, transform_indices = @transform_6, window_bounds = array<i64: 128, 128>}, {pipeline_mode = #tpu.pipeline_mode<synchronous>, transform_indices = @transform_7, window_bounds = array<i64: 1, 128>}, {transform_indices = @transform_8, window_bounds = array<i64: 1, 16, 16, 128>}]} {
    %c0 = arith.constant 0 : index
    %c0_0 = arith.constant 0 : index
    %c0_1 = arith.constant 0 : index
    %0 = vector.load %arg1[%c0, %c0_0, %c0_1] : memref<1x342x128xbf16, #tpu.memory_space<vmem>>, vector<1x342x128xbf16>
    %1 = vector.shape_cast %0 : vector<1x342x128xbf16> to vector<342x128xbf16>
    %c0_2 = arith.constant 0 : index
    %c0_3 = arith.constant 0 : index
    %2 = vector.load %arg2[%c0_2, %c0_3] : memref<128x128xbf16, #tpu.memory_space<vmem>>, vector<128x128xbf16>
    %cst = arith.constant dense<0.000000e+00> : vector<342x128xf32>
    %3 = tpu.matmul %1, %2, %cst {dimension_numbers = #tpu.dot_dimension_numbers<[1], [0], [0], [1], [0, 0, 1, 1], [], []>} : vector<342x128xbf16>, vector<128x128xbf16>, vector<342x128xf32> -> vector<342x128xf32>
    %cst_4 = arith.constant 0.000000e+00 : f32
    %4 = vector.broadcast %cst_4 : f32 to vector<342x128xf32>
    %5 = arith.maximumf %3, %4 : vector<342x128xf32>
    %6 = arith.truncf %5 : vector<342x128xf32> to vector<342x128xbf16>
    %7 = vector.extract_strided_slice %6 {offsets = [0, 0], sizes = [288, 128], strides = [1, 1]} : vector<342x128xbf16> to vector<288x128xbf16>
    %8 = vector.extract_strided_slice %6 {offsets = [1, 0], sizes = [288, 128], strides = [1, 1]} : vector<342x128xbf16> to vector<288x128xbf16>
    %9 = vector.extract_strided_slice %6 {offsets = [2, 0], sizes = [288, 128], strides = [1, 1]} : vector<342x128xbf16> to vector<288x128xbf16>
    %10 = tpu.concatenate %7, %8, %9 in 1 : vector<288x128xbf16>, vector<288x128xbf16>, vector<288x128xbf16> -> vector<288x384xbf16>
    %c0_5 = arith.constant 0 : index
    %c0_6 = arith.constant 0 : index
    %c0_7 = arith.constant 0 : index
    %11 = vector.load %arg3[%c0_5, %c0_6, %c0_7] : memref<3x384x128xbf16, #tpu.memory_space<vmem>>, vector<1x384x128xbf16>
    %12 = vector.shape_cast %11 : vector<1x384x128xbf16> to vector<384x128xbf16>
    %cst_8 = arith.constant dense<0.000000e+00> : vector<288x128xf32>
    %13 = tpu.matmul %10, %12, %cst_8 {dimension_numbers = #tpu.dot_dimension_numbers<[1], [0], [0], [1], [0, 0, 1, 1], [], []>} : vector<288x384xbf16>, vector<384x128xbf16>, vector<288x128xf32> -> vector<288x128xf32>
    %14 = vector.extract_strided_slice %6 {offsets = [18, 0], sizes = [288, 128], strides = [1, 1]} : vector<342x128xbf16> to vector<288x128xbf16>
    %15 = vector.extract_strided_slice %6 {offsets = [19, 0], sizes = [288, 128], strides = [1, 1]} : vector<342x128xbf16> to vector<288x128xbf16>
    %16 = vector.extract_strided_slice %6 {offsets = [20, 0], sizes = [288, 128], strides = [1, 1]} : vector<342x128xbf16> to vector<288x128xbf16>
    %17 = tpu.concatenate %14, %15, %16 in 1 : vector<288x128xbf16>, vector<288x128xbf16>, vector<288x128xbf16> -> vector<288x384xbf16>
    %c1 = arith.constant 1 : index
    %c0_9 = arith.constant 0 : index
    %c0_10 = arith.constant 0 : index
    %18 = vector.load %arg3[%c1, %c0_9, %c0_10] : memref<3x384x128xbf16, #tpu.memory_space<vmem>>, vector<1x384x128xbf16>
    %19 = vector.shape_cast %18 : vector<1x384x128xbf16> to vector<384x128xbf16>
    %cst_11 = arith.constant dense<0.000000e+00> : vector<288x128xf32>
    %20 = tpu.matmul %17, %19, %cst_11 {dimension_numbers = #tpu.dot_dimension_numbers<[1], [0], [0], [1], [0, 0, 1, 1], [], []>} : vector<288x384xbf16>, vector<384x128xbf16>, vector<288x128xf32> -> vector<288x128xf32>
    %21 = arith.addf %13, %20 : vector<288x128xf32>
    %22 = vector.extract_strided_slice %6 {offsets = [36, 0], sizes = [288, 128], strides = [1, 1]} : vector<342x128xbf16> to vector<288x128xbf16>
    %23 = vector.extract_strided_slice %6 {offsets = [37, 0], sizes = [288, 128], strides = [1, 1]} : vector<342x128xbf16> to vector<288x128xbf16>
    %24 = vector.extract_strided_slice %6 {offsets = [38, 0], sizes = [288, 128], strides = [1, 1]} : vector<342x128xbf16> to vector<288x128xbf16>
    %25 = tpu.concatenate %22, %23, %24 in 1 : vector<288x128xbf16>, vector<288x128xbf16>, vector<288x128xbf16> -> vector<288x384xbf16>
    %c2 = arith.constant 2 : index
    %c0_12 = arith.constant 0 : index
    %c0_13 = arith.constant 0 : index
    %26 = vector.load %arg3[%c2, %c0_12, %c0_13] : memref<3x384x128xbf16, #tpu.memory_space<vmem>>, vector<1x384x128xbf16>
    %27 = vector.shape_cast %26 : vector<1x384x128xbf16> to vector<384x128xbf16>
    %cst_14 = arith.constant dense<0.000000e+00> : vector<288x128xf32>
    %28 = tpu.matmul %25, %27, %cst_14 {dimension_numbers = #tpu.dot_dimension_numbers<[1], [0], [0], [1], [0, 0, 1, 1], [], []>} : vector<288x384xbf16>, vector<384x128xbf16>, vector<288x128xf32> -> vector<288x128xf32>
    %29 = arith.addf %21, %28 : vector<288x128xf32>
    %c0_15 = arith.constant 0 : index
    %c0_16 = arith.constant 0 : index
    %30 = vector.load %arg4[%c0_15, %c0_16] : memref<1x128xf32, #tpu.memory_space<vmem>>, vector<1x128xf32>
    %31 = vector.broadcast %30 : vector<1x128xf32> to vector<288x128xf32>
    %32 = arith.addf %29, %31 : vector<288x128xf32>
    %cst_17 = arith.constant 0.000000e+00 : f32
    %33 = vector.broadcast %cst_17 : f32 to vector<288x128xf32>
    %34 = arith.maximumf %32, %33 : vector<288x128xf32>
    %35 = arith.truncf %34 : vector<288x128xf32> to vector<288x128xbf16>
    %c0_18 = arith.constant 0 : index
    %c0_19 = arith.constant 0 : index
    %36 = vector.load %arg5[%c0_18, %c0_19] : memref<128x128xbf16, #tpu.memory_space<vmem>>, vector<128x128xbf16>
    %cst_20 = arith.constant dense<0.000000e+00> : vector<288x128xf32>
    %37 = tpu.matmul %35, %36, %cst_20 {dimension_numbers = #tpu.dot_dimension_numbers<[1], [0], [0], [1], [0, 0, 1, 1], [], []>} : vector<288x128xbf16>, vector<128x128xbf16>, vector<288x128xf32> -> vector<288x128xf32>
    %c0_21 = arith.constant 0 : index
    %c0_22 = arith.constant 0 : index
    %38 = vector.load %arg6[%c0_21, %c0_22] : memref<1x128xf32, #tpu.memory_space<vmem>>, vector<1x128xf32>
    %39 = vector.broadcast %38 : vector<1x128xf32> to vector<288x128xf32>
    %40 = arith.addf %37, %39 : vector<288x128xf32>
    %41 = vector.extract_strided_slice %1 {offsets = [19, 0], sizes = [288, 128], strides = [1, 1]} : vector<342x128xbf16> to vector<288x128xbf16>
    %c0_23 = arith.constant 0 : index
    %c0_24 = arith.constant 0 : index
    %42 = vector.load %arg7[%c0_23, %c0_24] : memref<128x128xbf16, #tpu.memory_space<vmem>>, vector<128x128xbf16>
    %cst_25 = arith.constant dense<0.000000e+00> : vector<288x128xf32>
    %43 = tpu.matmul %41, %42, %cst_25 {dimension_numbers = #tpu.dot_dimension_numbers<[1], [0], [0], [1], [0, 0, 1, 1], [], []>} : vector<288x128xbf16>, vector<128x128xbf16>, vector<288x128xf32> -> vector<288x128xf32>
    %c0_26 = arith.constant 0 : index
    %c0_27 = arith.constant 0 : index
    %44 = vector.load %arg8[%c0_26, %c0_27] : memref<1x128xf32, #tpu.memory_space<vmem>>, vector<1x128xf32>
    %45 = vector.broadcast %44 : vector<1x128xf32> to vector<288x128xf32>
    %46 = arith.addf %43, %45 : vector<288x128xf32>
    %47 = arith.addf %40, %46 : vector<288x128xf32>
    %cst_28 = arith.constant 0.000000e+00 : f32
    %48 = vector.broadcast %cst_28 : f32 to vector<288x128xf32>
    %49 = arith.maximumf %47, %48 : vector<288x128xf32>
    %50 = arith.truncf %49 : vector<288x128xf32> to vector<288x128xbf16>
    %51 = vector.shape_cast %50 : vector<288x128xbf16> to vector<16x18x128xbf16>
    %52 = vector.extract_strided_slice %51 {offsets = [0, 0, 0], sizes = [16, 16, 128], strides = [1, 1, 1]} : vector<16x18x128xbf16> to vector<16x16x128xbf16>
    %53 = vector.shape_cast %52 : vector<16x16x128xbf16> to vector<1x16x16x128xbf16>
    %c0_29 = arith.constant 0 : index
    %c0_30 = arith.constant 0 : index
    %c0_31 = arith.constant 0 : index
    %c0_32 = arith.constant 0 : index
    %54 = vector.load %arg9[%c0_29, %c0_30, %c0_31, %c0_32] : memref<1x16x16x128xbf16, #tpu.memory_space<vmem>>, vector<1x16x16x128xbf16>
    tpu.vector_store %arg9[%c0_29, %c0_30, %c0_31, %c0_32], %53 {strides = array<i32>} : memref<1x16x16x128xbf16, #tpu.memory_space<vmem>>, vector<1x16x16x128xbf16>,
    return
  }
  func.func @transform_0(%arg0: i32) -> (i32, i32, i32) {
    %c0_i32 = arith.constant 0 : i32
    %c0_i32_0 = arith.constant 0 : i32
    %c0_i32_1 = arith.constant 0 : i32
    return %arg0, %c0_i32, %c0_i32_0 : i32, i32, i32
  }
  func.func @transform_1(%arg0: i32) -> (i32, i32) {
    %c0_i32 = arith.constant 0 : i32
    %c0_i32_0 = arith.constant 0 : i32
    %c0_i32_1 = arith.constant 0 : i32
    return %c0_i32, %c0_i32_0 : i32, i32
  }
  func.func @transform_2(%arg0: i32) -> (i32, i32, i32) {
    %c0_i32 = arith.constant 0 : i32
    %c0_i32_0 = arith.constant 0 : i32
    %c0_i32_1 = arith.constant 0 : i32
    %c0_i32_2 = arith.constant 0 : i32
    return %c0_i32, %c0_i32_0, %c0_i32_1 : i32, i32, i32
  }
  func.func @transform_3(%arg0: i32) -> (i32, i32) {
    %c0_i32 = arith.constant 0 : i32
    %c0_i32_0 = arith.constant 0 : i32
    %c0_i32_1 = arith.constant 0 : i32
    return %c0_i32, %c0_i32_0 : i32, i32
  }
  func.func @transform_4(%arg0: i32) -> (i32, i32) {
    %c0_i32 = arith.constant 0 : i32
    %c0_i32_0 = arith.constant 0 : i32
    %c0_i32_1 = arith.constant 0 : i32
    return %c0_i32, %c0_i32_0 : i32, i32
  }
  func.func @transform_5(%arg0: i32) -> (i32, i32) {
    %c0_i32 = arith.constant 0 : i32
    %c0_i32_0 = arith.constant 0 : i32
    %c0_i32_1 = arith.constant 0 : i32
    return %c0_i32, %c0_i32_0 : i32, i32
  }
  func.func @transform_6(%arg0: i32) -> (i32, i32) {
    %c0_i32 = arith.constant 0 : i32
    %c0_i32_0 = arith.constant 0 : i32
    %c0_i32_1 = arith.constant 0 : i32
    return %c0_i32, %c0_i32_0 : i32, i32
  }
  func.func @transform_7(%arg0: i32) -> (i32, i32) {
    %c0_i32 = arith.constant 0 : i32
    %c0_i32_0 = arith.constant 0 : i32
    %c0_i32_1 = arith.constant 0 : i32
    return %c0_i32, %c0_i32_0 : i32, i32
  }
  func.func @transform_8(%arg0: i32) -> (i32, i32, i32, i32) {
    %c0_i32 = arith.constant 0 : i32
    %c0_i32_0 = arith.constant 0 : i32
    %c0_i32_1 = arith.constant 0 : i32
    %c0_i32_2 = arith.constant 0 : i32
    return %arg0, %c0_i32, %c0_i32_0, %c0_i32_1 : i32, i32, i32, i32
  }
}

</mosaic_0001>

<llo_original>
// kernel: bottleneck_forward.1
$region0: #{bottleneck_forward.1}
  #allocation0 [shape = 'u32[]', space=smem, size = 0x4, offset = 0x4, fixed_abs, tag = 'smem constant byte address 0x4 - core index']
  #allocation1 [shape = 'u32[144,128]{1,0:T(1,128)}', space=vmem, size = 0x12000, scoped, tag = 'internal scratch']
  %s0 = inlined_call_operand.hbm [shape: bf16[2,342,128], index: 0, kind: input, shape index: {}]
  %s1 = inlined_call_operand.hbm [shape: bf16[128,128], index: 1, kind: input, shape index: {}]
  %s2 = inlined_call_operand.hbm [shape: bf16[3,384,128], index: 2, kind: input, shape index: {}]
  %s3 = inlined_call_operand.hbm [shape: f32[1,128], index: 3, kind: input, shape index: {}]
  %s4 = inlined_call_operand.hbm [shape: bf16[128,128], index: 4, kind: input, shape index: {}]
  %s5 = inlined_call_operand.hbm [shape: f32[1,128], index: 5, kind: input, shape index: {}]
  %s6 = inlined_call_operand.hbm [shape: bf16[128,128], index: 6, kind: input, shape index: {}]
  %s7 = inlined_call_operand.hbm [shape: f32[1,128], index: 7, kind: input, shape index: {}]
  %s8 = inlined_call_operand.hbm [shape: bf16[2,16,16,128], index: 8, kind: output, shape index: {}]
  %s9 = sld [smem:[#allocation0]]
  $region97: #{bottleneck_forward.1} parent=0
    _
  %s11 = ssub.s32 1, %s9
  %s12 = scalar_select 0, %s11, %s9
  $region1: #{bottleneck_forward.1} parent=0
    #allocation2 [shape = 'u8[176128]{0}', space=vmem, size = 0x2b000, scoped, tag = 'input window, operand 0']
    #allocation3 [shape = 's32[2]{0}', space=sflag, size = 0x8, scoped, tag = 'scoped memory for bottleneck_forward.1']
    #allocation4 [shape = 's32[2]{0}', space=sflag, size = 0x8, scoped, tag = 'scoped memory for bottleneck_forward.1']
    #allocation5 [shape = 'u8[32768]{0}', space=vmem, size = 0x8000, scoped, tag = 'input window, operand 1, single buffered']
    #allocation6 [shape = 's32[1]{0}', space=sflag, size = 0x4, scoped, tag = 'scoped memory for bottleneck_forward.1']
    #allocation7 [shape = 'u8[294912]{0}', space=vmem, size = 0x48000, scoped, tag = 'input window, operand 2, single buffered']
    #allocation8 [shape = 'u8[512]{0}', space=vmem, size = 0x400, scoped, tag = 'input window, operand 3, single buffered']
    #allocation9 [shape = 's32[1]{0}', space=sflag, size = 0x4, scoped, tag = 'scoped memory for bottleneck_forward.1']
    #allocation10 [shape = 'u8[32768]{0}', space=vmem, size = 0x8000, scoped, tag = 'input window, operand 4, single buffered']
    #allocation11 [shape = 'u8[512]{0}', space=vmem, size = 0x400, scoped, tag = 'input window, operand 5, single buffered']
    #allocation12 [shape = 's32[1]{0}', space=sflag, size = 0x4, scoped, tag = 'scoped memory for bottleneck_forward.1']
    #allocation13 [shape = 'u8[32768]{0}', space=vmem, size = 0x8000, scoped, tag = 'input window, operand 6, single buffered']
    #allocation14 [shape = 'u8[512]{0}', space=vmem, size = 0x400, scoped, tag = 'input window, operand 7, single buffered']
    #allocation15 [shape = 's32[1]{0}', space=sflag, size = 0x4, scoped, tag = 'scoped memory for bottleneck_forward.1']
    #allocation16 [shape = 'u8[131072]{0}', space=vmem, size = 0x20000, scoped, tag = 'output window, operand 0']
    %13 = vsyncpa [#allocation3], 0
    %s14 = scalar_lea.sflag [#allocation3], 1
    %15 = vsyncpa %s14, 0
    %16 = vsyncpa [#allocation6], 0
    %17 = vsyncpa [#allocation9], 0
    %18 = vsyncpa [#allocation12], 0
    %19 = vsyncpa [#allocation15], 0
    %20 = vsyncpa [#allocation4], 0
    %s21 = scalar_lea.sflag [#allocation4], 1
    %22 = vsyncpa %s21, 0
    loop: start=0, step=1, limit=4
    $region2: #{bottleneck_forward.1} parent=1 // loop_pre_header
      _
    $region3: #{bottleneck_forward.1} parent=1 // loop_header
      %s24 = sphi 0, %s28
      %p25 = scmp.ge.s32.totalorder %s24, 4
      %s34 = sphi 0, %s36
      %s37 = sphi 0, %s34
      %s38 = sphi 0, %s37
      %s54 = sphi 0, %s38
      %s58 = sphi 0, %s58
      %s60 = sphi 0, %s58
      %s61 = sphi 0, %s60
      %s75 = sphi 0, %s61
      %s79 = sphi 0, %s79
      %s81 = sphi 0, %s79
      %s82 = sphi 0, %s81
      %s96 = sphi 0, %s82
      %s100 = sphi 0, %s100
      %s102 = sphi 0, %s100
      %s103 = sphi 0, %s102
      %s117 = sphi 0, %s103
      %s121 = sphi 0, %s121
      %s123 = sphi 0, %s121
      %s124 = sphi 0, %s123
      %s138 = sphi 0, %s124
      %s142 = sphi 0, %s142
      %s144 = sphi 0, %s142
      %s145 = sphi 0, %s144
      %s159 = sphi 0, %s145
      %s163 = sphi 0, %s163
      %s165 = sphi 0, %s163
      %s166 = sphi 0, %s165
      %s180 = sphi 0, %s166
      %s184 = sphi 0, %s184
      %s186 = sphi 0, %s184
      %s187 = sphi 0, %s186
      %s201 = sphi 0, %s187
      %s207 = sphi 0, %s209
      %s210 = sphi 0, %s207
      %s211 = sphi 0, %s210
      %s227 = sphi 0, %s211
    $region4: #{bottleneck_forward.1} parent=1 // loop_header_branch
      %27 = sbr.rel (%p25) target = $region8
    $region5: #{bottleneck_forward.1} parent=1 // loop_body
      %s29 = ssub.s32 %s24, 1
      %s30 = ssub.s32 %s24, 2
      %s31 = sadd.s32 %s24, 1
      %s32 = ssub.s32 %s24, %s31
      %p33 = scmp.eq.s32.totalorder %s32, 0
      %s35 = sadd.s32 %s34, 1
      %s36 = scalar_select %p33, %s34, %s35
      %p39 = pneg %p33
      %p40 = scmp.eq.s32.totalorder %s24, 1
      %p41 = por %p39, %p40
      %p42 = scmp.ne.s32.totalorder %s34, %s37
      %p43 = scmp.eq.s32.totalorder %s24, 0
      %p44 = por %p42, %p43
      %p45 = scmp.ne.s32.totalorder %s34, %s37
      %p46 = scmp.eq.s32.totalorder %s29, 1
      %p47 = por %p45, %p46
      %p48 = scmp.ne.s32.totalorder %s37, %s38
      %p49 = scmp.eq.s32.totalorder %s29, 0
      %p50 = por %p48, %p49
      %p51 = scmp.ne.s32.totalorder %s37, %s38
      %p52 = scmp.eq.s32.totalorder %s30, 1
      %p53 = por %p51, %p52
      %p55 = scmp.ne.s32.totalorder %s38, %s54
      %p56 = scmp.eq.s32.totalorder %s30, 0
      %p57 = por %p55, %p56
      %s59 = sadd.s32 %s58, 1
      %p62 = scmp.eq.s32.totalorder %s24, 1
      %p63 = scmp.ne.s32.totalorder %s58, %s60
      %p64 = scmp.eq.s32.totalorder %s24, 0
      %p65 = por %p63, %p64
      %p66 = scmp.ne.s32.totalorder %s58, %s60
      %p67 = scmp.eq.s32.totalorder %s29, 1
      %p68 = por %p66, %p67
      %p69 = scmp.ne.s32.totalorder %s60, %s61
      %p70 = scmp.eq.s32.totalorder %s29, 0
      %p71 = por %p69, %p70
      %p72 = scmp.ne.s32.totalorder %s60, %s61
      %p73 = scmp.eq.s32.totalorder %s30, 1
      %p74 = por %p72, %p73
      %p76 = scmp.ne.s32.totalorder %s61, %s75
      %p77 = scmp.eq.s32.totalorder %s30, 0
      %p78 = por %p76, %p77
      %s80 = sadd.s32 %s79, 1
      %p83 = scmp.eq.s32.totalorder %s24, 1
      %p84 = scmp.ne.s32.totalorder %s79, %s81
      %p85 = scmp.eq.s32.totalorder %s24, 0
      %p86 = por %p84, %p85
      %p87 = scmp.ne.s32.totalorder %s79, %s81
      %p88 = scmp.eq.s32.totalorder %s29, 1
      %p89 = por %p87, %p88
      %p90 = scmp.ne.s32.totalorder %s81, %s82
      %p91 = scmp.eq.s32.totalorder %s29, 0
      %p92 = por %p90, %p91
      %p93 = scmp.ne.s32.totalorder %s81, %s82
      %p94 = scmp.eq.s32.totalorder %s30, 1
      %p95 = por %p93, %p94
      %p97 = scmp.ne.s32.totalorder %s82, %s96
      %p98 = scmp.eq.s32.totalorder %s30, 0
      %p99 = por %p97, %p98
      %s101 = sadd.s32 %s100, 1
      %p104 = scmp.eq.s32.totalorder %s24, 1
      %p105 = scmp.ne.s32.totalorder %s100, %s102
      %p106 = scmp.eq.s32.totalorder %s24, 0
      %p107 = por %p105, %p106
      %p108 = scmp.ne.s32.totalorder %s100, %s102
      %p109 = scmp.eq.s32.totalorder %s29, 1
      %p110 = por %p108, %p109
      %p111 = scmp.ne.s32.totalorder %s102, %s103
      %p112 = scmp.eq.s32.totalorder %s29, 0
      %p113 = por %p111, %p112
      %p114 = scmp.ne.s32.totalorder %s102, %s103
      %p115 = scmp.eq.s32.totalorder %s30, 1
      %p116 = por %p114, %p115
      %p118 = scmp.ne.s32.totalorder %s103, %s117
      %p119 = scmp.eq.s32.totalorder %s30, 0
      %p120 = por %p118, %p119
      %s122 = sadd.s32 %s121, 1
      %p125 = scmp.eq.s32.totalorder %s24, 1
      %p126 = scmp.ne.s32.totalorder %s121, %s123
      %p127 = scmp.eq.s32.totalorder %s24, 0
      %p128 = por %p126, %p127
      %p129 = scmp.ne.s32.totalorder %s121, %s123
      %p130 = scmp.eq.s32.totalorder %s29, 1
      %p131 = por %p129, %p130
      %p132 = scmp.ne.s32.totalorder %s123, %s124
      %p133 = scmp.eq.s32.totalorder %s29, 0
      %p134 = por %p132, %p133
      %p135 = scmp.ne.s32.totalorder %s123, %s124
      %p136 = scmp.eq.s32.totalorder %s30, 1
      %p137 = por %p135, %p136
      %p139 = scmp.ne.s32.totalorder %s124, %s138
      %p140 = scmp.eq.s32.totalorder %s30, 0
      %p141 = por %p139, %p140
      %s143 = sadd.s32 %s142, 1
      %p146 = scmp.eq.s32.totalorder %s24, 1
      %p147 = scmp.ne.s32.totalorder %s142, %s144
      %p148 = scmp.eq.s32.totalorder %s24, 0
      %p149 = por %p147, %p148
      %p150 = scmp.ne.s32.totalorder %s142, %s144
      %p151 = scmp.eq.s32.totalorder %s29, 1
      %p152 = por %p150, %p151
      %p153 = scmp.ne.s32.totalorder %s144, %s145
      %p154 = scmp.eq.s32.totalorder %s29, 0
      %p155 = por %p153, %p154
      %p156 = scmp.ne.s32.totalorder %s144, %s145
      %p157 = scmp.eq.s32.totalorder %s30, 1
      %p158 = por %p156, %p157
      %p160 = scmp.ne.s32.totalorder %s145, %s159
      %p161 = scmp.eq.s32.totalorder %s30, 0
      %p162 = por %p160, %p161
      %s164 = sadd.s32 %s163, 1
      %p167 = scmp.eq.s32.totalorder %s24, 1
      %p168 = scmp.ne.s32.totalorder %s163, %s165
      %p169 = scmp.eq.s32.totalorder %s24, 0
      %p170 = por %p168, %p169
      %p171 = scmp.ne.s32.totalorder %s163, %s165
      %p172 = scmp.eq.s32.totalorder %s29, 1
      %p173 = por %p171, %p172
      %p174 = scmp.ne.s32.totalorder %s165, %s166
      %p175 = scmp.eq.s32.totalorder %s29, 0
      %p176 = por %p174, %p175
      %p177 = scmp.ne.s32.totalorder %s165, %s166
      %p178 = scmp.eq.s32.totalorder %s30, 1
      %p179 = por %p177, %p178
      %p181 = scmp.ne.s32.totalorder %s166, %s180
      %p182 = scmp.eq.s32.totalorder %s30, 0
      %p183 = por %p181, %p182
      %s185 = sadd.s32 %s184, 1
      %p188 = scmp.eq.s32.totalorder %s24, 1
      %p189 = scmp.ne.s32.totalorder %s184, %s186
      %p190 = scmp.eq.s32.totalorder %s24, 0
      %p191 = por %p189, %p190
      %p192 = scmp.ne.s32.totalorder %s184, %s186
      %p193 = scmp.eq.s32.totalorder %s29, 1
      %p194 = por %p192, %p193
      %p195 = scmp.ne.s32.totalorder %s186, %s187
      %p196 = scmp.eq.s32.totalorder %s29, 0
      %p197 = por %p195, %p196
      %p198 = scmp.ne.s32.totalorder %s186, %s187
      %p199 = scmp.eq.s32.totalorder %s30, 1
      %p200 = por %p198, %p199
      %p202 = scmp.ne.s32.totalorder %s187, %s201
      %p203 = scmp.eq.s32.totalorder %s30, 0
      %p204 = por %p202, %p203
      %s205 = ssub.s32 %s24, %s31
      %p206 = scmp.eq.s32.totalorder %s205, 0
      %s208 = sadd.s32 %s207, 1
      %s209 = scalar_select %p206, %s207, %s208
      %p212 = pneg %p206
      %p213 = scmp.eq.s32.totalorder %s24, 1
      %p214 = por %p212, %p213
      %p215 = scmp.ne.s32.totalorder %s207, %s210
      %p216 = scmp.eq.s32.totalorder %s24, 0
      %p217 = por %p215, %p216
      %p218 = scmp.ne.s32.totalorder %s207, %s210
      %p219 = scmp.eq.s32.totalorder %s29, 1
      %p220 = por %p218, %p219
      %p221 = scmp.ne.s32.totalorder %s210, %s211
      %p222 = scmp.eq.s32.totalorder %s29, 0
      %p223 = por %p221, %p222
      %p224 = scmp.ne.s32.totalorder %s210, %s211
      %p225 = scmp.eq.s32.totalorder %s30, 1
      %p226 = por %p224, %p225
      %p228 = scmp.ne.s32.totalorder %s211, %s227
      %p229 = scmp.eq.s32.totalorder %s30, 0
      %p230 = por %p228, %p229
      %p231 = scmp.le.s32.totalorder 1, %s24
      %p232 = scmp.lt.s32.totalorder %s24, 3
      %p233 = pnand %p231, %p232
      %p234 = pneg %p233
      // Predicated region
      $region9: #{bottleneck_forward.1} parent=5 // pred_check
        _
      $region10: #{bottleneck_forward.1} parent=5 // pred_check_branch
        %236 = sbr.rel (%p233) target = $region12
      $region11: #{bottleneck_forward.1} parent=5 // pred_region
        %s237 = ssub.s32 %s24, 1
        // Predicated region
        $region13: #{bottleneck_forward.1} parent=11 // pred_check
          %p238 = pneg %p71
        $region14: #{bottleneck_forward.1} parent=11 // pred_check_branch
          %240 = sbr.rel (%p238) target = $region16
        $region15: #{bottleneck_forward.1} parent=11 // pred_region
          %s242 = ssub.s32 1024, 1024
          %243 = vsyncadd [#allocation6], %s242
          %s244 = sshll.u32 [#allocation5], 4
          %s245 = int_to_ptr.vmem [resolvable:$true] %s244
          %250 = dma.hbm_to_vmem [thread:$0]  %s1, 1024, %s245, [#allocation6], 64, 64, 4
        $region16: #{bottleneck_forward.1} parent=11 // pred_fallthru
          _
        // Predicated region
        $region17: #{bottleneck_forward.1} parent=11 // pred_check
          %p251 = pneg %p92
        $region18: #{bottleneck_forward.1} parent=11 // pred_check_branch
          %253 = sbr.rel (%p251) target = $region20
        $region19: #{bottleneck_forward.1} parent=11 // pred_region
          %s255 = ssub.s32 9216, 9216
          %256 = vsyncadd [#allocation6], %s255
          %s257 = sshll.u32 [#allocation7], 4
          %s258 = int_to_ptr.vmem [resolvable:$true] %s257
          %263 = dma.hbm_to_vmem [thread:$0]  %s2, 9216, %s258, [#allocation6], 64, 64, 4
        $region20: #{bottleneck_forward.1} parent=11 // pred_fallthru
          _
        // Predicated region
        $region21: #{bottleneck_forward.1} parent=11 // pred_check
          %p264 = pneg %p113
        $region22: #{bottleneck_forward.1} parent=11 // pred_check_branch
          %266 = sbr.rel (%p264) target = $region24
        $region23: #{bottleneck_forward.1} parent=11 // pred_region
          %s268 = ssub.s32 16, 16
          %269 = vsyncadd [#allocation9], %s268
          %s271 = sshll.u32 [#allocation8], 4
          %s272 = int_to_ptr.vmem [resolvable:$true] %s271
          %274 = dma.hbm_to_vmem [thread:$0]  %s3, 16, %s272, [#allocation9]
        $region24: #{bottleneck_forward.1} parent=11 // pred_fallthru
          _
        // Predicated region
        $region25: #{bottleneck_forward.1} parent=11 // pred_check
          %p275 = pneg %p134
        $region26: #{bottleneck_forward.1} parent=11 // pred_check_branch
          %277 = sbr.rel (%p275) target = $region28
        $region27: #{bottleneck_forward.1} parent=11 // pred_region
          %s279 = ssub.s32 1024, 1024
          %280 = vsyncadd [#allocation9], %s279
          %s281 = sshll.u32 [#allocation10], 4
          %s282 = int_to_ptr.vmem [resolvable:$true] %s281
          %287 = dma.hbm_to_vmem [thread:$0]  %s4, 1024, %s282, [#allocation9], 64, 64, 4
        $region28: #{bottleneck_forward.1} parent=11 // pred_fallthru
          _
        // Predicated region
        $region29: #{bottleneck_forward.1} parent=11 // pred_check
          %p288 = pneg %p155
        $region30: #{bottleneck_forward.1} parent=11 // pred_check_branch
          %290 = sbr.rel (%p288) target = $region32
        $region31: #{bottleneck_forward.1} parent=11 // pred_region
          %s292 = ssub.s32 16, 16
          %293 = vsyncadd [#allocation12], %s292
          %s295 = sshll.u32 [#allocation11], 4
          %s296 = int_to_ptr.vmem [resolvable:$true] %s295
          %298 = dma.hbm_to_vmem [thread:$0]  %s5, 16, %s296, [#allocation12]
        $region32: #{bottleneck_forward.1} parent=11 // pred_fallthru
          _
        // Predicated region
        $region33: #{bottleneck_forward.1} parent=11 // pred_check
          %p299 = pneg %p176
        $region34: #{bottleneck_forward.1} parent=11 // pred_check_branch
          %301 = sbr.rel (%p299) target = $region36
        $region35: #{bottleneck_forward.1} parent=11 // pred_region
          %s303 = ssub.s32 1024, 1024
          %304 = vsyncadd [#allocation12], %s303
          %s305 = sshll.u32 [#allocation13], 4
          %s306 = int_to_ptr.vmem [resolvable:$true] %s305
          %311 = dma.hbm_to_vmem [thread:$0]  %s6, 1024, %s306, [#allocation12], 64, 64, 4
        $region36: #{bottleneck_forward.1} parent=11 // pred_fallthru
          _
        // Predicated region
        $region37: #{bottleneck_forward.1} parent=11 // pred_check
          %p312 = pneg %p197
        $region38: #{bottleneck_forward.1} parent=11 // pred_check_branch
          %314 = sbr.rel (%p312) target = $region40
        $region39: #{bottleneck_forward.1} parent=11 // pred_region
          %s316 = ssub.s32 16, 16
          %317 = vsyncadd [#allocation15], %s316
          %s319 = sshll.u32 [#allocation14], 4
          %s320 = int_to_ptr.vmem [resolvable:$true] %s319
          %322 = dma.hbm_to_vmem [thread:$0]  %s7, 16, %s320, [#allocation15]
        $region40: #{bottleneck_forward.1} parent=11 // pred_fallthru
          _
      $region12: #{bottleneck_forward.1} parent=5 // pred_fallthru
        _
      %p323 = scmp.lt.s32.totalorder %s24, 2
      // Predicated region
      $region41: #{bottleneck_forward.1} parent=5 // pred_check
        %p324 = pneg %p323
      $region42: #{bottleneck_forward.1} parent=5 // pred_check_branch
        %326 = sbr.rel (%p324) target = $region44
      $region43: #{bottleneck_forward.1} parent=5 // pred_region
        // Predicated region
        $region45: #{bottleneck_forward.1} parent=43 // pred_check
          %p327 = pneg %p44
        $region46: #{bottleneck_forward.1} parent=43 // pred_check_branch
          %329 = sbr.rel (%p327) target = $region48
        $region47: #{bottleneck_forward.1} parent=43 // pred_region
          %s330 = sand.u32 %s34, 1
          %s331 = scalar_lea.sflag [#allocation3], %s330
          %s332 = sand.u32 %s34, 1
          %s333 = smul.addr %s332, 172
          %s334 = scalar_lea.vmem [#allocation2], %s333
          %s336 = ssub.s32 2752, 2752
          %337 = vsyncadd %s331, %s336
          %s338 = smul.addr %s24, 43
          %s339 = smul.addr %s338, 64
          %s340 = scalar_lea.hbm %s0, %s339
          %s341 = sshll.u32 %s334, 4
          %s342 = int_to_ptr.vmem [resolvable:$true] %s341
          %347 = dma.hbm_to_vmem [thread:$0]  %s340, 2752, %s342, %s331, 64, 64, 4
        $region48: #{bottleneck_forward.1} parent=43 // pred_fallthru
          _
      $region44: #{bottleneck_forward.1} parent=5 // pred_fallthru
        _
      %p348 = scmp.le.s32.totalorder 1, %s24
      %p349 = scmp.lt.s32.totalorder %s24, 3
      %p350 = pnand %p348, %p349
      %p351 = pneg %p350
      // Predicated region
      $region49: #{bottleneck_forward.1} parent=5 // pred_check
        _
      $region50: #{bottleneck_forward.1} parent=5 // pred_check_branch
        %353 = sbr.rel (%p350) target = $region52
      $region51: #{bottleneck_forward.1} parent=5 // pred_region
        %s354 = ssub.s32 %s24, 1
        %s355 = sand.u32 %s37, 1
        %s356 = scalar_lea.sflag [#allocation3], %s355
        %s357 = sand.u32 %s37, 1
        %s358 = smul.addr %s357, 172
        %s359 = scalar_lea.vmem [#allocation2], %s358
        // Predicated region
        $region53: #{bottleneck_forward.1} parent=51 // pred_check
          %p360 = pneg %p50
        $region54: #{bottleneck_forward.1} parent=51 // pred_check_branch
          %362 = sbr.rel (%p360) target = $region56
        $region55: #{bottleneck_forward.1} parent=51 // pred_region
          %363 = dma.done %s356, 2752
        $region56: #{bottleneck_forward.1} parent=51 // pred_fallthru
          _
        // Predicated region
        $region57: #{bottleneck_forward.1} parent=51 // pred_check
          %p364 = pneg %p71
        $region58: #{bottleneck_forward.1} parent=51 // pred_check_branch
          %366 = sbr.rel (%p364) target = $region60
        $region59: #{bottleneck_forward.1} parent=51 // pred_region
          %367 = dma.done [#allocation6], 1024
        $region60: #{bottleneck_forward.1} parent=51 // pred_fallthru
          _
        // Predicated region
        $region61: #{bottleneck_forward.1} parent=51 // pred_check
          %p368 = pneg %p92
        $region62: #{bottleneck_forward.1} parent=51 // pred_check_branch
          %370 = sbr.rel (%p368) target = $region64
        $region63: #{bottleneck_forward.1} parent=51 // pred_region
          %371 = dma.done [#allocation6], 9216
        $region64: #{bottleneck_forward.1} parent=51 // pred_fallthru
          _
        // Predicated region
        $region65: #{bottleneck_forward.1} parent=51 // pred_check
          %p372 = pneg %p113
        $region66: #{bottleneck_forward.1} parent=51 // pred_check_branch
          %374 = sbr.rel (%p372) target = $region68
        $region67: #{bottleneck_forward.1} parent=51 // pred_region
          %375 = dma.done [#allocation9], 16
        $region68: #{bottleneck_forward.1} parent=51 // pred_fallthru
          _
        // Predicated region
        $region69: #{bottleneck_forward.1} parent=51 // pred_check
          %p376 = pneg %p134
        $region70: #{bottleneck_forward.1} parent=51 // pred_check_branch
          %378 = sbr.rel (%p376) target = $region72
        $region71: #{bottleneck_forward.1} parent=51 // pred_region
          %379 = dma.done [#allocation9], 1024
        $region72: #{bottleneck_forward.1} parent=51 // pred_fallthru
          _
        // Predicated region
        $region73: #{bottleneck_forward.1} parent=51 // pred_check
          %p380 = pneg %p155
        $region74: #{bottleneck_forward.1} parent=51 // pred_check_branch
          %382 = sbr.rel (%p380) target = $region76
        $region75: #{bottleneck_forward.1} parent=51 // pred_region
          %383 = dma.done [#allocation12], 16
        $region76: #{bottleneck_forward.1} parent=51 // pred_fallthru
          _
        // Predicated region
        $region77: #{bottleneck_forward.1} parent=51 // pred_check
          %p384 = pneg %p176
        $region78: #{bottleneck_forward.1} parent=51 // pred_check_branch
          %386 = sbr.rel (%p384) target = $region80
        $region79: #{bottleneck_forward.1} parent=51 // pred_region
          %387 = dma.done [#allocation12], 1024
        $region80: #{bottleneck_forward.1} parent=51 // pred_fallthru
          _
        // Predicated region
        $region81: #{bottleneck_forward.1} parent=51 // pred_check
          %p388 = pneg %p197
        $region82: #{bottleneck_forward.1} parent=51 // pred_check_branch
          %390 = sbr.rel (%p388) target = $region84
        $region83: #{bottleneck_forward.1} parent=51 // pred_region
          %391 = dma.done [#allocation15], 16
        $region84: #{bottleneck_forward.1} parent=51 // pred_fallthru
          _
        %s392 = sand.u32 %s37, 1
        %s393 = scalar_lea.sflag [#allocation3], %s392
        %s394 = sand.u32 %s37, 1
        %s395 = smul.addr %s394, 172
        %s396 = scalar_lea.vmem [#allocation2], %s395
        %p397 = pneg %p50
        %p398 = pneg %p47
        %p399 = pneg %p71
        %p400 = pneg %p68
        %p401 = pneg %p92
        %p402 = pneg %p89
        %p403 = pneg %p113
        %p404 = pneg %p110
        %p405 = pneg %p134
        %p406 = pneg %p131
        %p407 = pneg %p155
        %p408 = pneg %p152
        %p409 = pneg %p176
        %p410 = pneg %p173
        %p411 = pneg %p197
        %p412 = pneg %p194
        %p413 = pneg %p223
        %p414 = pneg %p220
        %s415 = sand.u32 %s210, 1
        %s416 = scalar_lea.sflag [#allocation4], %s415
        %s417 = sand.u32 %s210, 1
        %s418 = smul.addr %s417, 128
        %s419 = scalar_lea.vmem [#allocation16], %s418
        %v421 = vld [vmem:[%s359] sm:$0xf]
        %v422 = vld [vmem:[%s359 + $0x4] sm:$0xf]
        %v423 = vld [vmem:[%s359 + $0x8] sm:$0xf]
        %v424 = vld [vmem:[%s359 + $0xc] sm:$0xf]
        %v425 = vld [vmem:[%s359 + $0x10] sm:$0xf]
        %v426 = vld [vmem:[%s359 + $0x14] sm:$0xf]
        %v427 = vld [vmem:[%s359 + $0x18] sm:$0xf]
        %v428 = vld [vmem:[%s359 + $0x1c] sm:$0xf]
        %v429 = vld [vmem:[%s359 + $0x20] sm:$0xf]
        %v430 = vld [vmem:[%s359 + $0x24] sm:$0xf]
        %v431 = vld [vmem:[%s359 + $0x28] sm:$0xf]
        %v432 = vld [vmem:[%s359 + $0x2c] sm:$0xf]
        %v433 = vld [vmem:[%s359 + $0x30] sm:$0xf]
        %v434 = vld [vmem:[%s359 + $0x34] sm:$0xf]
        %v435 = vld [vmem:[%s359 + $0x38] sm:$0xf]
        %v436 = vld [vmem:[%s359 + $0x3c] sm:$0xf]
        %v437 = vld [vmem:[%s359 + $0x40] sm:$0xf]
        %v438 = vld [vmem:[%s359 + $0x44] sm:$0xf]
        %v439 = vld [vmem:[%s359 + $0x48] sm:$0xf]
        %v440 = vld [vmem:[%s359 + $0x4c] sm:$0xf]
        %v441 = vld [vmem:[%s359 + $0x50] sm:$0xf]
        %v442 = vld [vmem:[%s359 + $0x54] sm:$0xf]
        %v443 = vld [vmem:[%s359 + $0x58] sm:$0xf]
        %v444 = vld [vmem:[%s359 + $0x5c] sm:$0xf]
        %v445 = vld [vmem:[%s359 + $0x60] sm:$0xf]
        %v446 = vld [vmem:[%s359 + $0x64] sm:$0xf]
        %v447 = vld [vmem:[%s359 + $0x68] sm:$0xf]
        %v448 = vld [vmem:[%s359 + $0x6c] sm:$0xf]
        %v449 = vld [vmem:[%s359 + $0x70] sm:$0xf]
        %v450 = vld [vmem:[%s359 + $0x74] sm:$0xf]
        %v451 = vld [vmem:[%s359 + $0x78] sm:$0xf]
        %v452 = vld [vmem:[%s359 + $0x7c] sm:$0xf]
        %v453 = vld [vmem:[%s359 + $0x80] sm:$0xf]
        %v454 = vld [vmem:[%s359 + $0x84] sm:$0xf]
        %v455 = vld [vmem:[%s359 + $0x88] sm:$0xf]
        %v456 = vld [vmem:[%s359 + $0x8c] sm:$0xf]
        %v457 = vld [vmem:[%s359 + $0x90] sm:$0xf]
        %v458 = vld [vmem:[%s359 + $0x94] sm:$0xf]
        %v459 = vld [vmem:[%s359 + $0x98] sm:$0xf]
        %v460 = vld [vmem:[%s359 + $0x9c] sm:$0xf]
        %v461 = vld [vmem:[%s359 + $0xa0] sm:$0xf]
        %v462 = vld [vmem:[%s359 + $0xa4] sm:$0xf]
        %v463 = vld [vmem:[%s359 + $0xa8] sm:$0x7]
        %v464 = vld [vmem:[#allocation5] sm:$0xf]
        %v465 = vld [vmem:[#allocation5 + $0x4] sm:$0xf]
        %v466 = vld [vmem:[#allocation5 + $0x8] sm:$0xf]
        %v467 = vld [vmem:[#allocation5 + $0xc] sm:$0xf]
        %v468 = vld [vmem:[#allocation5 + $0x10] sm:$0xf]
        %v469 = vld [vmem:[#allocation5 + $0x14] sm:$0xf]
        %v470 = vld [vmem:[#allocation5 + $0x18] sm:$0xf]
        %v471 = vld [vmem:[#allocation5 + $0x1c] sm:$0xf]
        %v472 = vld [vmem:[#allocation5 + $0x20] sm:$0xf]
        %v473 = vld [vmem:[#allocation5 + $0x24] sm:$0xf]
        %v474 = vld [vmem:[#allocation5 + $0x28] sm:$0xf]
        %v475 = vld [vmem:[#allocation5 + $0x2c] sm:$0xf]
        %v476 = vld [vmem:[#allocation5 + $0x30] sm:$0xf]
        %v477 = vld [vmem:[#allocation5 + $0x34] sm:$0xf]
        %v478 = vld [vmem:[#allocation5 + $0x38] sm:$0xf]
        %v479 = vld [vmem:[#allocation5 + $0x3c] sm:$0xf]
        %v523 = vunpack.c.l.b16 %v421
        %v524 = vunpack.c.l.b16 %v422
        %v525 = vunpack.c.l.b16 %v423
        %v526 = vunpack.c.l.b16 %v424
        %v527 = vunpack.c.l.b16 %v425
        %v528 = vunpack.c.l.b16 %v426
        %v529 = vunpack.c.l.b16 %v427
        %v530 = vunpack.c.l.b16 %v428
        %v531 = vunpack.c.l.b16 %v429
        %v532 = vunpack.c.l.b16 %v430
        %v533 = vunpack.c.l.b16 %v431
        %v534 = vunpack.c.l.b16 %v432
        %v535 = vunpack.c.l.b16 %v433
        %v536 = vunpack.c.l.b16 %v434
        %v537 = vunpack.c.l.b16 %v435
        %v538 = vunpack.c.l.b16 %v436
        %v539 = vunpack.c.l.b16 %v437
        %v540 = vunpack.c.l.b16 %v438
        %v541 = vunpack.c.l.b16 %v439
        %v542 = vunpack.c.l.b16 %v440
        %v543 = vunpack.c.l.b16 %v441
        %v544 = vunpack.c.l.b16 %v442
        %v545 = vunpack.c.l.b16 %v443
        %v546 = vunpack.c.l.b16 %v444
        %v547 = vunpack.c.l.b16 %v445
        %v548 = vunpack.c.l.b16 %v446
        %v549 = vunpack.c.l.b16 %v447
        %v550 = vunpack.c.l.b16 %v448
        %v551 = vunpack.c.l.b16 %v449
        %v552 = vunpack.c.l.b16 %v450
        %v553 = vunpack.c.l.b16 %v451
        %v554 = vunpack.c.l.b16 %v452
        %v555 = vunpack.c.l.b16 %v453
        %v556 = vunpack.c.l.b16 %v454
        %v557 = vunpack.c.l.b16 %v455
        %v558 = vunpack.c.l.b16 %v456
        %v559 = vunpack.c.l.b16 %v457
        %v560 = vunpack.c.l.b16 %v458
        %v561 = vunpack.c.l.b16 %v459
        %v562 = vunpack.c.l.b16 %v460
        %v563 = vunpack.c.l.b16 %v461
        %v564 = vunpack.c.l.b16 %v462
        %v565 = vunpack.c.l.b16 %v463
        %v566 = vpack.c.b16 %v524, %v523
        %v567 = vpack.c.b16 %v526, %v525
        %v568 = vpack.c.b16 %v528, %v527
        %v569 = vpack.c.b16 %v530, %v529
        %v570 = vpack.c.b16 %v532, %v531
        %v571 = vpack.c.b16 %v534, %v533
        %v572 = vpack.c.b16 %v536, %v535
        %v573 = vpack.c.b16 %v538, %v537
        %v574 = vpack.c.b16 %v540, %v539
        %v575 = vpack.c.b16 %v542, %v541
        %v576 = vpack.c.b16 %v544, %v543
        %v577 = vpack.c.b16 %v546, %v545
        %v578 = vpack.c.b16 %v548, %v547
        %v579 = vpack.c.b16 %v550, %v549
        %v580 = vpack.c.b16 %v552, %v551
        %v581 = vpack.c.b16 %v554, %v553
        %v582 = vpack.c.b16 %v556, %v555
        %v583 = vpack.c.b16 %v558, %v557
        %v584 = vpack.c.b16 %v560, %v559
        %v585 = vpack.c.b16 %v562, %v561
        %v586 = vpack.c.b16 %v564, %v563
        %v587 = vpack.c.b16 %v565, %v565
        %v626 = vunpack.c.l.b16 %v464
        %v627 = vunpack.c.l.b16 %v465
        %v628 = vunpack.c.l.b16 %v466
        %v629 = vunpack.c.l.b16 %v467
        %v630 = vunpack.c.l.b16 %v468
        %v631 = vunpack.c.l.b16 %v469
        %v632 = vunpack.c.l.b16 %v470
        %v633 = vunpack.c.l.b16 %v471
        %v634 = vunpack.c.l.b16 %v472
        %v635 = vunpack.c.l.b16 %v473
        %v636 = vunpack.c.l.b16 %v474
        %v637 = vunpack.c.l.b16 %v475
        %v638 = vunpack.c.l.b16 %v476
        %v639 = vunpack.c.l.b16 %v477
        %v640 = vunpack.c.l.b16 %v478
        %v641 = vunpack.c.l.b16 %v479
        %v642 = vpack.c.b16 %v627, %v626
        %v643 = vpack.c.b16 %v629, %v628
        %v644 = vpack.c.b16 %v631, %v630
        %v645 = vpack.c.b16 %v633, %v632
        %v646 = vpack.c.b16 %v635, %v634
        %v647 = vpack.c.b16 %v637, %v636
        %v648 = vpack.c.b16 %v639, %v638
        %v649 = vpack.c.b16 %v641, %v640
        %658 = vmatprep.subr.bf16.mxu0 0
        %659 = vmatpush1.bf16.msra.mxu0 %v642
        %660 = vmatprep.subr.bf16.mxu0 0
        %661 = vmatpush1.bf16.msra.mxu0 %v643
        %662 = vmatprep.subr.bf16.mxu0 0
        %663 = vmatpush1.bf16.msra.mxu0 %v644
        %664 = vmatprep.subr.bf16.mxu0 0
        %665 = vmatpush1.bf16.msra.mxu0 %v645
        %666 = vmatprep.subr.bf16.mxu0 0
        %667 = vmatpush1.bf16.msra.mxu0 %v646
        %668 = vmatprep.subr.bf16.mxu0 0
        %669 = vmatpush1.bf16.msra.mxu0 %v647
        %670 = vmatprep.subr.bf16.mxu0 0
        %671 = vmatpush1.bf16.msra.mxu0 %v648
        %672 = vmatprep.subr.bf16.mxu0 0
        %673 = vmatpush1.bf16.msra.mxu0 %v649
        %674 = vmatprep.subr.bf16.mxu0 0
        %675 = vmatpush1.bf16.msra.mxu0 0
        %676 = vmatprep.subr.bf16.mxu0 0
        %677 = vmatpush1.bf16.msra.mxu0 0
        %678 = vmatprep.subr.bf16.mxu0 0
        %679 = vmatpush1.bf16.msra.mxu0 0
        %680 = vmatprep.subr.bf16.mxu0 0
        %681 = vmatpush1.bf16.msra.mxu0 0
        %682 = vmatprep.subr.bf16.mxu0 0
        %683 = vmatpush1.bf16.msra.mxu0 0
        %684 = vmatprep.subr.bf16.mxu0 0
        %685 = vmatpush1.bf16.msra.mxu0 0
        %686 = vmatprep.subr.bf16.mxu0 0
        %687 = vmatpush1.bf16.msra.mxu0 0
        %688 = vmatprep.subr.bf16.mxu0 0
        %689 = vmatpush1.bf16.msra.mxu0 0
        %690 = vmatprep.mubr.bf16.mxu0 0
        %691 = vmatmul.mubr.bf16.gmra.mrb[0].mxu0 %v566
        %v692 = vpop.f32.mrb[0].mxu0
        %v693 = vadd.f32 0.0, %v692
        %v694 = vpop.f32.mrb[0].mxu0
        %v695 = vpop.f32.mrb[0].mxu0
        %v696 = vadd.f32 0.0, %v695
        %v697 = vpop.f32.mrb[0].mxu0
        %698 = vmatprep.mubr.bf16.mxu0 0
        %699 = vmatmul.mubr.bf16.gmra.mrb[0].mxu0 %v567
        %v700 = vpop.f32.mrb[0].mxu0
        %v701 = vadd.f32 0.0, %v700
        %v702 = vpop.f32.mrb[0].mxu0
        %v703 = vpop.f32.mrb[0].mxu0
        %v704 = vadd.f32 0.0, %v703
        %v705 = vpop.f32.mrb[0].mxu0
        %706 = vmatprep.mubr.bf16.mxu0 0
        %707 = vmatmul.mubr.bf16.gmra.mrb[0].mxu0 %v568
        %v708 = vpop.f32.mrb[0].mxu0
        %v709 = vadd.f32 0.0, %v708
        %v710 = vpop.f32.mrb[0].mxu0
        %v711 = vpop.f32.mrb[0].mxu0
        %v712 = vadd.f32 0.0, %v711
        %v713 = vpop.f32.mrb[0].mxu0
        %714 = vmatprep.mubr.bf16.mxu0 0
        %715 = vmatmul.mubr.bf16.gmra.mrb[0].mxu0 %v569
        %v716 = vpop.f32.mrb[0].mxu0
        %v717 = vadd.f32 0.0, %v716
        %v718 = vpop.f32.mrb[0].mxu0
        %v719 = vpop.f32.mrb[0].mxu0
        %v720 = vadd.f32 0.0, %v719
        %v721 = vpop.f32.mrb[0].mxu0
        %722 = vmatprep.mubr.bf16.mxu0 0
        %723 = vmatmul.mubr.bf16.gmra.mrb[0].mxu0 %v570
        %v724 = vpop.f32.mrb[0].mxu0
        %v725 = vadd.f32 0.0, %v724
        %v726 = vpop.f32.mrb[0].mxu0
        %v727 = vpop.f32.mrb[0].mxu0
        %v728 = vadd.f32 0.0, %v727
        %v729 = vpop.f32.mrb[0].mxu0
        %730 = vmatprep.mubr.bf16.mxu0 0
        %731 = vmatmul.mubr.bf16.gmra.mrb[0].mxu0 %v571
        %v732 = vpop.f32.mrb[0].mxu0
        %v733 = vadd.f32 0.0, %v732
        %v734 = vpop.f32.mrb[0].mxu0
        %v735 = vpop.f32.mrb[0].mxu0
        %v736 = vadd.f32 0.0, %v735
        %v737 = vpop.f32.mrb[0].mxu0
        %738 = vmatprep.mubr.bf16.mxu0 0
        %739 = vmatmul.mubr.bf16.gmra.mrb[0].mxu0 %v572
        %v740 = vpop.f32.mrb[0].mxu0
        %v741 = vadd.f32 0.0, %v740
        %v742 = vpop.f32.mrb[0].mxu0
        %v743 = vpop.f32.mrb[0].mxu0
        %v744 = vadd.f32 0.0, %v743
        %v745 = vpop.f32.mrb[0].mxu0
        %746 = vmatprep.mubr.bf16.mxu0 0
        %747 = vmatmul.mubr.bf16.gmra.mrb[0].mxu0 %v573
        %v748 = vpop.f32.mrb[0].mxu0
        %v749 = vadd.f32 0.0, %v748
        %v750 = vpop.f32.mrb[0].mxu0
        %v751 = vpop.f32.mrb[0].mxu0
        %v752 = vadd.f32 0.0, %v751
        %v753 = vpop.f32.mrb[0].mxu0
        %754 = vmatprep.mubr.bf16.mxu0 0
        %755 = vmatmul.mubr.bf16.gmra.mrb[0].mxu0 %v574
        %v756 = vpop.f32.mrb[0].mxu0
        %v757 = vadd.f32 0.0, %v756
        %v758 = vpop.f32.mrb[0].mxu0
        %v759 = vpop.f32.mrb[0].mxu0
        %v760 = vadd.f32 0.0, %v759
        %v761 = vpop.f32.mrb[0].mxu0
        %762 = vmatprep.mubr.bf16.mxu0 0
        %763 = vmatmul.mubr.bf16.gmra.mrb[0].mxu0 %v575
        %v764 = vpop.f32.mrb[0].mxu0
        %v765 = vadd.f32 0.0, %v764
        %v766 = vpop.f32.mrb[0].mxu0
        %v767 = vpop.f32.mrb[0].mxu0
        %v768 = vadd.f32 0.0, %v767
        %v769 = vpop.f32.mrb[0].mxu0
        %770 = vmatprep.mubr.bf16.mxu0 0
        %771 = vmatmul.mubr.bf16.gmra.mrb[0].mxu0 %v576
        %v772 = vpop.f32.mrb[0].mxu0
        %v773 = vadd.f32 0.0, %v772
        %v774 = vpop.f32.mrb[0].mxu0
        %v775 = vpop.f32.mrb[0].mxu0
        %v776 = vadd.f32 0.0, %v775
        %v777 = vpop.f32.mrb[0].mxu0
        %778 = vmatprep.mubr.bf16.mxu0 0
        %779 = vmatmul.mubr.bf16.gmra.mrb[0].mxu0 %v577
        %v780 = vpop.f32.mrb[0].mxu0
        %v781 = vadd.f32 0.0, %v780
        %v782 = vpop.f32.mrb[0].mxu0
        %v783 = vpop.f32.mrb[0].mxu0
        %v784 = vadd.f32 0.0, %v783
        %v785 = vpop.f32.mrb[0].mxu0
        %786 = vmatprep.mubr.bf16.mxu0 0
        %787 = vmatmul.mubr.bf16.gmra.mrb[0].mxu0 %v578
        %v788 = vpop.f32.mrb[0].mxu0
        %v789 = vadd.f32 0.0, %v788
        %v790 = vpop.f32.mrb[0].mxu0
        %v791 = vpop.f32.mrb[0].mxu0
        %v792 = vadd.f32 0.0, %v791
        %v793 = vpop.f32.mrb[0].mxu0
        %794 = vmatprep.mubr.bf16.mxu0 0
        %795 = vmatmul.mubr.bf16.gmra.mrb[0].mxu0 %v579
        %v796 = vpop.f32.mrb[0].mxu0
        %v797 = vadd.f32 0.0, %v796
        %v798 = vpop.f32.mrb[0].mxu0
        %v799 = vpop.f32.mrb[0].mxu0
        %v800 = vadd.f32 0.0, %v799
        %v801 = vpop.f32.mrb[0].mxu0
        %802 = vmatprep.mubr.bf16.mxu0 0
        %803 = vmatmul.mubr.bf16.gmra.mrb[0].mxu0 %v580
        %v804 = vpop.f32.mrb[0].mxu0
        %v805 = vadd.f32 0.0, %v804
        %v806 = vpop.f32.mrb[0].mxu0
        %v807 = vpop.f32.mrb[0].mxu0
        %v808 = vadd.f32 0.0, %v807
        %v809 = vpop.f32.mrb[0].mxu0
        %810 = vmatprep.mubr.bf16.mxu0 0
        %811 = vmatmul.mubr.bf16.gmra.mrb[0].mxu0 %v581
        %v812 = vpop.f32.mrb[0].mxu0
        %v813 = vadd.f32 0.0, %v812
        %v814 = vpop.f32.mrb[0].mxu0
        %v815 = vpop.f32.mrb[0].mxu0
        %v816 = vadd.f32 0.0, %v815
        %v817 = vpop.f32.mrb[0].mxu0
        %818 = vmatprep.mubr.bf16.mxu0 0
        %819 = vmatmul.mubr.bf16.gmra.mrb[0].mxu0 %v582
        %v820 = vpop.f32.mrb[0].mxu0
        %v821 = vadd.f32 0.0, %v820
        %v822 = vpop.f32.mrb[0].mxu0
        %v823 = vpop.f32.mrb[0].mxu0
        %v824 = vadd.f32 0.0, %v823
        %v825 = vpop.f32.mrb[0].mxu0
        %826 = vmatprep.mubr.bf16.mxu0 0
        %827 = vmatmul.mubr.bf16.gmra.mrb[0].mxu0 %v583
        %v828 = vpop.f32.mrb[0].mxu0
        %v829 = vadd.f32 0.0, %v828
        %v830 = vpop.f32.mrb[0].mxu0
        %v831 = vpop.f32.mrb[0].mxu0
        %v832 = vadd.f32 0.0, %v831
        %v833 = vpop.f32.mrb[0].mxu0
        %834 = vmatprep.mubr.bf16.mxu0 0
        %835 = vmatmul.mubr.bf16.gmra.mrb[0].mxu0 %v584
        %v836 = vpop.f32.mrb[0].mxu0
        %v837 = vadd.f32 0.0, %v836
        %v838 = vpop.f32.mrb[0].mxu0
        %v839 = vpop.f32.mrb[0].mxu0
        %v840 = vadd.f32 0.0, %v839
        %v841 = vpop.f32.mrb[0].mxu0
        %842 = vmatprep.mubr.bf16.mxu0 0
        %843 = vmatmul.mubr.bf16.gmra.mrb[0].mxu0 %v585
        %v844 = vpop.f32.mrb[0].mxu0
        %v845 = vadd.f32 0.0, %v844
        %v846 = vpop.f32.mrb[0].mxu0
        %v847 = vpop.f32.mrb[0].mxu0
        %v848 = vadd.f32 0.0, %v847
        %v849 = vpop.f32.mrb[0].mxu0
        %850 = vmatprep.mubr.bf16.mxu0 0
        %851 = vmatmul.mubr.bf16.gmra.mrb[0].mxu0 %v586
        %v852 = vpop.f32.mrb[0].mxu0
        %v853 = vadd.f32 0.0, %v852
        %v854 = vpop.f32.mrb[0].mxu0
        %v855 = vpop.f32.mrb[0].mxu0
        %v856 = vadd.f32 0.0, %v855
        %v857 = vpop.f32.mrb[0].mxu0
        %858 = vmatprep.mubr.bf16.mxu0 0
        %859 = vmatmul.mubr.bf16.gmra.mrb[0].mxu0 %v587
        %v860 = vpop.f32.mrb[0].mxu0
        %v861 = vpop.f32.mrb[0].mxu0
        %v862 = vpop.f32.mrb[0].mxu0
        %v863 = vpop.f32.mrb[0].mxu0
        %864 = vdwg.mxu0
        %v865 = vmax.f32 %v693, 0.0
        %v866 = vmax.f32 %v696, 0.0
        %v867 = vmax.f32 %v701, 0.0
        %v868 = vmax.f32 %v704, 0.0
        %v869 = vmax.f32 %v709, 0.0
        %v870 = vmax.f32 %v712, 0.0
        %v871 = vmax.f32 %v717, 0.0
        %v872 = vmax.f32 %v720, 0.0
        %v873 = vmax.f32 %v725, 0.0
        %v874 = vmax.f32 %v728, 0.0
        %v875 = vmax.f32 %v733, 0.0
        %v876 = vmax.f32 %v736, 0.0
        %v877 = vmax.f32 %v741, 0.0
        %v878 = vmax.f32 %v744, 0.0
        %v879 = vmax.f32 %v749, 0.0
        %v880 = vmax.f32 %v752, 0.0
        %v881 = vmax.f32 %v757, 0.0
        %v882 = vmax.f32 %v760, 0.0
        %v883 = vmax.f32 %v765, 0.0
        %v884 = vmax.f32 %v768, 0.0
        %v885 = vmax.f32 %v773, 0.0
        %v886 = vmax.f32 %v776, 0.0
        %v887 = vmax.f32 %v781, 0.0
        %v888 = vmax.f32 %v784, 0.0
        %v889 = vmax.f32 %v789, 0.0
        %v890 = vmax.f32 %v792, 0.0
        %v891 = vmax.f32 %v797, 0.0
        %v892 = vmax.f32 %v800, 0.0
        %v893 = vmax.f32 %v805, 0.0
        %v894 = vmax.f32 %v808, 0.0
        %v895 = vmax.f32 %v813, 0.0
        %v896 = vmax.f32 %v816, 0.0
        %v897 = vmax.f32 %v821, 0.0
        %v898 = vmax.f32 %v824, 0.0
        %v899 = vmax.f32 %v829, 0.0
        %v900 = vmax.f32 %v832, 0.0
        %v901 = vmax.f32 %v837, 0.0
        %v902 = vmax.f32 %v840, 0.0
        %v903 = vmax.f32 %v845, 0.0
        %v904 = vmax.f32 %v848, 0.0
        %v905 = vmax.f32 %v853, 0.0
        %v906 = vmax.f32 %v856, 0.0
        %v907 = vpack.c.bf16 %v866, %v865
        %v908 = vpack.c.bf16 %v868, %v867
        %v909 = vpack.c.bf16 %v870, %v869
        %v910 = vpack.c.bf16 %v872, %v871
        %v911 = vpack.c.bf16 %v874, %v873
        %v912 = vpack.c.bf16 %v876, %v875
        %v913 = vpack.c.bf16 %v878, %v877
        %v914 = vpack.c.bf16 %v880, %v879
        %v915 = vpack.c.bf16 %v882, %v881
        %v916 = vpack.c.bf16 %v884, %v883
        %v917 = vpack.c.bf16 %v886, %v885
        %v918 = vpack.c.bf16 %v888, %v887
        %v919 = vpack.c.bf16 %v890, %v889
        %v920 = vpack.c.bf16 %v892, %v891
        %v921 = vpack.c.bf16 %v894, %v893
        %v922 = vpack.c.bf16 %v896, %v895
        %v923 = vpack.c.bf16 %v898, %v897
        %v924 = vpack.c.bf16 %v900, %v899
        %v925 = vpack.c.bf16 %v902, %v901
        %v926 = vpack.c.bf16 %v904, %v903
        %v927 = vpack.c.bf16 %v906, %v905
        %vm928 = vsmask.f32 7424
        %v930 = vshrl.u32 %v907, 16
        %v932 = vshll.u32 %v907, 16
        %v934 = vrot.slane %v932, 1
        %v935 = vor.u32 %v930, %v934
        %v937 = vshll.u32 %v908, 16
        %v939 = vrot.slane %v937, 1
        %v940 = vsel %vm928, %v935, %v939
        %v941 = vshrl.u32 %v908, 16
        %v943 = vor.u32 %v941, %v939
        %v945 = vshll.u32 %v909, 16
        %v947 = vrot.slane %v945, 1
        %v948 = vsel %vm928, %v943, %v947
        %v949 = vshrl.u32 %v909, 16
        %v951 = vor.u32 %v949, %v947
        %v953 = vshll.u32 %v910, 16
        %v955 = vrot.slane %v953, 1
        %v956 = vsel %vm928, %v951, %v955
        %v957 = vshrl.u32 %v910, 16
        %v959 = vor.u32 %v957, %v955
        %v961 = vshll.u32 %v911, 16
        %v963 = vrot.slane %v961, 1
        %v964 = vsel %vm928, %v959, %v963
        %v965 = vshrl.u32 %v911, 16
        %v967 = vor.u32 %v965, %v963
        %v969 = vshll.u32 %v912, 16
        %v971 = vrot.slane %v969, 1
        %v972 = vsel %vm928, %v967, %v971
        %v973 = vshrl.u32 %v912, 16
        %v975 = vor.u32 %v973, %v971
        %v977 = vshll.u32 %v913, 16
        %v979 = vrot.slane %v977, 1
        %v980 = vsel %vm928, %v975, %v979
        %v981 = vshrl.u32 %v913, 16
        %v983 = vor.u32 %v981, %v979
        %v985 = vshll.u32 %v914, 16
        %v987 = vrot.slane %v985, 1
        %v988 = vsel %vm928, %v983, %v987
        %v989 = vshrl.u32 %v914, 16
        %v991 = vor.u32 %v989, %v987
        %v993 = vshll.u32 %v915, 16
        %v995 = vrot.slane %v993, 1
        %v996 = vsel %vm928, %v991, %v995
        %v997 = vshrl.u32 %v915, 16
        %v999 = vor.u32 %v997, %v995
        %v1001 = vshll.u32 %v916, 16
        %v1003 = vrot.slane %v1001, 1
        %v1004 = vsel %vm928, %v999, %v1003
        %v1005 = vshrl.u32 %v916, 16
        %v1007 = vor.u32 %v1005, %v1003
        %v1009 = vshll.u32 %v917, 16
        %v1011 = vrot.slane %v1009, 1
        %v1012 = vsel %vm928, %v1007, %v1011
        %v1013 = vshrl.u32 %v917, 16
        %v1015 = vor.u32 %v1013, %v1011
        %v1017 = vshll.u32 %v918, 16
        %v1019 = vrot.slane %v1017, 1
        %v1020 = vsel %vm928, %v1015, %v1019
        %v1021 = vshrl.u32 %v918, 16
        %v1023 = vor.u32 %v1021, %v1019
        %v1025 = vshll.u32 %v919, 16
        %v1027 = vrot.slane %v1025, 1
        %v1028 = vsel %vm928, %v1023, %v1027
        %v1029 = vshrl.u32 %v919, 16
        %v1031 = vor.u32 %v1029, %v1027
        %v1033 = vshll.u32 %v920, 16
        %v1035 = vrot.slane %v1033, 1
        %v1036 = vsel %vm928, %v1031, %v1035
        %v1037 = vshrl.u32 %v920, 16
        %v1039 = vor.u32 %v1037, %v1035
        %v1041 = vshll.u32 %v921, 16
        %v1043 = vrot.slane %v1041, 1
        %v1044 = vsel %vm928, %v1039, %v1043
        %v1045 = vshrl.u32 %v921, 16
        %v1047 = vor.u32 %v1045, %v1043
        %v1049 = vshll.u32 %v922, 16
        %v1051 = vrot.slane %v1049, 1
        %v1052 = vsel %vm928, %v1047, %v1051
        %v1053 = vshrl.u32 %v922, 16
        %v1055 = vor.u32 %v1053, %v1051
        %v1057 = vshll.u32 %v923, 16
        %v1059 = vrot.slane %v1057, 1
        %v1060 = vsel %vm928, %v1055, %v1059
        %v1061 = vshrl.u32 %v923, 16
        %v1063 = vor.u32 %v1061, %v1059
        %v1065 = vshll.u32 %v924, 16
        %v1067 = vrot.slane %v1065, 1
        %v1068 = vsel %vm928, %v1063, %v1067
        %v1069 = vshrl.u32 %v924, 16
        %v1071 = vor.u32 %v1069, %v1067
        %v1073 = vshll.u32 %v925, 16
        %v1075 = vrot.slane %v1073, 1
        %v1076 = vsel %vm928, %v1071, %v1075
        %vm1114 = vcmask 1046528
        %v1115 = vrot.slane %v907, 1
        %v1116 = vrot.slane %v908, 1
        %v1117 = vsel %vm1114, %v1115, %v1116
        %v1118 = vrot.slane %v909, 1
        %v1119 = vsel %vm1114, %v1116, %v1118
        %v1120 = vrot.slane %v910, 1
        %v1121 = vsel %vm1114, %v1118, %v1120
        %v1122 = vrot.slane %v911, 1
        %v1123 = vsel %vm1114, %v1120, %v1122
        %v1124 = vrot.slane %v912, 1
        %v1125 = vsel %vm1114, %v1122, %v1124
        %v1126 = vrot.slane %v913, 1
        %v1127 = vsel %vm1114, %v1124, %v1126
        %v1128 = vrot.slane %v914, 1
        %v1129 = vsel %vm1114, %v1126, %v1128
        %v1130 = vrot.slane %v915, 1
        %v1131 = vsel %vm1114, %v1128, %v1130
        %v1132 = vrot.slane %v916, 1
        %v1133 = vsel %vm1114, %v1130, %v1132
        %v1134 = vrot.slane %v917, 1
        %v1135 = vsel %vm1114, %v1132, %v1134
        %v1136 = vrot.slane %v918, 1
        %v1137 = vsel %vm1114, %v1134, %v1136
        %v1138 = vrot.slane %v919, 1
        %v1139 = vsel %vm1114, %v1136, %v1138
        %v1140 = vrot.slane %v920, 1
        %v1141 = vsel %vm1114, %v1138, %v1140
        %v1142 = vrot.slane %v921, 1
        %v1143 = vsel %vm1114, %v1140, %v1142
        %v1144 = vrot.slane %v922, 1
        %v1145 = vsel %vm1114, %v1142, %v1144
        %v1146 = vrot.slane %v923, 1
        %v1147 = vsel %vm1114, %v1144, %v1146
        %v1148 = vrot.slane %v924, 1
        %v1149 = vsel %vm1114, %v1146, %v1148
        %v1150 = vrot.slane %v925, 1
        %v1151 = vsel %vm1114, %v1148, %v1150
        %v1170 = vld [vmem:[#allocation7] sm:$0xf]
        %v1171 = vld [vmem:[#allocation7 + $0x4] sm:$0xf]
        %v1172 = vld [vmem:[#allocation7 + $0x8] sm:$0xf]
        %v1173 = vld [vmem:[#allocation7 + $0xc] sm:$0xf]
        %v1174 = vld [vmem:[#allocation7 + $0x10] sm:$0xf]
        %v1175 = vld [vmem:[#allocation7 + $0x14] sm:$0xf]
        %v1176 = vld [vmem:[#allocation7 + $0x18] sm:$0xf]
        %v1177 = vld [vmem:[#allocation7 + $0x1c] sm:$0xf]
        %v1178 = vld [vmem:[#allocation7 + $0x20] sm:$0xf]
        %v1179 = vld [vmem:[#allocation7 + $0x24] sm:$0xf]
        %v1180 = vld [vmem:[#allocation7 + $0x28] sm:$0xf]
        %v1181 = vld [vmem:[#allocation7 + $0x2c] sm:$0xf]
        %v1182 = vld [vmem:[#allocation7 + $0x30] sm:$0xf]
        %v1183 = vld [vmem:[#allocation7 + $0x34] sm:$0xf]
        %v1184 = vld [vmem:[#allocation7 + $0x38] sm:$0xf]
        %v1185 = vld [vmem:[#allocation7 + $0x3c] sm:$0xf]
        %v1186 = vld [vmem:[#allocation7 + $0x40] sm:$0xf]
        %v1187 = vld [vmem:[#allocation7 + $0x44] sm:$0xf]
        %v1188 = vld [vmem:[#allocation7 + $0x48] sm:$0xf]
        %v1189 = vld [vmem:[#allocation7 + $0x4c] sm:$0xf]
        %v1190 = vld [vmem:[#allocation7 + $0x50] sm:$0xf]
        %v1191 = vld [vmem:[#allocation7 + $0x54] sm:$0xf]
        %v1192 = vld [vmem:[#allocation7 + $0x58] sm:$0xf]
        %v1193 = vld [vmem:[#allocation7 + $0x5c] sm:$0xf]
        %v1194 = vld [vmem:[#allocation7 + $0x60] sm:$0xf]
        %v1195 = vld [vmem:[#allocation7 + $0x64] sm:$0xf]
        %v1196 = vld [vmem:[#allocation7 + $0x68] sm:$0xf]
        %v1197 = vld [vmem:[#allocation7 + $0x6c] sm:$0xf]
        %v1198 = vld [vmem:[#allocation7 + $0x70] sm:$0xf]
        %v1199 = vld [vmem:[#allocation7 + $0x74] sm:$0xf]
        %v1200 = vld [vmem:[#allocation7 + $0x78] sm:$0xf]
        %v1201 = vld [vmem:[#allocation7 + $0x7c] sm:$0xf]
        %v1202 = vld [vmem:[#allocation7 + $0x80] sm:$0xf]
        %v1203 = vld [vmem:[#allocation7 + $0x84] sm:$0xf]
        %v1204 = vld [vmem:[#allocation7 + $0x88] sm:$0xf]
        %v1205 = vld [vmem:[#allocation7 + $0x8c] sm:$0xf]
        %v1206 = vld [vmem:[#allocation7 + $0x90] sm:$0xf]
        %v1207 = vld [vmem:[#allocation7 + $0x94] sm:$0xf]
        %v1208 = vld [vmem:[#allocation7 + $0x98] sm:$0xf]
        %v1209 = vld [vmem:[#allocation7 + $0x9c] sm:$0xf]
        %v1210 = vld [vmem:[#allocation7 + $0xa0] sm:$0xf]
        %v1211 = vld [vmem:[#allocation7 + $0xa4] sm:$0xf]
        %v1212 = vld [vmem:[#allocation7 + $0xa8] sm:$0xf]
        %v1213 = vld [vmem:[#allocation7 + $0xac] sm:$0xf]
        %v1214 = vld [vmem:[#allocation7 + $0xb0] sm:$0xf]
        %v1215 = vld [vmem:[#allocation7 + $0xb4] sm:$0xf]
        %v1216 = vld [vmem:[#allocation7 + $0xb8] sm:$0xf]
        %v1217 = vld [vmem:[#allocation7 + $0xbc] sm:$0xf]
        %v1218 = vshrl.u32 %v925, 16
        %v1220 = vor.u32 %v1218, %v1075
        %v1222 = vshll.u32 %v926, 16
        %v1224 = vrot.slane %v1222, 1
        %v1225 = vsel %vm928, %v1220, %v1224
        %v1226 = vshrl.u32 %v926, 16
        %v1228 = vor.u32 %v1226, %v1224
        %v1230 = vrot.slane %v926, 1
        %v1231 = vsel %vm1114, %v1150, %v1230
        %s1232 = scalar_lea.vmem [#allocation7], 192
        %v1233 = vld [vmem:[%s1232] sm:$0xf]
        %v1234 = vld [vmem:[%s1232 + $0x4] sm:$0xf]
        %v1235 = vld [vmem:[%s1232 + $0x8] sm:$0xf]
        %v1236 = vld [vmem:[%s1232 + $0xc] sm:$0xf]
        %v1237 = vld [vmem:[%s1232 + $0x10] sm:$0xf]
        %v1238 = vld [vmem:[%s1232 + $0x14] sm:$0xf]
        %v1239 = vld [vmem:[%s1232 + $0x18] sm:$0xf]
        %v1240 = vld [vmem:[%s1232 + $0x1c] sm:$0xf]
        %v1241 = vld [vmem:[%s1232 + $0x20] sm:$0xf]
        %v1242 = vld [vmem:[%s1232 + $0x24] sm:$0xf]
        %v1243 = vld [vmem:[%s1232 + $0x28] sm:$0xf]
        %v1244 = vld [vmem:[%s1232 + $0x2c] sm:$0xf]
        %v1245 = vld [vmem:[%s1232 + $0x30] sm:$0xf]
        %v1246 = vld [vmem:[%s1232 + $0x34] sm:$0xf]
        %v1247 = vld [vmem:[%s1232 + $0x38] sm:$0xf]
        %v1248 = vld [vmem:[%s1232 + $0x3c] sm:$0xf]
        %v1249 = vld [vmem:[%s1232 + $0x40] sm:$0xf]
        %v1250 = vld [vmem:[%s1232 + $0x44] sm:$0xf]
        %v1251 = vld [vmem:[%s1232 + $0x48] sm:$0xf]
        %v1252 = vld [vmem:[%s1232 + $0x4c] sm:$0xf]
        %v1253 = vld [vmem:[%s1232 + $0x50] sm:$0xf]
        %v1254 = vld [vmem:[%s1232 + $0x54] sm:$0xf]
        %v1255 = vld [vmem:[%s1232 + $0x58] sm:$0xf]
        %v1256 = vld [vmem:[%s1232 + $0x5c] sm:$0xf]
        %v1257 = vld [vmem:[%s1232 + $0x60] sm:$0xf]
        %v1258 = vld [vmem:[%s1232 + $0x64] sm:$0xf]
        %v1259 = vld [vmem:[%s1232 + $0x68] sm:$0xf]
        %v1260 = vld [vmem:[%s1232 + $0x6c] sm:$0xf]
        %v1261 = vld [vmem:[%s1232 + $0x70] sm:$0xf]
        %v1262 = vld [vmem:[%s1232 + $0x74] sm:$0xf]
        %v1263 = vld [vmem:[%s1232 + $0x78] sm:$0xf]
        %v1264 = vld [vmem:[%s1232 + $0x7c] sm:$0xf]
        %v1265 = vld [vmem:[%s1232 + $0x80] sm:$0xf]
        %v1266 = vld [vmem:[%s1232 + $0x84] sm:$0xf]
        %v1267 = vld [vmem:[%s1232 + $0x88] sm:$0xf]
        %v1268 = vld [vmem:[%s1232 + $0x8c] sm:$0xf]
        %v1269 = vld [vmem:[%s1232 + $0x90] sm:$0xf]
        %v1270 = vld [vmem:[%s1232 + $0x94] sm:$0xf]
        %v1271 = vld [vmem:[%s1232 + $0x98] sm:$0xf]
        %v1272 = vld [vmem:[%s1232 + $0x9c] sm:$0xf]
        %v1273 = vld [vmem:[%s1232 + $0xa0] sm:$0xf]
        %v1274 = vld [vmem:[%s1232 + $0xa4] sm:$0xf]
        %v1275 = vld [vmem:[%s1232 + $0xa8] sm:$0xf]
        %v1276 = vld [vmem:[%s1232 + $0xac] sm:$0xf]
        %v1277 = vld [vmem:[%s1232 + $0xb0] sm:$0xf]
        %v1278 = vld [vmem:[%s1232 + $0xb4] sm:$0xf]
        %v1279 = vld [vmem:[%s1232 + $0xb8] sm:$0xf]
        %v1280 = vld [vmem:[%s1232 + $0xbc] sm:$0xf]
        %v1281 = vrot.slane %v948, 1
        %v1282 = vrot.slane %v956, 1
        %v1283 = vsel %vm1114, %v1281, %v1282
        %v1284 = vrot.slane %v1119, 1
        %v1285 = vrot.slane %v1121, 1
        %v1286 = vsel %vm1114, %v1284, %v1285
        %v1287 = vrot.slane %v964, 1
        %v1288 = vsel %vm1114, %v1282, %v1287
        %v1289 = vrot.slane %v1123, 1
        %v1290 = vsel %vm1114, %v1285, %v1289
        %v1291 = vrot.slane %v972, 1
        %v1292 = vsel %vm1114, %v1287, %v1291
        %v1293 = vrot.slane %v1125, 1
        %v1294 = vsel %vm1114, %v1289, %v1293
        %v1295 = vrot.slane %v980, 1
        %v1296 = vsel %vm1114, %v1291, %v1295
        %v1297 = vrot.slane %v1127, 1
        %v1298 = vsel %vm1114, %v1293, %v1297
        %v1299 = vrot.slane %v988, 1
        %v1300 = vsel %vm1114, %v1295, %v1299
        %v1301 = vrot.slane %v1129, 1
        %v1302 = vsel %vm1114, %v1297, %v1301
        %v1303 = vrot.slane %v996, 1
        %v1304 = vsel %vm1114, %v1299, %v1303
        %v1305 = vrot.slane %v1131, 1
        %v1306 = vsel %vm1114, %v1301, %v1305
        %v1307 = vrot.slane %v1004, 1
        %v1308 = vsel %vm1114, %v1303, %v1307
        %v1309 = vrot.slane %v1133, 1
        %v1310 = vsel %vm1114, %v1305, %v1309
        %v1311 = vrot.slane %v1012, 1
        %v1312 = vsel %vm1114, %v1307, %v1311
        %v1313 = vrot.slane %v1135, 1
        %v1314 = vsel %vm1114, %v1309, %v1313
        %v1315 = vrot.slane %v1020, 1
        %v1316 = vsel %vm1114, %v1311, %v1315
        %v1317 = vrot.slane %v1137, 1
        %v1318 = vsel %vm1114, %v1313, %v1317
        %v1319 = vrot.slane %v1028, 1
        %v1320 = vsel %vm1114, %v1315, %v1319
        %v1321 = vrot.slane %v1139, 1
        %v1322 = vsel %vm1114, %v1317, %v1321
        %v1323 = vrot.slane %v1036, 1
        %v1324 = vsel %vm1114, %v1319, %v1323
        %v1325 = vrot.slane %v1141, 1
        %v1326 = vsel %vm1114, %v1321, %v1325
        %v1327 = vrot.slane %v1044, 1
        %v1328 = vsel %vm1114, %v1323, %v1327
        %v1329 = vrot.slane %v1143, 1
        %v1330 = vsel %vm1114, %v1325, %v1329
        %v1331 = vrot.slane %v1052, 1
        %v1332 = vsel %vm1114, %v1327, %v1331
        %v1333 = vrot.slane %v1145, 1
        %v1334 = vsel %vm1114, %v1329, %v1333
        %v1335 = vrot.slane %v1060, 1
        %v1336 = vsel %vm1114, %v1331, %v1335
        %v1337 = vrot.slane %v1147, 1
        %v1338 = vsel %vm1114, %v1333, %v1337
        %v1339 = vrot.slane %v1068, 1
        %v1340 = vsel %vm1114, %v1335, %v1339
        %v1341 = vrot.slane %v1149, 1
        %v1342 = vsel %vm1114, %v1337, %v1341
        %v1343 = vrot.slane %v1076, 1
        %v1344 = vsel %vm1114, %v1339, %v1343
        %v1345 = vrot.slane %v1151, 1
        %v1346 = vsel %vm1114, %v1341, %v1345
        %v1347 = vrot.slane %v1225, 1
        %v1348 = vsel %vm1114, %v1343, %v1347
        %v1349 = vrot.slane %v1231, 1
        %v1350 = vsel %vm1114, %v1345, %v1349
        %v1351 = vrot.slane %v1228, 1
        %v1352 = vsel %vm1114, %v1347, %v1351
        %v1353 = vrot.slane %v1230, 1
        %v1354 = vsel %vm1114, %v1349, %v1353
        %v1440 = vunpack.c.l.b16 %v1233
        %v1441 = vunpack.c.l.b16 %v1234
        %v1442 = vunpack.c.l.b16 %v1235
        %v1443 = vunpack.c.l.b16 %v1236
        %v1444 = vunpack.c.l.b16 %v1237
        %v1445 = vunpack.c.l.b16 %v1238
        %v1446 = vunpack.c.l.b16 %v1239
        %v1447 = vunpack.c.l.b16 %v1240
        %v1448 = vunpack.c.l.b16 %v1241
        %v1449 = vunpack.c.l.b16 %v1242
        %v1450 = vunpack.c.l.b16 %v1243
        %v1451 = vunpack.c.l.b16 %v1244
        %v1452 = vunpack.c.l.b16 %v1245
        %v1453 = vunpack.c.l.b16 %v1246
        %v1454 = vunpack.c.l.b16 %v1247
        %v1455 = vunpack.c.l.b16 %v1248
        %v1456 = vunpack.c.l.b16 %v1249
        %v1457 = vunpack.c.l.b16 %v1250
        %v1458 = vunpack.c.l.b16 %v1251
        %v1459 = vunpack.c.l.b16 %v1252
        %v1460 = vunpack.c.l.b16 %v1253
        %v1461 = vunpack.c.l.b16 %v1254
        %v1462 = vunpack.c.l.b16 %v1255
        %v1463 = vunpack.c.l.b16 %v1256
        %v1464 = vunpack.c.l.b16 %v1257
        %v1465 = vunpack.c.l.b16 %v1258
        %v1466 = vunpack.c.l.b16 %v1259
        %v1467 = vunpack.c.l.b16 %v1260
        %v1468 = vunpack.c.l.b16 %v1261
        %v1469 = vunpack.c.l.b16 %v1262
        %v1470 = vunpack.c.l.b16 %v1263
        %v1471 = vunpack.c.l.b16 %v1264
        %v1472 = vunpack.c.l.b16 %v1265
        %v1473 = vunpack.c.l.b16 %v1266
        %v1474 = vunpack.c.l.b16 %v1267
        %v1475 = vunpack.c.l.b16 %v1268
        %v1476 = vunpack.c.l.b16 %v1269
        %v1477 = vunpack.c.l.b16 %v1270
        %v1478 = vunpack.c.l.b16 %v1271
        %v1479 = vunpack.c.l.b16 %v1272
        %v1480 = vunpack.c.l.b16 %v1273
        %v1481 = vunpack.c.l.b16 %v1274
        %v1482 = vunpack.c.l.b16 %v1275
        %v1483 = vunpack.c.l.b16 %v1276
        %v1484 = vunpack.c.l.b16 %v1277
        %v1485 = vunpack.c.l.b16 %v1278
        %v1486 = vunpack.c.l.b16 %v1279
        %v1487 = vunpack.c.l.b16 %v1280
        %v1488 = vpack.c.b16 %v1441, %v1440
        %v1489 = vpack.c.b16 %v1443, %v1442
        %v1490 = vpack.c.b16 %v1445, %v1444
        %v1491 = vpack.c.b16 %v1447, %v1446
        %v1492 = vpack.c.b16 %v1449, %v1448
        %v1493 = vpack.c.b16 %v1451, %v1450
        %v1494 = vpack.c.b16 %v1453, %v1452
        %v1495 = vpack.c.b16 %v1455, %v1454
        %v1496 = vpack.c.b16 %v1457, %v1456
        %v1497 = vpack.c.b16 %v1459, %v1458
        %v1498 = vpack.c.b16 %v1461, %v1460
        %v1499 = vpack.c.b16 %v1463, %v1462
        %v1500 = vpack.c.b16 %v1465, %v1464
        %v1501 = vpack.c.b16 %v1467, %v1466
        %v1502 = vpack.c.b16 %v1469, %v1468
        %v1503 = vpack.c.b16 %v1471, %v1470
        %v1504 = vpack.c.b16 %v1473, %v1472
        %v1505 = vpack.c.b16 %v1475, %v1474
        %v1506 = vpack.c.b16 %v1477, %v1476
        %v1507 = vpack.c.b16 %v1479, %v1478
        %v1508 = vpack.c.b16 %v1481, %v1480
        %v1509 = vpack.c.b16 %v1483, %v1482
        %v1510 = vpack.c.b16 %v1485, %v1484
        %v1511 = vpack.c.b16 %v1487, %v1486
        %1536 = vmatprep.subr.bf16.mxu0 0
        %1537 = vmatpush1.bf16.msra.mxu0 %v1488
        %1538 = vmatprep.subr.bf16.mxu0 0
        %1539 = vmatpush1.bf16.msra.mxu0 %v1489
        %1540 = vmatprep.subr.bf16.mxu0 0
        %1541 = vmatpush1.bf16.msra.mxu0 %v1490
        %1542 = vmatprep.subr.bf16.mxu0 0
        %1543 = vmatpush1.bf16.msra.mxu0 %v1491
        %1544 = vmatprep.subr.bf16.mxu0 0
        %1545 = vmatpush1.bf16.msra.mxu0 %v1492
        %1546 = vmatprep.subr.bf16.mxu0 0
        %1547 = vmatpush1.bf16.msra.mxu0 %v1493
        %1548 = vmatprep.subr.bf16.mxu0 0
        %1549 = vmatpush1.bf16.msra.mxu0 %v1494
        %1550 = vmatprep.subr.bf16.mxu0 0
        %1551 = vmatpush1.bf16.msra.mxu0 %v1495
        %1552 = vmatprep.subr.bf16.mxu0 0
        %1553 = vmatpush1.bf16.msra.mxu0 %v1496
        %1554 = vmatprep.subr.bf16.mxu0 0
        %1555 = vmatpush1.bf16.msra.mxu0 %v1497
        %1556 = vmatprep.subr.bf16.mxu0 0
        %1557 = vmatpush1.bf16.msra.mxu0 %v1498
        %1558 = vmatprep.subr.bf16.mxu0 0
        %1559 = vmatpush1.bf16.msra.mxu0 %v1499
        %1560 = vmatprep.subr.bf16.mxu0 0
        %1561 = vmatpush1.bf16.msra.mxu0 %v1500
        %1562 = vmatprep.subr.bf16.mxu0 0
        %1563 = vmatpush1.bf16.msra.mxu0 %v1501
        %1564 = vmatprep.subr.bf16.mxu0 0
        %1565 = vmatpush1.bf16.msra.mxu0 %v1502
        %1566 = vmatprep.subr.bf16.mxu0 0
        %1567 = vmatpush1.bf16.msra.mxu0 %v1503
        %1568 = vmatprep.mubr.bf16.mxu0 %v1283
        %1569 = vmatmul.mubr.bf16.gmra.mrb[0].mxu0 %v1119
        %v1570 = vpop.f32.mrb[0].mxu0
        %v1571 = vadd.f32 0.0, %v1570
        %v1572 = vpop.f32.mrb[0].mxu0
        %v1573 = vpop.f32.mrb[0].mxu0
        %v1574 = vadd.f32 0.0, %v1573
        %v1575 = vpop.f32.mrb[0].mxu0
        %1576 = vmatprep.mubr.bf16.mxu0 %v1288
        %1577 = vmatmul.mubr.bf16.gmra.mrb[0].mxu0 %v1121
        %v1578 = vpop.f32.mrb[0].mxu0
        %v1579 = vadd.f32 0.0, %v1578
        %v1580 = vpop.f32.mrb[0].mxu0
        %v1581 = vpop.f32.mrb[0].mxu0
        %v1582 = vadd.f32 0.0, %v1581
        %v1583 = vpop.f32.mrb[0].mxu0
        %1584 = vmatprep.mubr.bf16.mxu0 %v1292
        %1585 = vmatmul.mubr.bf16.gmra.mrb[0].mxu0 %v1123
        %v1586 = vpop.f32.mrb[0].mxu0
        %v1587 = vadd.f32 0.0, %v1586
        %v1588 = vpop.f32.mrb[0].mxu0
        %v1589 = vpop.f32.mrb[0].mxu0
        %v1590 = vadd.f32 0.0, %v1589
        %v1591 = vpop.f32.mrb[0].mxu0
        %1592 = vmatprep.mubr.bf16.mxu0 %v1296
        %1593 = vmatmul.mubr.bf16.gmra.mrb[0].mxu0 %v1125
        %v1594 = vpop.f32.mrb[0].mxu0
        %v1595 = vadd.f32 0.0, %v1594
        %v1596 = vpop.f32.mrb[0].mxu0
        %v1597 = vpop.f32.mrb[0].mxu0
        %v1598 = vadd.f32 0.0, %v1597
        %v1599 = vpop.f32.mrb[0].mxu0
        %1600 = vmatprep.mubr.bf16.mxu0 %v1300
        %1601 = vmatmul.mubr.bf16.gmra.mrb[0].mxu0 %v1127
        %v1602 = vpop.f32.mrb[0].mxu0
        %v1603 = vadd.f32 0.0, %v1602
        %v1604 = vpop.f32.mrb[0].mxu0
        %v1605 = vpop.f32.mrb[0].mxu0
        %v1606 = vadd.f32 0.0, %v1605
        %v1607 = vpop.f32.mrb[0].mxu0
        %1608 = vmatprep.mubr.bf16.mxu0 %v1304
        %1609 = vmatmul.mubr.bf16.gmra.mrb[0].mxu0 %v1129
        %v1610 = vpop.f32.mrb[0].mxu0
        %v1611 = vadd.f32 0.0, %v1610
        %v1612 = vpop.f32.mrb[0].mxu0
        %v1613 = vpop.f32.mrb[0].mxu0
        %v1614 = vadd.f32 0.0, %v1613
        %v1615 = vpop.f32.mrb[0].mxu0
        %1616 = vmatprep.mubr.bf16.mxu0 %v1308
        %1617 = vmatmul.mubr.bf16.gmra.mrb[0].mxu0 %v1131
        %v1618 = vpop.f32.mrb[0].mxu0
        %v1619 = vadd.f32 0.0, %v1618
        %v1620 = vpop.f32.mrb[0].mxu0
        %v1621 = vpop.f32.mrb[0].mxu0
        %v1622 = vadd.f32 0.0, %v1621
        %v1623 = vpop.f32.mrb[0].mxu0
        %1624 = vmatprep.mubr.bf16.mxu0 %v1312
        %1625 = vmatmul.mubr.bf16.gmra.mrb[0].mxu0 %v1133
        %v1626 = vpop.f32.mrb[0].mxu0
        %v1627 = vadd.f32 0.0, %v1626
        %v1628 = vpop.f32.mrb[0].mxu0
        %v1629 = vpop.f32.mrb[0].mxu0
        %v1630 = vadd.f32 0.0, %v1629
        %v1631 = vpop.f32.mrb[0].mxu0
        %1632 = vmatprep.mubr.bf16.mxu0 %v1316
        %1633 = vmatmul.mubr.bf16.gmra.mrb[0].mxu0 %v1135
        %v1634 = vpop.f32.mrb[0].mxu0
        %v1635 = vadd.f32 0.0, %v1634
        %v1636 = vpop.f32.mrb[0].mxu0
        %v1637 = vpop.f32.mrb[0].mxu0
        %v1638 = vadd.f32 0.0, %v1637
        %v1639 = vpop.f32.mrb[0].mxu0
        %1640 = vmatprep.mubr.bf16.mxu0 %v1320
        %1641 = vmatmul.mubr.bf16.gmra.mrb[0].mxu0 %v1137
        %v1642 = vpop.f32.mrb[0].mxu0
        %v1643 = vadd.f32 0.0, %v1642
        %v1644 = vpop.f32.mrb[0].mxu0
        %v1645 = vpop.f32.mrb[0].mxu0
        %v1646 = vadd.f32 0.0, %v1645
        %v1647 = vpop.f32.mrb[0].mxu0
        %1648 = vmatprep.mubr.bf16.mxu0 %v1324
        %1649 = vmatmul.mubr.bf16.gmra.mrb[0].mxu0 %v1139
        %v1650 = vpop.f32.mrb[0].mxu0
        %v1651 = vadd.f32 0.0, %v1650
        %v1652 = vpop.f32.mrb[0].mxu0
        %v1653 = vpop.f32.mrb[0].mxu0
        %v1654 = vadd.f32 0.0, %v1653
        %v1655 = vpop.f32.mrb[0].mxu0
        %1656 = vmatprep.mubr.bf16.mxu0 %v1328
        %1657 = vmatmul.mubr.bf16.gmra.mrb[0].mxu0 %v1141
        %v1658 = vpop.f32.mrb[0].mxu0
        %v1659 = vadd.f32 0.0, %v1658
        %v1660 = vpop.f32.mrb[0].mxu0
        %v1661 = vpop.f32.mrb[0].mxu0
        %v1662 = vadd.f32 0.0, %v1661
        %v1663 = vpop.f32.mrb[0].mxu0
        %1664 = vmatprep.mubr.bf16.mxu0 %v1332
        %1665 = vmatmul.mubr.bf16.gmra.mrb[0].mxu0 %v1143
        %v1666 = vpop.f32.mrb[0].mxu0
        %v1667 = vadd.f32 0.0, %v1666
        %v1668 = vpop.f32.mrb[0].mxu0
        %v1669 = vpop.f32.mrb[0].mxu0
        %v1670 = vadd.f32 0.0, %v1669
        %v1671 = vpop.f32.mrb[0].mxu0
        %1672 = vmatprep.mubr.bf16.mxu0 %v1336
        %1673 = vmatmul.mubr.bf16.gmra.mrb[0].mxu0 %v1145
        %v1674 = vpop.f32.mrb[0].mxu0
        %v1675 = vadd.f32 0.0, %v1674
        %v1676 = vpop.f32.mrb[0].mxu0
        %v1677 = vpop.f32.mrb[0].mxu0
        %v1678 = vadd.f32 0.0, %v1677
        %v1679 = vpop.f32.mrb[0].mxu0
        %1680 = vmatprep.mubr.bf16.mxu0 %v1340
        %1681 = vmatmul.mubr.bf16.gmra.mrb[0].mxu0 %v1147
        %v1682 = vpop.f32.mrb[0].mxu0
        %v1683 = vadd.f32 0.0, %v1682
        %v1684 = vpop.f32.mrb[0].mxu0
        %v1685 = vpop.f32.mrb[0].mxu0
        %v1686 = vadd.f32 0.0, %v1685
        %v1687 = vpop.f32.mrb[0].mxu0
        %1688 = vmatprep.mubr.bf16.mxu0 %v1344
        %1689 = vmatmul.mubr.bf16.gmra.mrb[0].mxu0 %v1149
        %v1690 = vpop.f32.mrb[0].mxu0
        %v1691 = vadd.f32 0.0, %v1690
        %v1692 = vpop.f32.mrb[0].mxu0
        %v1693 = vpop.f32.mrb[0].mxu0
        %v1694 = vadd.f32 0.0, %v1693
        %v1695 = vpop.f32.mrb[0].mxu0
        %1696 = vmatprep.mubr.bf16.mxu0 %v1348
        %1697 = vmatmul.mubr.bf16.gmra.mrb[0].mxu0 %v1151
        %v1698 = vpop.f32.mrb[0].mxu0
        %v1699 = vadd.f32 0.0, %v1698
        %v1700 = vpop.f32.mrb[0].mxu0
        %v1701 = vpop.f32.mrb[0].mxu0
        %v1702 = vadd.f32 0.0, %v1701
        %v1703 = vpop.f32.mrb[0].mxu0
        %1704 = vmatprep.mubr.bf16.mxu0 %v1352
        %1705 = vmatmul.mubr.bf16.gmra.mrb[0].mxu0 %v1231
        %v1706 = vpop.f32.mrb[0].mxu0
        %v1707 = vadd.f32 0.0, %v1706
        %v1708 = vpop.f32.mrb[0].mxu0
        %v1709 = vpop.f32.mrb[0].mxu0
        %v1710 = vadd.f32 0.0, %v1709
        %v1711 = vpop.f32.mrb[0].mxu0
        %1712 = vdwg.mxu0
        %1713 = vmatprep.subr.bf16.mxu0 0
        %1714 = vmatpush1.bf16.msra.mxu0 %v1504
        %1715 = vmatprep.subr.bf16.mxu0 0
        %1716 = vmatpush1.bf16.msra.mxu0 %v1505
        %1717 = vmatprep.subr.bf16.mxu0 0
        %1718 = vmatpush1.bf16.msra.mxu0 %v1506
        %1719 = vmatprep.subr.bf16.mxu0 0
        %1720 = vmatpush1.bf16.msra.mxu0 %v1507
        %1721 = vmatprep.subr.bf16.mxu0 0
        %1722 = vmatpush1.bf16.msra.mxu0 %v1508
        %1723 = vmatprep.subr.bf16.mxu0 0
        %1724 = vmatpush1.bf16.msra.mxu0 %v1509
        %1725 = vmatprep.subr.bf16.mxu0 0
        %1726 = vmatpush1.bf16.msra.mxu0 %v1510
        %1727 = vmatprep.subr.bf16.mxu0 0
        %1728 = vmatpush1.bf16.msra.mxu0 %v1511
        %1729 = vmatprep.subr.bf16.mxu0 0
        %1730 = vmatpush1.bf16.msra.mxu0 0
        %1731 = vmatprep.subr.bf16.mxu0 0
        %1732 = vmatpush1.bf16.msra.mxu0 0
        %1733 = vmatprep.subr.bf16.mxu0 0
        %1734 = vmatpush1.bf16.msra.mxu0 0
        %1735 = vmatprep.subr.bf16.mxu0 0
        %1736 = vmatpush1.bf16.msra.mxu0 0
        %1737 = vmatprep.subr.bf16.mxu0 0
        %1738 = vmatpush1.bf16.msra.mxu0 0
        %1739 = vmatprep.subr.bf16.mxu0 0
        %1740 = vmatpush1.bf16.msra.mxu0 0
        %1741 = vmatprep.subr.bf16.mxu0 0
        %1742 = vmatpush1.bf16.msra.mxu0 0
        %1743 = vmatprep.subr.bf16.mxu0 0
        %1744 = vmatpush1.bf16.msra.mxu0 0
        %1745 = vmatprep.mubr.bf16.mxu0 0
        %1746 = vmatmul.mubr.bf16.gmra.mrb[0].mxu0 %v1286
        %v1747 = vpop.f32.mrb[0].mxu0
        %v1748 = vadd.f32 %v1571, %v1747
        %v1749 = vpop.f32.mrb[0].mxu0
        %v1750 = vpop.f32.mrb[0].mxu0
        %v1751 = vadd.f32 %v1574, %v1750
        %v1752 = vpop.f32.mrb[0].mxu0
        %1753 = vmatprep.mubr.bf16.mxu0 0
        %1754 = vmatmul.mubr.bf16.gmra.mrb[0].mxu0 %v1290
        %v1755 = vpop.f32.mrb[0].mxu0
        %v1756 = vadd.f32 %v1579, %v1755
        %v1757 = vpop.f32.mrb[0].mxu0
        %v1758 = vpop.f32.mrb[0].mxu0
        %v1759 = vadd.f32 %v1582, %v1758
        %v1760 = vpop.f32.mrb[0].mxu0
        %1761 = vmatprep.mubr.bf16.mxu0 0
        %1762 = vmatmul.mubr.bf16.gmra.mrb[0].mxu0 %v1294
        %v1763 = vpop.f32.mrb[0].mxu0
        %v1764 = vadd.f32 %v1587, %v1763
        %v1765 = vpop.f32.mrb[0].mxu0
        %v1766 = vpop.f32.mrb[0].mxu0
        %v1767 = vadd.f32 %v1590, %v1766
        %v1768 = vpop.f32.mrb[0].mxu0
        %1769 = vmatprep.mubr.bf16.mxu0 0
        %1770 = vmatmul.mubr.bf16.gmra.mrb[0].mxu0 %v1298
        %v1771 = vpop.f32.mrb[0].mxu0
        %v1772 = vadd.f32 %v1595, %v1771
        %v1773 = vpop.f32.mrb[0].mxu0
        %v1774 = vpop.f32.mrb[0].mxu0
        %v1775 = vadd.f32 %v1598, %v1774
        %v1776 = vpop.f32.mrb[0].mxu0
        %1777 = vmatprep.mubr.bf16.mxu0 0
        %1778 = vmatmul.mubr.bf16.gmra.mrb[0].mxu0 %v1302
        %v1779 = vpop.f32.mrb[0].mxu0
        %v1780 = vadd.f32 %v1603, %v1779
        %v1781 = vpop.f32.mrb[0].mxu0
        %v1782 = vpop.f32.mrb[0].mxu0
        %v1783 = vadd.f32 %v1606, %v1782
        %v1784 = vpop.f32.mrb[0].mxu0
        %1785 = vmatprep.mubr.bf16.mxu0 0
        %1786 = vmatmul.mubr.bf16.gmra.mrb[0].mxu0 %v1306
        %v1787 = vpop.f32.mrb[0].mxu0
        %v1788 = vadd.f32 %v1611, %v1787
        %v1789 = vpop.f32.mrb[0].mxu0
        %v1790 = vpop.f32.mrb[0].mxu0
        %v1791 = vadd.f32 %v1614, %v1790
        %v1792 = vpop.f32.mrb[0].mxu0
        %1793 = vmatprep.mubr.bf16.mxu0 0
        %1794 = vmatmul.mubr.bf16.gmra.mrb[0].mxu0 %v1310
        %v1795 = vpop.f32.mrb[0].mxu0
        %v1796 = vadd.f32 %v1619, %v1795
        %v1797 = vpop.f32.mrb[0].mxu0
        %v1798 = vpop.f32.mrb[0].mxu0
        %v1799 = vadd.f32 %v1622, %v1798
        %v1800 = vpop.f32.mrb[0].mxu0
        %1801 = vmatprep.mubr.bf16.mxu0 0
        %1802 = vmatmul.mubr.bf16.gmra.mrb[0].mxu0 %v1314
        %v1803 = vpop.f32.mrb[0].mxu0
        %v1804 = vadd.f32 %v1627, %v1803
        %v1805 = vpop.f32.mrb[0].mxu0
        %v1806 = vpop.f32.mrb[0].mxu0
        %v1807 = vadd.f32 %v1630, %v1806
        %v1808 = vpop.f32.mrb[0].mxu0
        %1809 = vmatprep.mubr.bf16.mxu0 0
        %1810 = vmatmul.mubr.bf16.gmra.mrb[0].mxu0 %v1318
        %v1811 = vpop.f32.mrb[0].mxu0
        %v1812 = vadd.f32 %v1635, %v1811
        %v1813 = vpop.f32.mrb[0].mxu0
        %v1814 = vpop.f32.mrb[0].mxu0
        %v1815 = vadd.f32 %v1638, %v1814
        %v1816 = vpop.f32.mrb[0].mxu0
        %1817 = vmatprep.mubr.bf16.mxu0 0
        %1818 = vmatmul.mubr.bf16.gmra.mrb[0].mxu0 %v1322
        %v1819 = vpop.f32.mrb[0].mxu0
        %v1820 = vadd.f32 %v1643, %v1819
        %v1821 = vpop.f32.mrb[0].mxu0
        %v1822 = vpop.f32.mrb[0].mxu0
        %v1823 = vadd.f32 %v1646, %v1822
        %v1824 = vpop.f32.mrb[0].mxu0
        %1825 = vmatprep.mubr.bf16.mxu0 0
        %1826 = vmatmul.mubr.bf16.gmra.mrb[0].mxu0 %v1326
        %v1827 = vpop.f32.mrb[0].mxu0
        %v1828 = vadd.f32 %v1651, %v1827
        %v1829 = vpop.f32.mrb[0].mxu0
        %v1830 = vpop.f32.mrb[0].mxu0
        %v1831 = vadd.f32 %v1654, %v1830
        %v1832 = vpop.f32.mrb[0].mxu0
        %1833 = vmatprep.mubr.bf16.mxu0 0
        %1834 = vmatmul.mubr.bf16.gmra.mrb[0].mxu0 %v1330
        %v1835 = vpop.f32.mrb[0].mxu0
        %v1836 = vadd.f32 %v1659, %v1835
        %v1837 = vpop.f32.mrb[0].mxu0
        %v1838 = vpop.f32.mrb[0].mxu0
        %v1839 = vadd.f32 %v1662, %v1838
        %v1840 = vpop.f32.mrb[0].mxu0
        %1841 = vmatprep.mubr.bf16.mxu0 0
        %1842 = vmatmul.mubr.bf16.gmra.mrb[0].mxu0 %v1334
        %v1843 = vpop.f32.mrb[0].mxu0
        %v1844 = vadd.f32 %v1667, %v1843
        %v1845 = vpop.f32.mrb[0].mxu0
        %v1846 = vpop.f32.mrb[0].mxu0
        %v1847 = vadd.f32 %v1670, %v1846
        %v1848 = vpop.f32.mrb[0].mxu0
        %1849 = vmatprep.mubr.bf16.mxu0 0
        %1850 = vmatmul.mubr.bf16.gmra.mrb[0].mxu0 %v1338
        %v1851 = vpop.f32.mrb[0].mxu0
        %v1852 = vadd.f32 %v1675, %v1851
        %v1853 = vpop.f32.mrb[0].mxu0
        %v1854 = vpop.f32.mrb[0].mxu0
        %v1855 = vadd.f32 %v1678, %v1854
        %v1856 = vpop.f32.mrb[0].mxu0
        %1857 = vmatprep.mubr.bf16.mxu0 0
        %1858 = vmatmul.mubr.bf16.gmra.mrb[0].mxu0 %v1342
        %v1859 = vpop.f32.mrb[0].mxu0
        %v1860 = vadd.f32 %v1683, %v1859
        %v1861 = vpop.f32.mrb[0].mxu0
        %v1862 = vpop.f32.mrb[0].mxu0
        %v1863 = vadd.f32 %v1686, %v1862
        %v1864 = vpop.f32.mrb[0].mxu0
        %1865 = vmatprep.mubr.bf16.mxu0 0
        %1866 = vmatmul.mubr.bf16.gmra.mrb[0].mxu0 %v1346
        %v1867 = vpop.f32.mrb[0].mxu0
        %v1868 = vadd.f32 %v1691, %v1867
        %v1869 = vpop.f32.mrb[0].mxu0
        %v1870 = vpop.f32.mrb[0].mxu0
        %v1871 = vadd.f32 %v1694, %v1870
        %v1872 = vpop.f32.mrb[0].mxu0
        %1873 = vmatprep.mubr.bf16.mxu0 0
        %1874 = vmatmul.mubr.bf16.gmra.mrb[0].mxu0 %v1350
        %v1875 = vpop.f32.mrb[0].mxu0
        %v1876 = vadd.f32 %v1699, %v1875
        %v1877 = vpop.f32.mrb[0].mxu0
        %v1878 = vpop.f32.mrb[0].mxu0
        %v1879 = vadd.f32 %v1702, %v1878
        %v1880 = vpop.f32.mrb[0].mxu0
        %1881 = vmatprep.mubr.bf16.mxu0 0
        %1882 = vmatmul.mubr.bf16.gmra.mrb[0].mxu0 %v1354
        %v1883 = vpop.f32.mrb[0].mxu0
        %v1884 = vadd.f32 %v1707, %v1883
        %v1885 = vpop.f32.mrb[0].mxu0
        %v1886 = vpop.f32.mrb[0].mxu0
        %v1887 = vadd.f32 %v1710, %v1886
        %v1888 = vpop.f32.mrb[0].mxu0
        %1889 = vdwg.mxu0
        %v1938 = vunpack.c.l.b16 %v1170
        %v1939 = vunpack.c.l.b16 %v1171
        %v1940 = vunpack.c.l.b16 %v1172
        %v1941 = vunpack.c.l.b16 %v1173
        %v1942 = vunpack.c.l.b16 %v1174
        %v1943 = vunpack.c.l.b16 %v1175
        %v1944 = vunpack.c.l.b16 %v1176
        %v1945 = vunpack.c.l.b16 %v1177
        %v1946 = vunpack.c.l.b16 %v1178
        %v1947 = vunpack.c.l.b16 %v1179
        %v1948 = vunpack.c.l.b16 %v1180
        %v1949 = vunpack.c.l.b16 %v1181
        %v1950 = vunpack.c.l.b16 %v1182
        %v1951 = vunpack.c.l.b16 %v1183
        %v1952 = vunpack.c.l.b16 %v1184
        %v1953 = vunpack.c.l.b16 %v1185
        %v1954 = vunpack.c.l.b16 %v1186
        %v1955 = vunpack.c.l.b16 %v1187
        %v1956 = vunpack.c.l.b16 %v1188
        %v1957 = vunpack.c.l.b16 %v1189
        %v1958 = vunpack.c.l.b16 %v1190
        %v1959 = vunpack.c.l.b16 %v1191
        %v1960 = vunpack.c.l.b16 %v1192
        %v1961 = vunpack.c.l.b16 %v1193
        %v1962 = vunpack.c.l.b16 %v1194
        %v1963 = vunpack.c.l.b16 %v1195
        %v1964 = vunpack.c.l.b16 %v1196
        %v1965 = vunpack.c.l.b16 %v1197
        %v1966 = vunpack.c.l.b16 %v1198
        %v1967 = vunpack.c.l.b16 %v1199
        %v1968 = vunpack.c.l.b16 %v1200
        %v1969 = vunpack.c.l.b16 %v1201
        %v1970 = vunpack.c.l.b16 %v1202
        %v1971 = vunpack.c.l.b16 %v1203
        %v1972 = vunpack.c.l.b16 %v1204
        %v1973 = vunpack.c.l.b16 %v1205
        %v1974 = vunpack.c.l.b16 %v1206
        %v1975 = vunpack.c.l.b16 %v1207
        %v1976 = vunpack.c.l.b16 %v1208
        %v1977 = vunpack.c.l.b16 %v1209
        %v1978 = vunpack.c.l.b16 %v1210
        %v1979 = vunpack.c.l.b16 %v1211
        %v1980 = vunpack.c.l.b16 %v1212
        %v1981 = vunpack.c.l.b16 %v1213
        %v1982 = vunpack.c.l.b16 %v1214
        %v1983 = vunpack.c.l.b16 %v1215
        %v1984 = vunpack.c.l.b16 %v1216
        %v1985 = vunpack.c.l.b16 %v1217
        %v1986 = vpack.c.b16 %v1939, %v1938
        %v1987 = vpack.c.b16 %v1941, %v1940
        %v1988 = vpack.c.b16 %v1943, %v1942
        %v1989 = vpack.c.b16 %v1945, %v1944
        %v1990 = vpack.c.b16 %v1947, %v1946
        %v1991 = vpack.c.b16 %v1949, %v1948
        %v1992 = vpack.c.b16 %v1951, %v1950
        %v1993 = vpack.c.b16 %v1953, %v1952
        %v1994 = vpack.c.b16 %v1955, %v1954
        %v1995 = vpack.c.b16 %v1957, %v1956
        %v1996 = vpack.c.b16 %v1959, %v1958
        %v1997 = vpack.c.b16 %v1961, %v1960
        %v1998 = vpack.c.b16 %v1963, %v1962
        %v1999 = vpack.c.b16 %v1965, %v1964
        %v2000 = vpack.c.b16 %v1967, %v1966
        %v2001 = vpack.c.b16 %v1969, %v1968
        %v2002 = vpack.c.b16 %v1971, %v1970
        %v2003 = vpack.c.b16 %v1973, %v1972
        %v2004 = vpack.c.b16 %v1975, %v1974
        %v2005 = vpack.c.b16 %v1977, %v1976
        %v2006 = vpack.c.b16 %v1979, %v1978
        %v2007 = vpack.c.b16 %v1981, %v1980
        %v2008 = vpack.c.b16 %v1983, %v1982
        %v2009 = vpack.c.b16 %v1985, %v1984
        %2034 = vmatprep.subr.bf16.mxu0 0
        %2035 = vmatpush1.bf16.msra.mxu0 %v1986
        %2036 = vmatprep.subr.bf16.mxu0 0
        %2037 = vmatpush1.bf16.msra.mxu0 %v1987
        %2038 = vmatprep.subr.bf16.mxu0 0
        %2039 = vmatpush1.bf16.msra.mxu0 %v1988
        %2040 = vmatprep.subr.bf16.mxu0 0
        %2041 = vmatpush1.bf16.msra.mxu0 %v1989
        %2042 = vmatprep.subr.bf16.mxu0 0
        %2043 = vmatpush1.bf16.msra.mxu0 %v1990
        %2044 = vmatprep.subr.bf16.mxu0 0
        %2045 = vmatpush1.bf16.msra.mxu0 %v1991
        %2046 = vmatprep.subr.bf16.mxu0 0
        %2047 = vmatpush1.bf16.msra.mxu0 %v1992
        %2048 = vmatprep.subr.bf16.mxu0 0
        %2049 = vmatpush1.bf16.msra.mxu0 %v1993
        %2050 = vmatprep.subr.bf16.mxu0 0
        %2051 = vmatpush1.bf16.msra.mxu0 %v1994
        %2052 = vmatprep.subr.bf16.mxu0 0
        %2053 = vmatpush1.bf16.msra.mxu0 %v1995
        %2054 = vmatprep.subr.bf16.mxu0 0
        %2055 = vmatpush1.bf16.msra.mxu0 %v1996
        %2056 = vmatprep.subr.bf16.mxu0 0
        %2057 = vmatpush1.bf16.msra.mxu0 %v1997
        %2058 = vmatprep.subr.bf16.mxu0 0
        %2059 = vmatpush1.bf16.msra.mxu0 %v1998
        %2060 = vmatprep.subr.bf16.mxu0 0
        %2061 = vmatpush1.bf16.msra.mxu0 %v1999
        %2062 = vmatprep.subr.bf16.mxu0 0
        %2063 = vmatpush1.bf16.msra.mxu0 %v2000
        %2064 = vmatprep.subr.bf16.mxu0 0
        %2065 = vmatpush1.bf16.msra.mxu0 %v2001
        %2066 = vmatprep.mubr.bf16.mxu0 %v940
        %2067 = vmatmul.mubr.bf16.gmra.mrb[0].mxu0 %v907
        %v2068 = vpop.f32.mrb[0].mxu0
        %v2069 = vadd.f32 %v1748, %v2068
        %v2070 = vpop.f32.mrb[0].mxu0
        %v2071 = vpop.f32.mrb[0].mxu0
        %v2072 = vadd.f32 %v1751, %v2071
        %v2073 = vpop.f32.mrb[0].mxu0
        %2074 = vmatprep.mubr.bf16.mxu0 %v948
        %2075 = vmatmul.mubr.bf16.gmra.mrb[0].mxu0 %v908
        %v2076 = vpop.f32.mrb[0].mxu0
        %v2077 = vadd.f32 %v1756, %v2076
        %v2078 = vpop.f32.mrb[0].mxu0
        %v2079 = vpop.f32.mrb[0].mxu0
        %v2080 = vadd.f32 %v1759, %v2079
        %v2081 = vpop.f32.mrb[0].mxu0
        %2082 = vmatprep.mubr.bf16.mxu0 %v956
        %2083 = vmatmul.mubr.bf16.gmra.mrb[0].mxu0 %v909
        %v2084 = vpop.f32.mrb[0].mxu0
        %v2085 = vadd.f32 %v1764, %v2084
        %v2086 = vpop.f32.mrb[0].mxu0
        %v2087 = vpop.f32.mrb[0].mxu0
        %v2088 = vadd.f32 %v1767, %v2087
        %v2089 = vpop.f32.mrb[0].mxu0
        %2090 = vmatprep.mubr.bf16.mxu0 %v964
        %2091 = vmatmul.mubr.bf16.gmra.mrb[0].mxu0 %v910
        %v2092 = vpop.f32.mrb[0].mxu0
        %v2093 = vadd.f32 %v1772, %v2092
        %v2094 = vpop.f32.mrb[0].mxu0
        %v2095 = vpop.f32.mrb[0].mxu0
        %v2096 = vadd.f32 %v1775, %v2095
        %v2097 = vpop.f32.mrb[0].mxu0
        %2098 = vmatprep.mubr.bf16.mxu0 %v972
        %2099 = vmatmul.mubr.bf16.gmra.mrb[0].mxu0 %v911
        %v2100 = vpop.f32.mrb[0].mxu0
        %v2101 = vadd.f32 %v1780, %v2100
        %v2102 = vpop.f32.mrb[0].mxu0
        %v2103 = vpop.f32.mrb[0].mxu0
        %v2104 = vadd.f32 %v1783, %v2103
        %v2105 = vpop.f32.mrb[0].mxu0
        %2106 = vmatprep.mubr.bf16.mxu0 %v980
        %2107 = vmatmul.mubr.bf16.gmra.mrb[0].mxu0 %v912
        %v2108 = vpop.f32.mrb[0].mxu0
        %v2109 = vadd.f32 %v1788, %v2108
        %v2110 = vpop.f32.mrb[0].mxu0
        %v2111 = vpop.f32.mrb[0].mxu0
        %v2112 = vadd.f32 %v1791, %v2111
        %v2113 = vpop.f32.mrb[0].mxu0
        %2114 = vmatprep.mubr.bf16.mxu0 %v988
        %2115 = vmatmul.mubr.bf16.gmra.mrb[0].mxu0 %v913
        %v2116 = vpop.f32.mrb[0].mxu0
        %v2117 = vadd.f32 %v1796, %v2116
        %v2118 = vpop.f32.mrb[0].mxu0
        %v2119 = vpop.f32.mrb[0].mxu0
        %v2120 = vadd.f32 %v1799, %v2119
        %v2121 = vpop.f32.mrb[0].mxu0
        %2122 = vmatprep.mubr.bf16.mxu0 %v996
        %2123 = vmatmul.mubr.bf16.gmra.mrb[0].mxu0 %v914
        %v2124 = vpop.f32.mrb[0].mxu0
        %v2125 = vadd.f32 %v1804, %v2124
        %v2126 = vpop.f32.mrb[0].mxu0
        %v2127 = vpop.f32.mrb[0].mxu0
        %v2128 = vadd.f32 %v1807, %v2127
        %v2129 = vpop.f32.mrb[0].mxu0
        %2130 = vmatprep.mubr.bf16.mxu0 %v1004
        %2131 = vmatmul.mubr.bf16.gmra.mrb[0].mxu0 %v915
        %v2132 = vpop.f32.mrb[0].mxu0
        %v2133 = vadd.f32 %v1812, %v2132
        %v2134 = vpop.f32.mrb[0].mxu0
        %v2135 = vpop.f32.mrb[0].mxu0
        %v2136 = vadd.f32 %v1815, %v2135
        %v2137 = vpop.f32.mrb[0].mxu0
        %2138 = vmatprep.mubr.bf16.mxu0 %v1012
        %2139 = vmatmul.mubr.bf16.gmra.mrb[0].mxu0 %v916
        %v2140 = vpop.f32.mrb[0].mxu0
        %v2141 = vadd.f32 %v1820, %v2140
        %v2142 = vpop.f32.mrb[0].mxu0
        %v2143 = vpop.f32.mrb[0].mxu0
        %v2144 = vadd.f32 %v1823, %v2143
        %v2145 = vpop.f32.mrb[0].mxu0
        %2146 = vmatprep.mubr.bf16.mxu0 %v1020
        %2147 = vmatmul.mubr.bf16.gmra.mrb[0].mxu0 %v917
        %v2148 = vpop.f32.mrb[0].mxu0
        %v2149 = vadd.f32 %v1828, %v2148
        %v2150 = vpop.f32.mrb[0].mxu0
        %v2151 = vpop.f32.mrb[0].mxu0
        %v2152 = vadd.f32 %v1831, %v2151
        %v2153 = vpop.f32.mrb[0].mxu0
        %2154 = vmatprep.mubr.bf16.mxu0 %v1028
        %2155 = vmatmul.mubr.bf16.gmra.mrb[0].mxu0 %v918
        %v2156 = vpop.f32.mrb[0].mxu0
        %v2157 = vadd.f32 %v1836, %v2156
        %v2158 = vpop.f32.mrb[0].mxu0
        %v2159 = vpop.f32.mrb[0].mxu0
        %v2160 = vadd.f32 %v1839, %v2159
        %v2161 = vpop.f32.mrb[0].mxu0
        %2162 = vmatprep.mubr.bf16.mxu0 %v1036
        %2163 = vmatmul.mubr.bf16.gmra.mrb[0].mxu0 %v919
        %v2164 = vpop.f32.mrb[0].mxu0
        %v2165 = vadd.f32 %v1844, %v2164
        %v2166 = vpop.f32.mrb[0].mxu0
        %v2167 = vpop.f32.mrb[0].mxu0
        %v2168 = vadd.f32 %v1847, %v2167
        %v2169 = vpop.f32.mrb[0].mxu0
        %2170 = vmatprep.mubr.bf16.mxu0 %v1044
        %2171 = vmatmul.mubr.bf16.gmra.mrb[0].mxu0 %v920
        %v2172 = vpop.f32.mrb[0].mxu0
        %v2173 = vadd.f32 %v1852, %v2172
        %v2174 = vpop.f32.mrb[0].mxu0
        %v2175 = vpop.f32.mrb[0].mxu0
        %v2176 = vadd.f32 %v1855, %v2175
        %v2177 = vpop.f32.mrb[0].mxu0
        %2178 = vmatprep.mubr.bf16.mxu0 %v1052
        %2179 = vmatmul.mubr.bf16.gmra.mrb[0].mxu0 %v921
        %v2180 = vpop.f32.mrb[0].mxu0
        %v2181 = vadd.f32 %v1860, %v2180
        %v2182 = vpop.f32.mrb[0].mxu0
        %v2183 = vpop.f32.mrb[0].mxu0
        %v2184 = vadd.f32 %v1863, %v2183
        %v2185 = vpop.f32.mrb[0].mxu0
        %2186 = vmatprep.mubr.bf16.mxu0 %v1060
        %2187 = vmatmul.mubr.bf16.gmra.mrb[0].mxu0 %v922
        %v2188 = vpop.f32.mrb[0].mxu0
        %v2189 = vadd.f32 %v1868, %v2188
        %v2190 = vpop.f32.mrb[0].mxu0
        %v2191 = vpop.f32.mrb[0].mxu0
        %v2192 = vadd.f32 %v1871, %v2191
        %v2193 = vpop.f32.mrb[0].mxu0
        %2194 = vmatprep.mubr.bf16.mxu0 %v1068
        %2195 = vmatmul.mubr.bf16.gmra.mrb[0].mxu0 %v923
        %v2196 = vpop.f32.mrb[0].mxu0
        %v2197 = vadd.f32 %v1876, %v2196
        %v2198 = vpop.f32.mrb[0].mxu0
        %v2199 = vpop.f32.mrb[0].mxu0
        %v2200 = vadd.f32 %v1879, %v2199
        %v2201 = vpop.f32.mrb[0].mxu0
        %2202 = vmatprep.mubr.bf16.mxu0 %v1076
        %2203 = vmatmul.mubr.bf16.gmra.mrb[0].mxu0 %v924
        %v2204 = vpop.f32.mrb[0].mxu0
        %v2205 = vadd.f32 %v1884, %v2204
        %v2206 = vpop.f32.mrb[0].mxu0
        %v2207 = vpop.f32.mrb[0].mxu0
        %v2208 = vadd.f32 %v1887, %v2207
        %v2209 = vpop.f32.mrb[0].mxu0
        %2210 = vdwg.mxu0
        %2211 = vmatprep.subr.bf16.mxu0 0
        %2212 = vmatpush1.bf16.msra.mxu0 %v2002
        %2213 = vmatprep.subr.bf16.mxu0 0
        %2214 = vmatpush1.bf16.msra.mxu0 %v2003
        %2215 = vmatprep.subr.bf16.mxu0 0
        %2216 = vmatpush1.bf16.msra.mxu0 %v2004
        %2217 = vmatprep.subr.bf16.mxu0 0
        %2218 = vmatpush1.bf16.msra.mxu0 %v2005
        %2219 = vmatprep.subr.bf16.mxu0 0
        %2220 = vmatpush1.bf16.msra.mxu0 %v2006
        %2221 = vmatprep.subr.bf16.mxu0 0
        %2222 = vmatpush1.bf16.msra.mxu0 %v2007
        %2223 = vmatprep.subr.bf16.mxu0 0
        %2224 = vmatpush1.bf16.msra.mxu0 %v2008
        %2225 = vmatprep.subr.bf16.mxu0 0
        %2226 = vmatpush1.bf16.msra.mxu0 %v2009
        %2227 = vmatprep.subr.bf16.mxu0 0
        %2228 = vmatpush1.bf16.msra.mxu0 0
        %2229 = vmatprep.subr.bf16.mxu0 0
        %2230 = vmatpush1.bf16.msra.mxu0 0
        %2231 = vmatprep.subr.bf16.mxu0 0
        %2232 = vmatpush1.bf16.msra.mxu0 0
        %2233 = vmatprep.subr.bf16.mxu0 0
        %2234 = vmatpush1.bf16.msra.mxu0 0
        %2235 = vmatprep.subr.bf16.mxu0 0
        %2236 = vmatpush1.bf16.msra.mxu0 0
        %2237 = vmatprep.subr.bf16.mxu0 0
        %2238 = vmatpush1.bf16.msra.mxu0 0
        %2239 = vmatprep.subr.bf16.mxu0 0
        %2240 = vmatpush1.bf16.msra.mxu0 0
        %2241 = vmatprep.subr.bf16.mxu0 0
        %2242 = vmatpush1.bf16.msra.mxu0 0
        %2243 = vmatprep.mubr.bf16.mxu0 0
        %2244 = vmatmul.mubr.bf16.gmra.mrb[0].mxu0 %v1117
        %v2245 = vpop.f32.mrb[0].mxu0
        %v2246 = vadd.f32 %v2069, %v2245
        %v2247 = vpop.f32.mrb[0].mxu0
        %v2248 = vpop.f32.mrb[0].mxu0
        %v2249 = vadd.f32 %v2072, %v2248
        %v2250 = vpop.f32.mrb[0].mxu0
        %2251 = vmatprep.mubr.bf16.mxu0 0
        %2252 = vmatmul.mubr.bf16.gmra.mrb[0].mxu0 %v1119
        %v2253 = vpop.f32.mrb[0].mxu0
        %v2254 = vadd.f32 %v2077, %v2253
        %v2255 = vpop.f32.mrb[0].mxu0
        %v2256 = vpop.f32.mrb[0].mxu0
        %v2257 = vadd.f32 %v2080, %v2256
        %v2258 = vpop.f32.mrb[0].mxu0
        %2259 = vmatprep.mubr.bf16.mxu0 0
        %2260 = vmatmul.mubr.bf16.gmra.mrb[0].mxu0 %v1121
        %v2261 = vpop.f32.mrb[0].mxu0
        %v2262 = vadd.f32 %v2085, %v2261
        %v2263 = vpop.f32.mrb[0].mxu0
        %v2264 = vpop.f32.mrb[0].mxu0
        %v2265 = vadd.f32 %v2088, %v2264
        %v2266 = vpop.f32.mrb[0].mxu0
        %2267 = vmatprep.mubr.bf16.mxu0 0
        %2268 = vmatmul.mubr.bf16.gmra.mrb[0].mxu0 %v1123
        %v2269 = vpop.f32.mrb[0].mxu0
        %v2270 = vadd.f32 %v2093, %v2269
        %v2271 = vpop.f32.mrb[0].mxu0
        %v2272 = vpop.f32.mrb[0].mxu0
        %v2273 = vadd.f32 %v2096, %v2272
        %v2274 = vpop.f32.mrb[0].mxu0
        %2275 = vmatprep.mubr.bf16.mxu0 0
        %2276 = vmatmul.mubr.bf16.gmra.mrb[0].mxu0 %v1125
        %v2277 = vpop.f32.mrb[0].mxu0
        %v2278 = vadd.f32 %v2101, %v2277
        %v2279 = vpop.f32.mrb[0].mxu0
        %v2280 = vpop.f32.mrb[0].mxu0
        %v2281 = vadd.f32 %v2104, %v2280
        %v2282 = vpop.f32.mrb[0].mxu0
        %2283 = vmatprep.mubr.bf16.mxu0 0
        %2284 = vmatmul.mubr.bf16.gmra.mrb[0].mxu0 %v1127
        %v2285 = vpop.f32.mrb[0].mxu0
        %v2286 = vadd.f32 %v2109, %v2285
        %v2287 = vpop.f32.mrb[0].mxu0
        %v2288 = vpop.f32.mrb[0].mxu0
        %v2289 = vadd.f32 %v2112, %v2288
        %v2290 = vpop.f32.mrb[0].mxu0
        %2291 = vmatprep.mubr.bf16.mxu0 0
        %2292 = vmatmul.mubr.bf16.gmra.mrb[0].mxu0 %v1129
        %v2293 = vpop.f32.mrb[0].mxu0
        %v2294 = vadd.f32 %v2117, %v2293
        %v2295 = vpop.f32.mrb[0].mxu0
        %v2296 = vpop.f32.mrb[0].mxu0
        %v2297 = vadd.f32 %v2120, %v2296
        %v2298 = vpop.f32.mrb[0].mxu0
        %2299 = vmatprep.mubr.bf16.mxu0 0
        %2300 = vmatmul.mubr.bf16.gmra.mrb[0].mxu0 %v1131
        %v2301 = vpop.f32.mrb[0].mxu0
        %v2302 = vadd.f32 %v2125, %v2301
        %v2303 = vpop.f32.mrb[0].mxu0
        %v2304 = vpop.f32.mrb[0].mxu0
        %v2305 = vadd.f32 %v2128, %v2304
        %v2306 = vpop.f32.mrb[0].mxu0
        %2307 = vmatprep.mubr.bf16.mxu0 0
        %2308 = vmatmul.mubr.bf16.gmra.mrb[0].mxu0 %v1133
        %v2309 = vpop.f32.mrb[0].mxu0
        %v2310 = vadd.f32 %v2133, %v2309
        %v2311 = vpop.f32.mrb[0].mxu0
        %v2312 = vpop.f32.mrb[0].mxu0
        %v2313 = vadd.f32 %v2136, %v2312
        %v2314 = vpop.f32.mrb[0].mxu0
        %2315 = vmatprep.mubr.bf16.mxu0 0
        %2316 = vmatmul.mubr.bf16.gmra.mrb[0].mxu0 %v1135
        %v2317 = vpop.f32.mrb[0].mxu0
        %v2318 = vadd.f32 %v2141, %v2317
        %v2319 = vpop.f32.mrb[0].mxu0
        %v2320 = vpop.f32.mrb[0].mxu0
        %v2321 = vadd.f32 %v2144, %v2320
        %v2322 = vpop.f32.mrb[0].mxu0
        %2323 = vmatprep.mubr.bf16.mxu0 0
        %2324 = vmatmul.mubr.bf16.gmra.mrb[0].mxu0 %v1137
        %v2325 = vpop.f32.mrb[0].mxu0
        %v2326 = vadd.f32 %v2149, %v2325
        %v2327 = vpop.f32.mrb[0].mxu0
        %v2328 = vpop.f32.mrb[0].mxu0
        %v2329 = vadd.f32 %v2152, %v2328
        %v2330 = vpop.f32.mrb[0].mxu0
        %2331 = vmatprep.mubr.bf16.mxu0 0
        %2332 = vmatmul.mubr.bf16.gmra.mrb[0].mxu0 %v1139
        %v2333 = vpop.f32.mrb[0].mxu0
        %v2334 = vadd.f32 %v2157, %v2333
        %v2335 = vpop.f32.mrb[0].mxu0
        %v2336 = vpop.f32.mrb[0].mxu0
        %v2337 = vadd.f32 %v2160, %v2336
        %v2338 = vpop.f32.mrb[0].mxu0
        %2339 = vmatprep.mubr.bf16.mxu0 0
        %2340 = vmatmul.mubr.bf16.gmra.mrb[0].mxu0 %v1141
        %v2341 = vpop.f32.mrb[0].mxu0
        %v2342 = vadd.f32 %v2165, %v2341
        %v2343 = vpop.f32.mrb[0].mxu0
        %v2344 = vpop.f32.mrb[0].mxu0
        %v2345 = vadd.f32 %v2168, %v2344
        %v2346 = vpop.f32.mrb[0].mxu0
        %2347 = vmatprep.mubr.bf16.mxu0 0
        %2348 = vmatmul.mubr.bf16.gmra.mrb[0].mxu0 %v1143
        %v2349 = vpop.f32.mrb[0].mxu0
        %v2350 = vadd.f32 %v2173, %v2349
        %v2351 = vpop.f32.mrb[0].mxu0
        %v2352 = vpop.f32.mrb[0].mxu0
        %v2353 = vadd.f32 %v2176, %v2352
        %v2354 = vpop.f32.mrb[0].mxu0
        %2355 = vmatprep.mubr.bf16.mxu0 0
        %2356 = vmatmul.mubr.bf16.gmra.mrb[0].mxu0 %v1145
        %v2357 = vpop.f32.mrb[0].mxu0
        %v2358 = vadd.f32 %v2181, %v2357
        %v2359 = vpop.f32.mrb[0].mxu0
        %v2360 = vpop.f32.mrb[0].mxu0
        %v2361 = vadd.f32 %v2184, %v2360
        %v2362 = vpop.f32.mrb[0].mxu0
        %2363 = vmatprep.mubr.bf16.mxu0 0
        %2364 = vmatmul.mubr.bf16.gmra.mrb[0].mxu0 %v1147
        %v2365 = vpop.f32.mrb[0].mxu0
        %v2366 = vadd.f32 %v2189, %v2365
        %v2367 = vpop.f32.mrb[0].mxu0
        %v2368 = vpop.f32.mrb[0].mxu0
        %v2369 = vadd.f32 %v2192, %v2368
        %v2370 = vpop.f32.mrb[0].mxu0
        %2371 = vmatprep.mubr.bf16.mxu0 0
        %2372 = vmatmul.mubr.bf16.gmra.mrb[0].mxu0 %v1149
        %v2373 = vpop.f32.mrb[0].mxu0
        %v2374 = vadd.f32 %v2197, %v2373
        %v2375 = vpop.f32.mrb[0].mxu0
        %v2376 = vpop.f32.mrb[0].mxu0
        %v2377 = vadd.f32 %v2200, %v2376
        %v2378 = vpop.f32.mrb[0].mxu0
        %2379 = vmatprep.mubr.bf16.mxu0 0
        %2380 = vmatmul.mubr.bf16.gmra.mrb[0].mxu0 %v1151
        %v2381 = vpop.f32.mrb[0].mxu0
        %v2382 = vadd.f32 %v2205, %v2381
        %v2383 = vpop.f32.mrb[0].mxu0
        %v2384 = vpop.f32.mrb[0].mxu0
        %v2385 = vadd.f32 %v2208, %v2384
        %v2386 = vpop.f32.mrb[0].mxu0
        %2387 = vdwg.mxu0
        %v2389 = vshll.u32 %v927, 16
        %v2391 = vrot.slane %v2389, 1
        %v2392 = vsel %vm928, %v1228, %v2391
        %v2393 = vshrl.u32 %v927, 16
        %v2395 = vor.u32 %v2393, %v2391
        %v2397 = vrot.slane %v927, 1
        %v2398 = vsel %vm1114, %v1230, %v2397
        %s2399 = scalar_lea.vmem [#allocation7], 384
        %v2400 = vld [vmem:[%s2399] sm:$0xf]
        %v2401 = vld [vmem:[%s2399 + $0x4] sm:$0xf]
        %v2402 = vld [vmem:[%s2399 + $0x8] sm:$0xf]
        %v2403 = vld [vmem:[%s2399 + $0xc] sm:$0xf]
        %v2404 = vld [vmem:[%s2399 + $0x10] sm:$0xf]
        %v2405 = vld [vmem:[%s2399 + $0x14] sm:$0xf]
        %v2406 = vld [vmem:[%s2399 + $0x18] sm:$0xf]
        %v2407 = vld [vmem:[%s2399 + $0x1c] sm:$0xf]
        %v2408 = vld [vmem:[%s2399 + $0x20] sm:$0xf]
        %v2409 = vld [vmem:[%s2399 + $0x24] sm:$0xf]
        %v2410 = vld [vmem:[%s2399 + $0x28] sm:$0xf]
        %v2411 = vld [vmem:[%s2399 + $0x2c] sm:$0xf]
        %v2412 = vld [vmem:[%s2399 + $0x30] sm:$0xf]
        %v2413 = vld [vmem:[%s2399 + $0x34] sm:$0xf]
        %v2414 = vld [vmem:[%s2399 + $0x38] sm:$0xf]
        %v2415 = vld [vmem:[%s2399 + $0x3c] sm:$0xf]
        %v2416 = vld [vmem:[%s2399 + $0x40] sm:$0xf]
        %v2417 = vld [vmem:[%s2399 + $0x44] sm:$0xf]
        %v2418 = vld [vmem:[%s2399 + $0x48] sm:$0xf]
        %v2419 = vld [vmem:[%s2399 + $0x4c] sm:$0xf]
        %v2420 = vld [vmem:[%s2399 + $0x50] sm:$0xf]
        %v2421 = vld [vmem:[%s2399 + $0x54] sm:$0xf]
        %v2422 = vld [vmem:[%s2399 + $0x58] sm:$0xf]
        %v2423 = vld [vmem:[%s2399 + $0x5c] sm:$0xf]
        %v2424 = vld [vmem:[%s2399 + $0x60] sm:$0xf]
        %v2425 = vld [vmem:[%s2399 + $0x64] sm:$0xf]
        %v2426 = vld [vmem:[%s2399 + $0x68] sm:$0xf]
        %v2427 = vld [vmem:[%s2399 + $0x6c] sm:$0xf]
        %v2428 = vld [vmem:[%s2399 + $0x70] sm:$0xf]
        %v2429 = vld [vmem:[%s2399 + $0x74] sm:$0xf]
        %v2430 = vld [vmem:[%s2399 + $0x78] sm:$0xf]
        %v2431 = vld [vmem:[%s2399 + $0x7c] sm:$0xf]
        %v2432 = vld [vmem:[%s2399 + $0x80] sm:$0xf]
        %v2433 = vld [vmem:[%s2399 + $0x84] sm:$0xf]
        %v2434 = vld [vmem:[%s2399 + $0x88] sm:$0xf]
        %v2435 = vld [vmem:[%s2399 + $0x8c] sm:$0xf]
        %v2436 = vld [vmem:[%s2399 + $0x90] sm:$0xf]
        %v2437 = vld [vmem:[%s2399 + $0x94] sm:$0xf]
        %v2438 = vld [vmem:[%s2399 + $0x98] sm:$0xf]
        %v2439 = vld [vmem:[%s2399 + $0x9c] sm:$0xf]
        %v2440 = vld [vmem:[%s2399 + $0xa0] sm:$0xf]
        %v2441 = vld [vmem:[%s2399 + $0xa4] sm:$0xf]
        %v2442 = vld [vmem:[%s2399 + $0xa8] sm:$0xf]
        %v2443 = vld [vmem:[%s2399 + $0xac] sm:$0xf]
        %v2444 = vld [vmem:[%s2399 + $0xb0] sm:$0xf]
        %v2445 = vld [vmem:[%s2399 + $0xb4] sm:$0xf]
        %v2446 = vld [vmem:[%s2399 + $0xb8] sm:$0xf]
        %v2447 = vld [vmem:[%s2399 + $0xbc] sm:$0xf]
        %vm2448 = vcmask 1045504
        %v2449 = vrot.slane %v909, 2
        %v2450 = vrot.slane %v910, 2
        %v2451 = vsel %vm2448, %v2449, %v2450
        %v2452 = vrot.slane %v956, 2
        %v2453 = vrot.slane %v964, 2
        %v2454 = vsel %vm2448, %v2452, %v2453
        %v2455 = vrot.slane %v1121, 2
        %v2456 = vrot.slane %v1123, 2
        %v2457 = vsel %vm2448, %v2455, %v2456
        %v2458 = vrot.slane %v911, 2
        %v2459 = vsel %vm2448, %v2450, %v2458
        %v2460 = vrot.slane %v972, 2
        %v2461 = vsel %vm2448, %v2453, %v2460
        %v2462 = vrot.slane %v1125, 2
        %v2463 = vsel %vm2448, %v2456, %v2462
        %v2464 = vrot.slane %v912, 2
        %v2465 = vsel %vm2448, %v2458, %v2464
        %v2466 = vrot.slane %v980, 2
        %v2467 = vsel %vm2448, %v2460, %v2466
        %v2468 = vrot.slane %v1127, 2
        %v2469 = vsel %vm2448, %v2462, %v2468
        %v2470 = vrot.slane %v913, 2
        %v2471 = vsel %vm2448, %v2464, %v2470
        %v2472 = vrot.slane %v988, 2
        %v2473 = vsel %vm2448, %v2466, %v2472
        %v2474 = vrot.slane %v1129, 2
        %v2475 = vsel %vm2448, %v2468, %v2474
        %v2476 = vrot.slane %v914, 2
        %v2477 = vsel %vm2448, %v2470, %v2476
        %v2478 = vrot.slane %v996, 2
        %v2479 = vsel %vm2448, %v2472, %v2478
        %v2480 = vrot.slane %v1131, 2
        %v2481 = vsel %vm2448, %v2474, %v2480
        %v2482 = vrot.slane %v915, 2
        %v2483 = vsel %vm2448, %v2476, %v2482
        %v2484 = vrot.slane %v1004, 2
        %v2485 = vsel %vm2448, %v2478, %v2484
        %v2486 = vrot.slane %v1133, 2
        %v2487 = vsel %vm2448, %v2480, %v2486
        %v2488 = vrot.slane %v916, 2
        %v2489 = vsel %vm2448, %v2482, %v2488
        %v2490 = vrot.slane %v1012, 2
        %v2491 = vsel %vm2448, %v2484, %v2490
        %v2492 = vrot.slane %v1135, 2
        %v2493 = vsel %vm2448, %v2486, %v2492
        %v2494 = vrot.slane %v917, 2
        %v2495 = vsel %vm2448, %v2488, %v2494
        %v2496 = vrot.slane %v1020, 2
        %v2497 = vsel %vm2448, %v2490, %v2496
        %v2498 = vrot.slane %v1137, 2
        %v2499 = vsel %vm2448, %v2492, %v2498
        %v2500 = vrot.slane %v918, 2
        %v2501 = vsel %vm2448, %v2494, %v2500
        %v2502 = vrot.slane %v1028, 2
        %v2503 = vsel %vm2448, %v2496, %v2502
        %v2504 = vrot.slane %v1139, 2
        %v2505 = vsel %vm2448, %v2498, %v2504
        %v2506 = vrot.slane %v919, 2
        %v2507 = vsel %vm2448, %v2500, %v2506
        %v2508 = vrot.slane %v1036, 2
        %v2509 = vsel %vm2448, %v2502, %v2508
        %v2510 = vrot.slane %v1141, 2
        %v2511 = vsel %vm2448, %v2504, %v2510
        %v2512 = vrot.slane %v920, 2
        %v2513 = vsel %vm2448, %v2506, %v2512
        %v2514 = vrot.slane %v1044, 2
        %v2515 = vsel %vm2448, %v2508, %v2514
        %v2516 = vrot.slane %v1143, 2
        %v2517 = vsel %vm2448, %v2510, %v2516
        %v2518 = vrot.slane %v921, 2
        %v2519 = vsel %vm2448, %v2512, %v2518
        %v2520 = vrot.slane %v1052, 2
        %v2521 = vsel %vm2448, %v2514, %v2520
        %v2522 = vrot.slane %v1145, 2
        %v2523 = vsel %vm2448, %v2516, %v2522
        %v2524 = vrot.slane %v922, 2
        %v2525 = vsel %vm2448, %v2518, %v2524
        %v2526 = vrot.slane %v1060, 2
        %v2527 = vsel %vm2448, %v2520, %v2526
        %v2528 = vrot.slane %v1147, 2
        %v2529 = vsel %vm2448, %v2522, %v2528
        %v2530 = vrot.slane %v923, 2
        %v2531 = vsel %vm2448, %v2524, %v2530
        %v2532 = vrot.slane %v1068, 2
        %v2533 = vsel %vm2448, %v2526, %v2532
        %v2534 = vrot.slane %v1149, 2
        %v2535 = vsel %vm2448, %v2528, %v2534
        %v2536 = vrot.slane %v924, 2
        %v2537 = vsel %vm2448, %v2530, %v2536
        %v2538 = vrot.slane %v1076, 2
        %v2539 = vsel %vm2448, %v2532, %v2538
        %v2540 = vrot.slane %v1151, 2
        %v2541 = vsel %vm2448, %v2534, %v2540
        %v2542 = vrot.slane %v925, 2
        %v2543 = vsel %vm2448, %v2536, %v2542
        %v2544 = vrot.slane %v1225, 2
        %v2545 = vsel %vm2448, %v2538, %v2544
        %v2546 = vrot.slane %v1231, 2
        %v2547 = vsel %vm2448, %v2540, %v2546
        %v2548 = vrot.slane %v926, 2
        %v2549 = vsel %vm2448, %v2542, %v2548
        %v2550 = vrot.slane %v2392, 2
        %v2551 = vsel %vm2448, %v2544, %v2550
        %v2552 = vrot.slane %v2398, 2
        %v2553 = vsel %vm2448, %v2546, %v2552
        %v2554 = vrot.slane %v927, 2
        %v2555 = vsel %vm2448, %v2548, %v2554
        %v2556 = vrot.slane %v2395, 2
        %v2557 = vsel %vm2448, %v2550, %v2556
        %v2558 = vrot.slane %v2397, 2
        %v2559 = vsel %vm2448, %v2552, %v2558
        %v2662 = vunpack.c.l.b16 %v2400
        %v2663 = vunpack.c.l.b16 %v2401
        %v2664 = vunpack.c.l.b16 %v2402
        %v2665 = vunpack.c.l.b16 %v2403
        %v2666 = vunpack.c.l.b16 %v2404
        %v2667 = vunpack.c.l.b16 %v2405
        %v2668 = vunpack.c.l.b16 %v2406
        %v2669 = vunpack.c.l.b16 %v2407
        %v2670 = vunpack.c.l.b16 %v2408
        %v2671 = vunpack.c.l.b16 %v2409
        %v2672 = vunpack.c.l.b16 %v2410
        %v2673 = vunpack.c.l.b16 %v2411
        %v2674 = vunpack.c.l.b16 %v2412
        %v2675 = vunpack.c.l.b16 %v2413
        %v2676 = vunpack.c.l.b16 %v2414
        %v2677 = vunpack.c.l.b16 %v2415
        %v2678 = vunpack.c.l.b16 %v2416
        %v2679 = vunpack.c.l.b16 %v2417
        %v2680 = vunpack.c.l.b16 %v2418
        %v2681 = vunpack.c.l.b16 %v2419
        %v2682 = vunpack.c.l.b16 %v2420
        %v2683 = vunpack.c.l.b16 %v2421
        %v2684 = vunpack.c.l.b16 %v2422
        %v2685 = vunpack.c.l.b16 %v2423
        %v2686 = vunpack.c.l.b16 %v2424
        %v2687 = vunpack.c.l.b16 %v2425
        %v2688 = vunpack.c.l.b16 %v2426
        %v2689 = vunpack.c.l.b16 %v2427
        %v2690 = vunpack.c.l.b16 %v2428
        %v2691 = vunpack.c.l.b16 %v2429
        %v2692 = vunpack.c.l.b16 %v2430
        %v2693 = vunpack.c.l.b16 %v2431
        %v2694 = vunpack.c.l.b16 %v2432
        %v2695 = vunpack.c.l.b16 %v2433
        %v2696 = vunpack.c.l.b16 %v2434
        %v2697 = vunpack.c.l.b16 %v2435
        %v2698 = vunpack.c.l.b16 %v2436
        %v2699 = vunpack.c.l.b16 %v2437
        %v2700 = vunpack.c.l.b16 %v2438
        %v2701 = vunpack.c.l.b16 %v2439
        %v2702 = vunpack.c.l.b16 %v2440
        %v2703 = vunpack.c.l.b16 %v2441
        %v2704 = vunpack.c.l.b16 %v2442
        %v2705 = vunpack.c.l.b16 %v2443
        %v2706 = vunpack.c.l.b16 %v2444
        %v2707 = vunpack.c.l.b16 %v2445
        %v2708 = vunpack.c.l.b16 %v2446
        %v2709 = vunpack.c.l.b16 %v2447
        %v2710 = vpack.c.b16 %v2663, %v2662
        %v2711 = vpack.c.b16 %v2665, %v2664
        %v2712 = vpack.c.b16 %v2667, %v2666
        %v2713 = vpack.c.b16 %v2669, %v2668
        %v2714 = vpack.c.b16 %v2671, %v2670
        %v2715 = vpack.c.b16 %v2673, %v2672
        %v2716 = vpack.c.b16 %v2675, %v2674
        %v2717 = vpack.c.b16 %v2677, %v2676
        %v2718 = vpack.c.b16 %v2679, %v2678
        %v2719 = vpack.c.b16 %v2681, %v2680
        %v2720 = vpack.c.b16 %v2683, %v2682
        %v2721 = vpack.c.b16 %v2685, %v2684
        %v2722 = vpack.c.b16 %v2687, %v2686
        %v2723 = vpack.c.b16 %v2689, %v2688
        %v2724 = vpack.c.b16 %v2691, %v2690
        %v2725 = vpack.c.b16 %v2693, %v2692
        %v2726 = vpack.c.b16 %v2695, %v2694
        %v2727 = vpack.c.b16 %v2697, %v2696
        %v2728 = vpack.c.b16 %v2699, %v2698
        %v2729 = vpack.c.b16 %v2701, %v2700
        %v2730 = vpack.c.b16 %v2703, %v2702
        %v2731 = vpack.c.b16 %v2705, %v2704
        %v2732 = vpack.c.b16 %v2707, %v2706
        %v2733 = vpack.c.b16 %v2709, %v2708
        %2758 = vmatprep.subr.bf16.mxu0 0
        %2759 = vmatpush1.bf16.msra.mxu0 %v2710
        %2760 = vmatprep.subr.bf16.mxu0 0
        %2761 = vmatpush1.bf16.msra.mxu0 %v2711
        %2762 = vmatprep.subr.bf16.mxu0 0
        %2763 = vmatpush1.bf16.msra.mxu0 %v2712
        %2764 = vmatprep.subr.bf16.mxu0 0
        %2765 = vmatpush1.bf16.msra.mxu0 %v2713
        %2766 = vmatprep.subr.bf16.mxu0 0
        %2767 = vmatpush1.bf16.msra.mxu0 %v2714
        %2768 = vmatprep.subr.bf16.mxu0 0
        %2769 = vmatpush1.bf16.msra.mxu0 %v2715
        %2770 = vmatprep.subr.bf16.mxu0 0
        %2771 = vmatpush1.bf16.msra.mxu0 %v2716
        %2772 = vmatprep.subr.bf16.mxu0 0
        %2773 = vmatpush1.bf16.msra.mxu0 %v2717
        %2774 = vmatprep.subr.bf16.mxu0 0
        %2775 = vmatpush1.bf16.msra.mxu0 %v2718
        %2776 = vmatprep.subr.bf16.mxu0 0
        %2777 = vmatpush1.bf16.msra.mxu0 %v2719
        %2778 = vmatprep.subr.bf16.mxu0 0
        %2779 = vmatpush1.bf16.msra.mxu0 %v2720
        %2780 = vmatprep.subr.bf16.mxu0 0
        %2781 = vmatpush1.bf16.msra.mxu0 %v2721
        %2782 = vmatprep.subr.bf16.mxu0 0
        %2783 = vmatpush1.bf16.msra.mxu0 %v2722
        %2784 = vmatprep.subr.bf16.mxu0 0
        %2785 = vmatpush1.bf16.msra.mxu0 %v2723
        %2786 = vmatprep.subr.bf16.mxu0 0
        %2787 = vmatpush1.bf16.msra.mxu0 %v2724
        %2788 = vmatprep.subr.bf16.mxu0 0
        %2789 = vmatpush1.bf16.msra.mxu0 %v2725
        %2790 = vmatprep.mubr.bf16.mxu0 %v2454
        %2791 = vmatmul.mubr.bf16.gmra.mrb[0].mxu0 %v2451
        %v2792 = vpop.f32.mrb[0].mxu0
        %v2793 = vadd.f32 0.0, %v2792
        %v2794 = vpop.f32.mrb[0].mxu0
        %v2795 = vpop.f32.mrb[0].mxu0
        %v2796 = vadd.f32 0.0, %v2795
        %v2797 = vpop.f32.mrb[0].mxu0
        %2798 = vmatprep.mubr.bf16.mxu0 %v2461
        %2799 = vmatmul.mubr.bf16.gmra.mrb[0].mxu0 %v2459
        %v2800 = vpop.f32.mrb[0].mxu0
        %v2801 = vadd.f32 0.0, %v2800
        %v2802 = vpop.f32.mrb[0].mxu0
        %v2803 = vpop.f32.mrb[0].mxu0
        %v2804 = vadd.f32 0.0, %v2803
        %v2805 = vpop.f32.mrb[0].mxu0
        %2806 = vmatprep.mubr.bf16.mxu0 %v2467
        %2807 = vmatmul.mubr.bf16.gmra.mrb[0].mxu0 %v2465
        %v2808 = vpop.f32.mrb[0].mxu0
        %v2809 = vadd.f32 0.0, %v2808
        %v2810 = vpop.f32.mrb[0].mxu0
        %v2811 = vpop.f32.mrb[0].mxu0
        %v2812 = vadd.f32 0.0, %v2811
        %v2813 = vpop.f32.mrb[0].mxu0
        %2814 = vmatprep.mubr.bf16.mxu0 %v2473
        %2815 = vmatmul.mubr.bf16.gmra.mrb[0].mxu0 %v2471
        %v2816 = vpop.f32.mrb[0].mxu0
        %v2817 = vadd.f32 0.0, %v2816
        %v2818 = vpop.f32.mrb[0].mxu0
        %v2819 = vpop.f32.mrb[0].mxu0
        %v2820 = vadd.f32 0.0, %v2819
        %v2821 = vpop.f32.mrb[0].mxu0
        %2822 = vmatprep.mubr.bf16.mxu0 %v2479
        %2823 = vmatmul.mubr.bf16.gmra.mrb[0].mxu0 %v2477
        %v2824 = vpop.f32.mrb[0].mxu0
        %v2825 = vadd.f32 0.0, %v2824
        %v2826 = vpop.f32.mrb[0].mxu0
        %v2827 = vpop.f32.mrb[0].mxu0
        %v2828 = vadd.f32 0.0, %v2827
        %v2829 = vpop.f32.mrb[0].mxu0
        %2830 = vmatprep.mubr.bf16.mxu0 %v2485
        %2831 = vmatmul.mubr.bf16.gmra.mrb[0].mxu0 %v2483
        %v2832 = vpop.f32.mrb[0].mxu0
        %v2833 = vadd.f32 0.0, %v2832
        %v2834 = vpop.f32.mrb[0].mxu0
        %v2835 = vpop.f32.mrb[0].mxu0
        %v2836 = vadd.f32 0.0, %v2835
        %v2837 = vpop.f32.mrb[0].mxu0
        %2838 = vmatprep.mubr.bf16.mxu0 %v2491
        %2839 = vmatmul.mubr.bf16.gmra.mrb[0].mxu0 %v2489
        %v2840 = vpop.f32.mrb[0].mxu0
        %v2841 = vadd.f32 0.0, %v2840
        %v2842 = vpop.f32.mrb[0].mxu0
        %v2843 = vpop.f32.mrb[0].mxu0
        %v2844 = vadd.f32 0.0, %v2843
        %v2845 = vpop.f32.mrb[0].mxu0
        %2846 = vmatprep.mubr.bf16.mxu0 %v2497
        %2847 = vmatmul.mubr.bf16.gmra.mrb[0].mxu0 %v2495
        %v2848 = vpop.f32.mrb[0].mxu0
        %v2849 = vadd.f32 0.0, %v2848
        %v2850 = vpop.f32.mrb[0].mxu0
        %v2851 = vpop.f32.mrb[0].mxu0
        %v2852 = vadd.f32 0.0, %v2851
        %v2853 = vpop.f32.mrb[0].mxu0
        %2854 = vmatprep.mubr.bf16.mxu0 %v2503
        %2855 = vmatmul.mubr.bf16.gmra.mrb[0].mxu0 %v2501
        %v2856 = vpop.f32.mrb[0].mxu0
        %v2857 = vadd.f32 0.0, %v2856
        %v2858 = vpop.f32.mrb[0].mxu0
        %v2859 = vpop.f32.mrb[0].mxu0
        %v2860 = vadd.f32 0.0, %v2859
        %v2861 = vpop.f32.mrb[0].mxu0
        %2862 = vmatprep.mubr.bf16.mxu0 %v2509
        %2863 = vmatmul.mubr.bf16.gmra.mrb[0].mxu0 %v2507
        %v2864 = vpop.f32.mrb[0].mxu0
        %v2865 = vadd.f32 0.0, %v2864
        %v2866 = vpop.f32.mrb[0].mxu0
        %v2867 = vpop.f32.mrb[0].mxu0
        %v2868 = vadd.f32 0.0, %v2867
        %v2869 = vpop.f32.mrb[0].mxu0
        %2870 = vmatprep.mubr.bf16.mxu0 %v2515
        %2871 = vmatmul.mubr.bf16.gmra.mrb[0].mxu0 %v2513
        %v2872 = vpop.f32.mrb[0].mxu0
        %v2873 = vadd.f32 0.0, %v2872
        %v2874 = vpop.f32.mrb[0].mxu0
        %v2875 = vpop.f32.mrb[0].mxu0
        %v2876 = vadd.f32 0.0, %v2875
        %v2877 = vpop.f32.mrb[0].mxu0
        %2878 = vmatprep.mubr.bf16.mxu0 %v2521
        %2879 = vmatmul.mubr.bf16.gmra.mrb[0].mxu0 %v2519
        %v2880 = vpop.f32.mrb[0].mxu0
        %v2881 = vadd.f32 0.0, %v2880
        %v2882 = vpop.f32.mrb[0].mxu0
        %v2883 = vpop.f32.mrb[0].mxu0
        %v2884 = vadd.f32 0.0, %v2883
        %v2885 = vpop.f32.mrb[0].mxu0
        %2886 = vmatprep.mubr.bf16.mxu0 %v2527
        %2887 = vmatmul.mubr.bf16.gmra.mrb[0].mxu0 %v2525
        %v2888 = vpop.f32.mrb[0].mxu0
        %v2889 = vadd.f32 0.0, %v2888
        %v2890 = vpop.f32.mrb[0].mxu0
        %v2891 = vpop.f32.mrb[0].mxu0
        %v2892 = vadd.f32 0.0, %v2891
        %v2893 = vpop.f32.mrb[0].mxu0
        %2894 = vmatprep.mubr.bf16.mxu0 %v2533
        %2895 = vmatmul.mubr.bf16.gmra.mrb[0].mxu0 %v2531
        %v2896 = vpop.f32.mrb[0].mxu0
        %v2897 = vadd.f32 0.0, %v2896
        %v2898 = vpop.f32.mrb[0].mxu0
        %v2899 = vpop.f32.mrb[0].mxu0
        %v2900 = vadd.f32 0.0, %v2899
        %v2901 = vpop.f32.mrb[0].mxu0
        %2902 = vmatprep.mubr.bf16.mxu0 %v2539
        %2903 = vmatmul.mubr.bf16.gmra.mrb[0].mxu0 %v2537
        %v2904 = vpop.f32.mrb[0].mxu0
        %v2905 = vadd.f32 0.0, %v2904
        %v2906 = vpop.f32.mrb[0].mxu0
        %v2907 = vpop.f32.mrb[0].mxu0
        %v2908 = vadd.f32 0.0, %v2907
        %v2909 = vpop.f32.mrb[0].mxu0
        %2910 = vmatprep.mubr.bf16.mxu0 %v2545
        %2911 = vmatmul.mubr.bf16.gmra.mrb[0].mxu0 %v2543
        %v2912 = vpop.f32.mrb[0].mxu0
        %v2913 = vadd.f32 0.0, %v2912
        %v2914 = vpop.f32.mrb[0].mxu0
        %v2915 = vpop.f32.mrb[0].mxu0
        %v2916 = vadd.f32 0.0, %v2915
        %v2917 = vpop.f32.mrb[0].mxu0
        %2918 = vmatprep.mubr.bf16.mxu0 %v2551
        %2919 = vmatmul.mubr.bf16.gmra.mrb[0].mxu0 %v2549
        %v2920 = vpop.f32.mrb[0].mxu0
        %v2921 = vadd.f32 0.0, %v2920
        %v2922 = vpop.f32.mrb[0].mxu0
        %v2923 = vpop.f32.mrb[0].mxu0
        %v2924 = vadd.f32 0.0, %v2923
        %v2925 = vpop.f32.mrb[0].mxu0
        %2926 = vmatprep.mubr.bf16.mxu0 %v2557
        %2927 = vmatmul.mubr.bf16.gmra.mrb[0].mxu0 %v2555
        %v2928 = vpop.f32.mrb[0].mxu0
        %v2929 = vadd.f32 0.0, %v2928
        %v2930 = vpop.f32.mrb[0].mxu0
        %v2931 = vpop.f32.mrb[0].mxu0
        %v2932 = vadd.f32 0.0, %v2931
        %v2933 = vpop.f32.mrb[0].mxu0
        %2934 = vdwg.mxu0
        %2935 = vmatprep.subr.bf16.mxu0 0
        %2936 = vmatpush1.bf16.msra.mxu0 %v2726
        %2937 = vmatprep.subr.bf16.mxu0 0
        %2938 = vmatpush1.bf16.msra.mxu0 %v2727
        %2939 = vmatprep.subr.bf16.mxu0 0
        %2940 = vmatpush1.bf16.msra.mxu0 %v2728
        %2941 = vmatprep.subr.bf16.mxu0 0
        %2942 = vmatpush1.bf16.msra.mxu0 %v2729
        %2943 = vmatprep.subr.bf16.mxu0 0
        %2944 = vmatpush1.bf16.msra.mxu0 %v2730
        %2945 = vmatprep.subr.bf16.mxu0 0
        %2946 = vmatpush1.bf16.msra.mxu0 %v2731
        %2947 = vmatprep.subr.bf16.mxu0 0
        %2948 = vmatpush1.bf16.msra.mxu0 %v2732
        %2949 = vmatprep.subr.bf16.mxu0 0
        %2950 = vmatpush1.bf16.msra.mxu0 %v2733
        %2951 = vmatprep.subr.bf16.mxu0 0
        %2952 = vmatpush1.bf16.msra.mxu0 0
        %2953 = vmatprep.subr.bf16.mxu0 0
        %2954 = vmatpush1.bf16.msra.mxu0 0
        %2955 = vmatprep.subr.bf16.mxu0 0
        %2956 = vmatpush1.bf16.msra.mxu0 0
        %2957 = vmatprep.subr.bf16.mxu0 0
        %2958 = vmatpush1.bf16.msra.mxu0 0
        %2959 = vmatprep.subr.bf16.mxu0 0
        %2960 = vmatpush1.bf16.msra.mxu0 0
        %2961 = vmatprep.subr.bf16.mxu0 0
        %2962 = vmatpush1.bf16.msra.mxu0 0
        %2963 = vmatprep.subr.bf16.mxu0 0
        %2964 = vmatpush1.bf16.msra.mxu0 0
        %2965 = vmatprep.subr.bf16.mxu0 0
        %2966 = vmatpush1.bf16.msra.mxu0 0
        %2967 = vmatprep.mubr.bf16.mxu0 0
        %2968 = vmatmul.mubr.bf16.gmra.mrb[0].mxu0 %v2457
        %v2969 = vpop.f32.mrb[0].mxu0
        %v2970 = vadd.f32 %v2793, %v2969
        %v2971 = vpop.f32.mrb[0].mxu0
        %v2972 = vpop.f32.mrb[0].mxu0
        %v2973 = vadd.f32 %v2796, %v2972
        %v2974 = vpop.f32.mrb[0].mxu0
        %2975 = vmatprep.mubr.bf16.mxu0 0
        %2976 = vmatmul.mubr.bf16.gmra.mrb[0].mxu0 %v2463
        %v2977 = vpop.f32.mrb[0].mxu0
        %v2978 = vadd.f32 %v2801, %v2977
        %v2979 = vpop.f32.mrb[0].mxu0
        %v2980 = vpop.f32.mrb[0].mxu0
        %v2981 = vadd.f32 %v2804, %v2980
        %v2982 = vpop.f32.mrb[0].mxu0
        %2983 = vmatprep.mubr.bf16.mxu0 0
        %2984 = vmatmul.mubr.bf16.gmra.mrb[0].mxu0 %v2469
        %v2985 = vpop.f32.mrb[0].mxu0
        %v2986 = vadd.f32 %v2809, %v2985
        %v2987 = vpop.f32.mrb[0].mxu0
        %v2988 = vpop.f32.mrb[0].mxu0
        %v2989 = vadd.f32 %v2812, %v2988
        %v2990 = vpop.f32.mrb[0].mxu0
        %2991 = vmatprep.mubr.bf16.mxu0 0
        %2992 = vmatmul.mubr.bf16.gmra.mrb[0].mxu0 %v2475
        %v2993 = vpop.f32.mrb[0].mxu0
        %v2994 = vadd.f32 %v2817, %v2993
        %v2995 = vpop.f32.mrb[0].mxu0
        %v2996 = vpop.f32.mrb[0].mxu0
        %v2997 = vadd.f32 %v2820, %v2996
        %v2998 = vpop.f32.mrb[0].mxu0
        %2999 = vmatprep.mubr.bf16.mxu0 0
        %3000 = vmatmul.mubr.bf16.gmra.mrb[0].mxu0 %v2481
        %v3001 = vpop.f32.mrb[0].mxu0
        %v3002 = vadd.f32 %v2825, %v3001
        %v3003 = vpop.f32.mrb[0].mxu0
        %v3004 = vpop.f32.mrb[0].mxu0
        %v3005 = vadd.f32 %v2828, %v3004
        %v3006 = vpop.f32.mrb[0].mxu0
        %3007 = vmatprep.mubr.bf16.mxu0 0
        %3008 = vmatmul.mubr.bf16.gmra.mrb[0].mxu0 %v2487
        %v3009 = vpop.f32.mrb[0].mxu0
        %v3010 = vadd.f32 %v2833, %v3009
        %v3011 = vpop.f32.mrb[0].mxu0
        %v3012 = vpop.f32.mrb[0].mxu0
        %v3013 = vadd.f32 %v2836, %v3012
        %v3014 = vpop.f32.mrb[0].mxu0
        %3015 = vmatprep.mubr.bf16.mxu0 0
        %3016 = vmatmul.mubr.bf16.gmra.mrb[0].mxu0 %v2493
        %v3017 = vpop.f32.mrb[0].mxu0
        %v3018 = vadd.f32 %v2841, %v3017
        %v3019 = vpop.f32.mrb[0].mxu0
        %v3020 = vpop.f32.mrb[0].mxu0
        %v3021 = vadd.f32 %v2844, %v3020
        %v3022 = vpop.f32.mrb[0].mxu0
        %3023 = vmatprep.mubr.bf16.mxu0 0
        %3024 = vmatmul.mubr.bf16.gmra.mrb[0].mxu0 %v2499
        %v3025 = vpop.f32.mrb[0].mxu0
        %v3026 = vadd.f32 %v2849, %v3025
        %v3027 = vpop.f32.mrb[0].mxu0
        %v3028 = vpop.f32.mrb[0].mxu0
        %v3029 = vadd.f32 %v2852, %v3028
        %v3030 = vpop.f32.mrb[0].mxu0
        %3031 = vmatprep.mubr.bf16.mxu0 0
        %3032 = vmatmul.mubr.bf16.gmra.mrb[0].mxu0 %v2505
        %v3033 = vpop.f32.mrb[0].mxu0
        %v3034 = vadd.f32 %v2857, %v3033
        %v3035 = vpop.f32.mrb[0].mxu0
        %v3036 = vpop.f32.mrb[0].mxu0
        %v3037 = vadd.f32 %v2860, %v3036
        %v3038 = vpop.f32.mrb[0].mxu0
        %3039 = vmatprep.mubr.bf16.mxu0 0
        %3040 = vmatmul.mubr.bf16.gmra.mrb[0].mxu0 %v2511
        %v3041 = vpop.f32.mrb[0].mxu0
        %v3042 = vadd.f32 %v2865, %v3041
        %v3043 = vpop.f32.mrb[0].mxu0
        %v3044 = vpop.f32.mrb[0].mxu0
        %v3045 = vadd.f32 %v2868, %v3044
        %v3046 = vpop.f32.mrb[0].mxu0
        %3047 = vmatprep.mubr.bf16.mxu0 0
        %3048 = vmatmul.mubr.bf16.gmra.mrb[0].mxu0 %v2517
        %v3049 = vpop.f32.mrb[0].mxu0
        %v3050 = vadd.f32 %v2873, %v3049
        %v3051 = vpop.f32.mrb[0].mxu0
        %v3052 = vpop.f32.mrb[0].mxu0
        %v3053 = vadd.f32 %v2876, %v3052
        %v3054 = vpop.f32.mrb[0].mxu0
        %3055 = vmatprep.mubr.bf16.mxu0 0
        %3056 = vmatmul.mubr.bf16.gmra.mrb[0].mxu0 %v2523
        %v3057 = vpop.f32.mrb[0].mxu0
        %v3058 = vadd.f32 %v2881, %v3057
        %v3059 = vpop.f32.mrb[0].mxu0
        %v3060 = vpop.f32.mrb[0].mxu0
        %v3061 = vadd.f32 %v2884, %v3060
        %v3062 = vpop.f32.mrb[0].mxu0
        %3063 = vmatprep.mubr.bf16.mxu0 0
        %3064 = vmatmul.mubr.bf16.gmra.mrb[0].mxu0 %v2529
        %v3065 = vpop.f32.mrb[0].mxu0
        %v3066 = vadd.f32 %v2889, %v3065
        %v3067 = vpop.f32.mrb[0].mxu0
        %v3068 = vpop.f32.mrb[0].mxu0
        %v3069 = vadd.f32 %v2892, %v3068
        %v3070 = vpop.f32.mrb[0].mxu0
        %3071 = vmatprep.mubr.bf16.mxu0 0
        %3072 = vmatmul.mubr.bf16.gmra.mrb[0].mxu0 %v2535
        %v3073 = vpop.f32.mrb[0].mxu0
        %v3074 = vadd.f32 %v2897, %v3073
        %v3075 = vpop.f32.mrb[0].mxu0
        %v3076 = vpop.f32.mrb[0].mxu0
        %v3077 = vadd.f32 %v2900, %v3076
        %v3078 = vpop.f32.mrb[0].mxu0
        %3079 = vmatprep.mubr.bf16.mxu0 0
        %3080 = vmatmul.mubr.bf16.gmra.mrb[0].mxu0 %v2541
        %v3081 = vpop.f32.mrb[0].mxu0
        %v3082 = vadd.f32 %v2905, %v3081
        %v3083 = vpop.f32.mrb[0].mxu0
        %v3084 = vpop.f32.mrb[0].mxu0
        %v3085 = vadd.f32 %v2908, %v3084
        %v3086 = vpop.f32.mrb[0].mxu0
        %3087 = vmatprep.mubr.bf16.mxu0 0
        %3088 = vmatmul.mubr.bf16.gmra.mrb[0].mxu0 %v2547
        %v3089 = vpop.f32.mrb[0].mxu0
        %v3090 = vadd.f32 %v2913, %v3089
        %v3091 = vpop.f32.mrb[0].mxu0
        %v3092 = vpop.f32.mrb[0].mxu0
        %v3093 = vadd.f32 %v2916, %v3092
        %v3094 = vpop.f32.mrb[0].mxu0
        %3095 = vmatprep.mubr.bf16.mxu0 0
        %3096 = vmatmul.mubr.bf16.gmra.mrb[0].mxu0 %v2553
        %v3097 = vpop.f32.mrb[0].mxu0
        %v3098 = vadd.f32 %v2921, %v3097
        %v3099 = vpop.f32.mrb[0].mxu0
        %v3100 = vpop.f32.mrb[0].mxu0
        %v3101 = vadd.f32 %v2924, %v3100
        %v3102 = vpop.f32.mrb[0].mxu0
        %3103 = vmatprep.mubr.bf16.mxu0 0
        %3104 = vmatmul.mubr.bf16.gmra.mrb[0].mxu0 %v2559
        %v3105 = vpop.f32.mrb[0].mxu0
        %v3106 = vadd.f32 %v2929, %v3105
        %v3107 = vpop.f32.mrb[0].mxu0
        %v3108 = vpop.f32.mrb[0].mxu0
        %v3109 = vadd.f32 %v2932, %v3108
        %v3110 = vpop.f32.mrb[0].mxu0
        %3111 = vdwg.mxu0
        %v3112 = vadd.f32 %v2246, %v2970
        %v3113 = vadd.f32 %v2249, %v2973
        %v3114 = vadd.f32 %v2254, %v2978
        %v3115 = vadd.f32 %v2257, %v2981
        %v3116 = vadd.f32 %v2262, %v2986
        %v3117 = vadd.f32 %v2265, %v2989
        %v3118 = vadd.f32 %v2270, %v2994
        %v3119 = vadd.f32 %v2273, %v2997
        %v3120 = vadd.f32 %v2278, %v3002
        %v3121 = vadd.f32 %v2281, %v3005
        %v3122 = vadd.f32 %v2286, %v3010
        %v3123 = vadd.f32 %v2289, %v3013
        %v3124 = vadd.f32 %v2294, %v3018
        %v3125 = vadd.f32 %v2297, %v3021
        %v3126 = vadd.f32 %v2302, %v3026
        %v3127 = vadd.f32 %v2305, %v3029
        %v3128 = vadd.f32 %v2310, %v3034
        %v3129 = vadd.f32 %v2313, %v3037
        %v3130 = vadd.f32 %v2318, %v3042
        %v3131 = vadd.f32 %v2321, %v3045
        %v3132 = vadd.f32 %v2326, %v3050
        %v3133 = vadd.f32 %v2329, %v3053
        %v3134 = vadd.f32 %v2334, %v3058
        %v3135 = vadd.f32 %v2337, %v3061
        %v3136 = vadd.f32 %v2342, %v3066
        %v3137 = vadd.f32 %v2345, %v3069
        %v3138 = vadd.f32 %v2350, %v3074
        %v3139 = vadd.f32 %v2353, %v3077
        %v3140 = vadd.f32 %v2358, %v3082
        %v3141 = vadd.f32 %v2361, %v3085
        %v3142 = vadd.f32 %v2366, %v3090
        %v3143 = vadd.f32 %v2369, %v3093
        %v3144 = vadd.f32 %v2374, %v3098
        %v3145 = vadd.f32 %v2377, %v3101
        %v3146 = vadd.f32 %v2382, %v3106
        %v3147 = vadd.f32 %v2385, %v3109
        %v3148 = vld [vmem:[#allocation8] sm:$0x1]
        %v3150 = vlaneseq
        %v3151 = vshrl.u32 %v3150, 7
        %v3152 = vsub.s32 0, %v3151
        %v3153 = vrot.slane %v3148, %v3152
        %v3155 = vadd.f32 %v3112, %v3153
        %v3156 = vadd.f32 %v3113, %v3153
        %v3157 = vadd.f32 %v3114, %v3153
        %v3158 = vadd.f32 %v3115, %v3153
        %v3159 = vadd.f32 %v3116, %v3153
        %v3160 = vadd.f32 %v3117, %v3153
        %v3161 = vadd.f32 %v3118, %v3153
        %v3162 = vadd.f32 %v3119, %v3153
        %v3163 = vadd.f32 %v3120, %v3153
        %v3164 = vadd.f32 %v3121, %v3153
        %v3165 = vadd.f32 %v3122, %v3153
        %v3166 = vadd.f32 %v3123, %v3153
        %v3167 = vadd.f32 %v3124, %v3153
        %v3168 = vadd.f32 %v3125, %v3153
        %v3169 = vadd.f32 %v3126, %v3153
        %v3170 = vadd.f32 %v3127, %v3153
        %v3171 = vadd.f32 %v3128, %v3153
        %v3172 = vadd.f32 %v3129, %v3153
        %v3173 = vadd.f32 %v3130, %v3153
        %v3174 = vadd.f32 %v3131, %v3153
        %v3175 = vadd.f32 %v3132, %v3153
        %v3176 = vadd.f32 %v3133, %v3153
        %v3177 = vadd.f32 %v3134, %v3153
        %v3178 = vadd.f32 %v3135, %v3153
        %v3179 = vadd.f32 %v3136, %v3153
        %v3180 = vadd.f32 %v3137, %v3153
        %v3181 = vadd.f32 %v3138, %v3153
        %v3182 = vadd.f32 %v3139, %v3153
        %v3183 = vadd.f32 %v3140, %v3153
        %v3184 = vadd.f32 %v3141, %v3153
        %v3185 = vadd.f32 %v3142, %v3153
        %v3186 = vadd.f32 %v3143, %v3153
        %v3187 = vadd.f32 %v3144, %v3153
        %v3188 = vadd.f32 %v3145, %v3153
        %v3189 = vadd.f32 %v3146, %v3153
        %v3190 = vadd.f32 %v3147, %v3153
        %v3191 = vmax.f32 %v3155, 0.0
        %v3192 = vmax.f32 %v3156, 0.0
        %v3193 = vmax.f32 %v3157, 0.0
        %v3194 = vmax.f32 %v3158, 0.0
        %v3195 = vmax.f32 %v3159, 0.0
        %v3196 = vmax.f32 %v3160, 0.0
        %v3197 = vmax.f32 %v3161, 0.0
        %v3198 = vmax.f32 %v3162, 0.0
        %v3199 = vmax.f32 %v3163, 0.0
        %v3200 = vmax.f32 %v3164, 0.0
        %v3201 = vmax.f32 %v3165, 0.0
        %v3202 = vmax.f32 %v3166, 0.0
        %v3203 = vmax.f32 %v3167, 0.0
        %v3204 = vmax.f32 %v3168, 0.0
        %v3205 = vmax.f32 %v3169, 0.0
        %v3206 = vmax.f32 %v3170, 0.0
        %v3207 = vmax.f32 %v3171, 0.0
        %v3208 = vmax.f32 %v3172, 0.0
        %v3209 = vmax.f32 %v3173, 0.0
        %v3210 = vmax.f32 %v3174, 0.0
        %v3211 = vmax.f32 %v3175, 0.0
        %v3212 = vmax.f32 %v3176, 0.0
        %v3213 = vmax.f32 %v3177, 0.0
        %v3214 = vmax.f32 %v3178, 0.0
        %v3215 = vmax.f32 %v3179, 0.0
        %v3216 = vmax.f32 %v3180, 0.0
        %v3217 = vmax.f32 %v3181, 0.0
        %v3218 = vmax.f32 %v3182, 0.0
        %v3219 = vmax.f32 %v3183, 0.0
        %v3220 = vmax.f32 %v3184, 0.0
        %v3221 = vmax.f32 %v3185, 0.0
        %v3222 = vmax.f32 %v3186, 0.0
        %v3223 = vmax.f32 %v3187, 0.0
        %v3224 = vmax.f32 %v3188, 0.0
        %v3225 = vmax.f32 %v3189, 0.0
        %v3226 = vmax.f32 %v3190, 0.0
        %v3227 = vpack.c.bf16 %v3192, %v3191
        %v3228 = vpack.c.bf16 %v3194, %v3193
        %v3229 = vpack.c.bf16 %v3196, %v3195
        %v3230 = vpack.c.bf16 %v3198, %v3197
        %v3231 = vpack.c.bf16 %v3200, %v3199
        %v3232 = vpack.c.bf16 %v3202, %v3201
        %v3233 = vpack.c.bf16 %v3204, %v3203
        %v3234 = vpack.c.bf16 %v3206, %v3205
        %v3235 = vpack.c.bf16 %v3208, %v3207
        %v3236 = vpack.c.bf16 %v3210, %v3209
        %v3237 = vpack.c.bf16 %v3212, %v3211
        %v3238 = vpack.c.bf16 %v3214, %v3213
        %v3239 = vpack.c.bf16 %v3216, %v3215
        %v3240 = vpack.c.bf16 %v3218, %v3217
        %v3241 = vpack.c.bf16 %v3220, %v3219
        %v3242 = vpack.c.bf16 %v3222, %v3221
        %v3243 = vpack.c.bf16 %v3224, %v3223
        %v3244 = vpack.c.bf16 %v3226, %v3225
        %v3245 = vld [vmem:[#allocation10] sm:$0xf]
        %v3246 = vld [vmem:[#allocation10 + $0x4] sm:$0xf]
        %v3247 = vld [vmem:[#allocation10 + $0x8] sm:$0xf]
        %v3248 = vld [vmem:[#allocation10 + $0xc] sm:$0xf]
        %v3249 = vld [vmem:[#allocation10 + $0x10] sm:$0xf]
        %v3250 = vld [vmem:[#allocation10 + $0x14] sm:$0xf]
        %v3251 = vld [vmem:[#allocation10 + $0x18] sm:$0xf]
        %v3252 = vld [vmem:[#allocation10 + $0x1c] sm:$0xf]
        %v3253 = vld [vmem:[#allocation10 + $0x20] sm:$0xf]
        %v3254 = vld [vmem:[#allocation10 + $0x24] sm:$0xf]
        %v3255 = vld [vmem:[#allocation10 + $0x28] sm:$0xf]
        %v3256 = vld [vmem:[#allocation10 + $0x2c] sm:$0xf]
        %v3257 = vld [vmem:[#allocation10 + $0x30] sm:$0xf]
        %v3258 = vld [vmem:[#allocation10 + $0x34] sm:$0xf]
        %v3259 = vld [vmem:[#allocation10 + $0x38] sm:$0xf]
        %v3260 = vld [vmem:[#allocation10 + $0x3c] sm:$0xf]
        %v3261 = vld [vmem:[#allocation11] sm:$0x1]
        %v3263 = vlaneseq
        %v3264 = vshrl.u32 %v3263, 7
        %v3265 = vsub.s32 0, %v3264
        %v3266 = vrot.slane %v3261, %v3265
        %v3284 = vunpack.c.l.b16 %v3245
        %v3285 = vunpack.c.l.b16 %v3246
        %v3286 = vunpack.c.l.b16 %v3247
        %v3287 = vunpack.c.l.b16 %v3248
        %v3288 = vunpack.c.l.b16 %v3249
        %v3289 = vunpack.c.l.b16 %v3250
        %v3290 = vunpack.c.l.b16 %v3251
        %v3291 = vunpack.c.l.b16 %v3252
        %v3292 = vunpack.c.l.b16 %v3253
        %v3293 = vunpack.c.l.b16 %v3254
        %v3294 = vunpack.c.l.b16 %v3255
        %v3295 = vunpack.c.l.b16 %v3256
        %v3296 = vunpack.c.l.b16 %v3257
        %v3297 = vunpack.c.l.b16 %v3258
        %v3298 = vunpack.c.l.b16 %v3259
        %v3299 = vunpack.c.l.b16 %v3260
        %v3300 = vpack.c.b16 %v3285, %v3284
        %v3301 = vpack.c.b16 %v3287, %v3286
        %v3302 = vpack.c.b16 %v3289, %v3288
        %v3303 = vpack.c.b16 %v3291, %v3290
        %v3304 = vpack.c.b16 %v3293, %v3292
        %v3305 = vpack.c.b16 %v3295, %v3294
        %v3306 = vpack.c.b16 %v3297, %v3296
        %v3307 = vpack.c.b16 %v3299, %v3298
        %3316 = vmatprep.subr.bf16.mxu0 0
        %3317 = vmatpush1.bf16.msra.mxu0 %v3300
        %3318 = vmatprep.subr.bf16.mxu0 0
        %3319 = vmatpush1.bf16.msra.mxu0 %v3301
        %3320 = vmatprep.subr.bf16.mxu0 0
        %3321 = vmatpush1.bf16.msra.mxu0 %v3302
        %3322 = vmatprep.subr.bf16.mxu0 0
        %3323 = vmatpush1.bf16.msra.mxu0 %v3303
        %3324 = vmatprep.subr.bf16.mxu0 0
        %3325 = vmatpush1.bf16.msra.mxu0 %v3304
        %3326 = vmatprep.subr.bf16.mxu0 0
        %3327 = vmatpush1.bf16.msra.mxu0 %v3305
        %3328 = vmatprep.subr.bf16.mxu0 0
        %3329 = vmatpush1.bf16.msra.mxu0 %v3306
        %3330 = vmatprep.subr.bf16.mxu0 0
        %3331 = vmatpush1.bf16.msra.mxu0 %v3307
        %3332 = vmatprep.subr.bf16.mxu0 0
        %3333 = vmatpush1.bf16.msra.mxu0 0
        %3334 = vmatprep.subr.bf16.mxu0 0
        %3335 = vmatpush1.bf16.msra.mxu0 0
        %3336 = vmatprep.subr.bf16.mxu0 0
        %3337 = vmatpush1.bf16.msra.mxu0 0
        %3338 = vmatprep.subr.bf16.mxu0 0
        %3339 = vmatpush1.bf16.msra.mxu0 0
        %3340 = vmatprep.subr.bf16.mxu0 0
        %3341 = vmatpush1.bf16.msra.mxu0 0
        %3342 = vmatprep.subr.bf16.mxu0 0
        %3343 = vmatpush1.bf16.msra.mxu0 0
        %3344 = vmatprep.subr.bf16.mxu0 0
        %3345 = vmatpush1.bf16.msra.mxu0 0
        %3346 = vmatprep.subr.bf16.mxu0 0
        %3347 = vmatpush1.bf16.msra.mxu0 0
        %3348 = vmatprep.mubr.bf16.mxu0 0
        %3349 = vmatmul.mubr.bf16.gmra.mrb[0].mxu0 %v3227
        %v3350 = vpop.f32.mrb[0].mxu0
        %v3351 = vadd.f32 %v3266, %v3350
        %v3352 = vpop.f32.mrb[0].mxu0
        %v3353 = vpop.f32.mrb[0].mxu0
        %v3354 = vadd.f32 %v3266, %v3353
        %v3355 = vpop.f32.mrb[0].mxu0
        %3356 = vmatprep.mubr.bf16.mxu0 0
        %3357 = vmatmul.mubr.bf16.gmra.mrb[0].mxu0 %v3228
        %v3358 = vpop.f32.mrb[0].mxu0
        %v3359 = vadd.f32 %v3266, %v3358
        %v3360 = vpop.f32.mrb[0].mxu0
        %v3361 = vpop.f32.mrb[0].mxu0
        %v3362 = vadd.f32 %v3266, %v3361
        %v3363 = vpop.f32.mrb[0].mxu0
        %3364 = vmatprep.mubr.bf16.mxu0 0
        %3365 = vmatmul.mubr.bf16.gmra.mrb[0].mxu0 %v3229
        %v3366 = vpop.f32.mrb[0].mxu0
        %v3367 = vadd.f32 %v3266, %v3366
        %v3368 = vpop.f32.mrb[0].mxu0
        %v3369 = vpop.f32.mrb[0].mxu0
        %v3370 = vadd.f32 %v3266, %v3369
        %v3371 = vpop.f32.mrb[0].mxu0
        %3372 = vmatprep.mubr.bf16.mxu0 0
        %3373 = vmatmul.mubr.bf16.gmra.mrb[0].mxu0 %v3230
        %v3374 = vpop.f32.mrb[0].mxu0
        %v3375 = vadd.f32 %v3266, %v3374
        %v3376 = vpop.f32.mrb[0].mxu0
        %v3377 = vpop.f32.mrb[0].mxu0
        %v3378 = vadd.f32 %v3266, %v3377
        %v3379 = vpop.f32.mrb[0].mxu0
        %3380 = vmatprep.mubr.bf16.mxu0 0
        %3381 = vmatmul.mubr.bf16.gmra.mrb[0].mxu0 %v3231
        %v3382 = vpop.f32.mrb[0].mxu0
        %v3383 = vadd.f32 %v3266, %v3382
        %v3384 = vpop.f32.mrb[0].mxu0
        %v3385 = vpop.f32.mrb[0].mxu0
        %v3386 = vadd.f32 %v3266, %v3385
        %v3387 = vpop.f32.mrb[0].mxu0
        %3388 = vmatprep.mubr.bf16.mxu0 0
        %3389 = vmatmul.mubr.bf16.gmra.mrb[0].mxu0 %v3232
        %v3390 = vpop.f32.mrb[0].mxu0
        %v3391 = vadd.f32 %v3266, %v3390
        %v3392 = vpop.f32.mrb[0].mxu0
        %v3393 = vpop.f32.mrb[0].mxu0
        %v3394 = vadd.f32 %v3266, %v3393
        %v3395 = vpop.f32.mrb[0].mxu0
        %3396 = vmatprep.mubr.bf16.mxu0 0
        %3397 = vmatmul.mubr.bf16.gmra.mrb[0].mxu0 %v3233
        %v3398 = vpop.f32.mrb[0].mxu0
        %v3399 = vadd.f32 %v3266, %v3398
        %v3400 = vpop.f32.mrb[0].mxu0
        %v3401 = vpop.f32.mrb[0].mxu0
        %v3402 = vadd.f32 %v3266, %v3401
        %v3403 = vpop.f32.mrb[0].mxu0
        %3404 = vmatprep.mubr.bf16.mxu0 0
        %3405 = vmatmul.mubr.bf16.gmra.mrb[0].mxu0 %v3234
        %v3406 = vpop.f32.mrb[0].mxu0
        %v3407 = vadd.f32 %v3266, %v3406
        %v3408 = vpop.f32.mrb[0].mxu0
        %v3409 = vpop.f32.mrb[0].mxu0
        %v3410 = vadd.f32 %v3266, %v3409
        %v3411 = vpop.f32.mrb[0].mxu0
        %3412 = vmatprep.mubr.bf16.mxu0 0
        %3413 = vmatmul.mubr.bf16.gmra.mrb[0].mxu0 %v3235
        %v3414 = vpop.f32.mrb[0].mxu0
        %v3415 = vadd.f32 %v3266, %v3414
        %v3416 = vpop.f32.mrb[0].mxu0
        %v3417 = vpop.f32.mrb[0].mxu0
        %v3418 = vadd.f32 %v3266, %v3417
        %v3419 = vpop.f32.mrb[0].mxu0
        %3420 = vmatprep.mubr.bf16.mxu0 0
        %3421 = vmatmul.mubr.bf16.gmra.mrb[0].mxu0 %v3236
        %v3422 = vpop.f32.mrb[0].mxu0
        %v3423 = vadd.f32 %v3266, %v3422
        %v3424 = vpop.f32.mrb[0].mxu0
        %v3425 = vpop.f32.mrb[0].mxu0
        %v3426 = vadd.f32 %v3266, %v3425
        %v3427 = vpop.f32.mrb[0].mxu0
        %3428 = vmatprep.mubr.bf16.mxu0 0
        %3429 = vmatmul.mubr.bf16.gmra.mrb[0].mxu0 %v3237
        %v3430 = vpop.f32.mrb[0].mxu0
        %v3431 = vadd.f32 %v3266, %v3430
        %v3432 = vpop.f32.mrb[0].mxu0
        %v3433 = vpop.f32.mrb[0].mxu0
        %v3434 = vadd.f32 %v3266, %v3433
        %v3435 = vpop.f32.mrb[0].mxu0
        %3436 = vmatprep.mubr.bf16.mxu0 0
        %3437 = vmatmul.mubr.bf16.gmra.mrb[0].mxu0 %v3238
        %v3438 = vpop.f32.mrb[0].mxu0
        %v3439 = vadd.f32 %v3266, %v3438
        %v3440 = vpop.f32.mrb[0].mxu0
        %v3441 = vpop.f32.mrb[0].mxu0
        %v3442 = vadd.f32 %v3266, %v3441
        %v3443 = vpop.f32.mrb[0].mxu0
        %3444 = vmatprep.mubr.bf16.mxu0 0
        %3445 = vmatmul.mubr.bf16.gmra.mrb[0].mxu0 %v3239
        %v3446 = vpop.f32.mrb[0].mxu0
        %v3447 = vadd.f32 %v3266, %v3446
        %v3448 = vpop.f32.mrb[0].mxu0
        %v3449 = vpop.f32.mrb[0].mxu0
        %v3450 = vadd.f32 %v3266, %v3449
        %v3451 = vpop.f32.mrb[0].mxu0
        %3452 = vmatprep.mubr.bf16.mxu0 0
        %3453 = vmatmul.mubr.bf16.gmra.mrb[0].mxu0 %v3240
        %v3454 = vpop.f32.mrb[0].mxu0
        %v3455 = vadd.f32 %v3266, %v3454
        %v3456 = vpop.f32.mrb[0].mxu0
        %v3457 = vpop.f32.mrb[0].mxu0
        %v3458 = vadd.f32 %v3266, %v3457
        %v3459 = vpop.f32.mrb[0].mxu0
        %3460 = vmatprep.mubr.bf16.mxu0 0
        %3461 = vmatmul.mubr.bf16.gmra.mrb[0].mxu0 %v3241
        %v3462 = vpop.f32.mrb[0].mxu0
        %v3463 = vadd.f32 %v3266, %v3462
        %v3464 = vpop.f32.mrb[0].mxu0
        %v3465 = vpop.f32.mrb[0].mxu0
        %v3466 = vadd.f32 %v3266, %v3465
        %v3467 = vpop.f32.mrb[0].mxu0
        %3468 = vmatprep.mubr.bf16.mxu0 0
        %3469 = vmatmul.mubr.bf16.gmra.mrb[0].mxu0 %v3242
        %v3470 = vpop.f32.mrb[0].mxu0
        %v3471 = vadd.f32 %v3266, %v3470
        %v3472 = vpop.f32.mrb[0].mxu0
        %v3473 = vpop.f32.mrb[0].mxu0
        %v3474 = vadd.f32 %v3266, %v3473
        %v3475 = vpop.f32.mrb[0].mxu0
        %3476 = vmatprep.mubr.bf16.mxu0 0
        %3477 = vmatmul.mubr.bf16.gmra.mrb[0].mxu0 %v3243
        %v3478 = vpop.f32.mrb[0].mxu0
        %v3479 = vadd.f32 %v3266, %v3478
        %v3480 = vpop.f32.mrb[0].mxu0
        %v3481 = vpop.f32.mrb[0].mxu0
        %v3482 = vadd.f32 %v3266, %v3481
        %v3483 = vpop.f32.mrb[0].mxu0
        %3484 = vmatprep.mubr.bf16.mxu0 0
        %3485 = vmatmul.mubr.bf16.gmra.mrb[0].mxu0 %v3244
        %v3486 = vpop.f32.mrb[0].mxu0
        %v3487 = vadd.f32 %v3266, %v3486
        %v3488 = vpop.f32.mrb[0].mxu0
        %v3489 = vpop.f32.mrb[0].mxu0
        %v3490 = vadd.f32 %v3266, %v3489
        %v3491 = vpop.f32.mrb[0].mxu0
        %3492 = vdwg.mxu0
        %v3493 = vld [vmem:[#allocation13] sm:$0xf]
        %v3494 = vld [vmem:[#allocation13 + $0x4] sm:$0xf]
        %v3495 = vld [vmem:[#allocation13 + $0x8] sm:$0xf]
        %v3496 = vld [vmem:[#allocation13 + $0xc] sm:$0xf]
        %v3497 = vld [vmem:[#allocation13 + $0x10] sm:$0xf]
        %v3498 = vld [vmem:[#allocation13 + $0x14] sm:$0xf]
        %v3499 = vld [vmem:[#allocation13 + $0x18] sm:$0xf]
        %v3500 = vld [vmem:[#allocation13 + $0x1c] sm:$0xf]
        %v3501 = vld [vmem:[#allocation13 + $0x20] sm:$0xf]
        %v3502 = vld [vmem:[#allocation13 + $0x24] sm:$0xf]
        %v3503 = vld [vmem:[#allocation13 + $0x28] sm:$0xf]
        %v3504 = vld [vmem:[#allocation13 + $0x2c] sm:$0xf]
        %v3505 = vld [vmem:[#allocation13 + $0x30] sm:$0xf]
        %v3506 = vld [vmem:[#allocation13 + $0x34] sm:$0xf]
        %v3507 = vld [vmem:[#allocation13 + $0x38] sm:$0xf]
        %v3508 = vld [vmem:[#allocation13 + $0x3c] sm:$0xf]
        %v3509 = vld [vmem:[#allocation14] sm:$0x1]
        %v3511 = vlaneseq
        %v3512 = vshrl.u32 %v3511, 7
        %v3513 = vsub.s32 0, %v3512
        %v3514 = vrot.slane %v3509, %v3513
        %v3516 = vpack.c.b16 %v561, %v561
        %vm3517 = vsmask.f32 6400
        %v3519 = vshrl.u32 %v567, 16
        %v3521 = vrot.slane %v3519, 1
        %v3522 = vshll.u32 %v567, 16
        %v3524 = vrot.slane %v3522, 2
        %v3525 = vor.u32 %v3521, %v3524
        %v3527 = vshrl.u32 %v568, 16
        %v3529 = vrot.slane %v3527, 1
        %v3530 = vshll.u32 %v568, 16
        %v3532 = vrot.slane %v3530, 2
        %v3533 = vor.u32 %v3529, %v3532
        %v3534 = vsel %vm3517, %v3525, %v3533
        %v3536 = vshrl.u32 %v569, 16
        %v3538 = vrot.slane %v3536, 1
        %v3539 = vshll.u32 %v569, 16
        %v3541 = vrot.slane %v3539, 2
        %v3542 = vor.u32 %v3538, %v3541
        %v3543 = vsel %vm3517, %v3533, %v3542
        %v3545 = vshrl.u32 %v570, 16
        %v3547 = vrot.slane %v3545, 1
        %v3548 = vshll.u32 %v570, 16
        %v3550 = vrot.slane %v3548, 2
        %v3551 = vor.u32 %v3547, %v3550
        %v3552 = vsel %vm3517, %v3542, %v3551
        %v3554 = vshrl.u32 %v571, 16
        %v3556 = vrot.slane %v3554, 1
        %v3557 = vshll.u32 %v571, 16
        %v3559 = vrot.slane %v3557, 2
        %v3560 = vor.u32 %v3556, %v3559
        %v3561 = vsel %vm3517, %v3551, %v3560
        %v3563 = vshrl.u32 %v572, 16
        %v3565 = vrot.slane %v3563, 1
        %v3566 = vshll.u32 %v572, 16
        %v3568 = vrot.slane %v3566, 2
        %v3569 = vor.u32 %v3565, %v3568
        %v3570 = vsel %vm3517, %v3560, %v3569
        %v3572 = vshrl.u32 %v573, 16
        %v3574 = vrot.slane %v3572, 1
        %v3575 = vshll.u32 %v573, 16
        %v3577 = vrot.slane %v3575, 2
        %v3578 = vor.u32 %v3574, %v3577
        %v3579 = vsel %vm3517, %v3569, %v3578
        %v3581 = vshrl.u32 %v574, 16
        %v3583 = vrot.slane %v3581, 1
        %v3584 = vshll.u32 %v574, 16
        %v3586 = vrot.slane %v3584, 2
        %v3587 = vor.u32 %v3583, %v3586
        %v3588 = vsel %vm3517, %v3578, %v3587
        %v3590 = vshrl.u32 %v575, 16
        %v3592 = vrot.slane %v3590, 1
        %v3593 = vshll.u32 %v575, 16
        %v3595 = vrot.slane %v3593, 2
        %v3596 = vor.u32 %v3592, %v3595
        %v3597 = vsel %vm3517, %v3587, %v3596
        %v3599 = vshrl.u32 %v576, 16
        %v3601 = vrot.slane %v3599, 1
        %v3602 = vshll.u32 %v576, 16
        %v3604 = vrot.slane %v3602, 2
        %v3605 = vor.u32 %v3601, %v3604
        %v3606 = vsel %vm3517, %v3596, %v3605
        %v3608 = vshrl.u32 %v577, 16
        %v3610 = vrot.slane %v3608, 1
        %v3611 = vshll.u32 %v577, 16
        %v3613 = vrot.slane %v3611, 2
        %v3614 = vor.u32 %v3610, %v3613
        %v3615 = vsel %vm3517, %v3605, %v3614
        %v3617 = vshrl.u32 %v578, 16
        %v3619 = vrot.slane %v3617, 1
        %v3620 = vshll.u32 %v578, 16
        %v3622 = vrot.slane %v3620, 2
        %v3623 = vor.u32 %v3619, %v3622
        %v3624 = vsel %vm3517, %v3614, %v3623
        %v3626 = vshrl.u32 %v579, 16
        %v3628 = vrot.slane %v3626, 1
        %v3629 = vshll.u32 %v579, 16
        %v3631 = vrot.slane %v3629, 2
        %v3632 = vor.u32 %v3628, %v3631
        %v3633 = vsel %vm3517, %v3623, %v3632
        %v3635 = vshrl.u32 %v580, 16
        %v3637 = vrot.slane %v3635, 1
        %v3638 = vshll.u32 %v580, 16
        %v3640 = vrot.slane %v3638, 2
        %v3641 = vor.u32 %v3637, %v3640
        %v3642 = vsel %vm3517, %v3632, %v3641
        %v3644 = vshrl.u32 %v581, 16
        %v3646 = vrot.slane %v3644, 1
        %v3647 = vshll.u32 %v581, 16
        %v3649 = vrot.slane %v3647, 2
        %v3650 = vor.u32 %v3646, %v3649
        %v3651 = vsel %vm3517, %v3641, %v3650
        %v3653 = vshrl.u32 %v582, 16
        %v3655 = vrot.slane %v3653, 1
        %v3656 = vshll.u32 %v582, 16
        %v3658 = vrot.slane %v3656, 2
        %v3659 = vor.u32 %v3655, %v3658
        %v3660 = vsel %vm3517, %v3650, %v3659
        %v3662 = vshrl.u32 %v583, 16
        %v3664 = vrot.slane %v3662, 1
        %v3665 = vshll.u32 %v583, 16
        %v3667 = vrot.slane %v3665, 2
        %v3668 = vor.u32 %v3664, %v3667
        %v3669 = vsel %vm3517, %v3659, %v3668
        %v3671 = vshrl.u32 %v584, 16
        %v3673 = vrot.slane %v3671, 1
        %v3674 = vshll.u32 %v584, 16
        %v3676 = vrot.slane %v3674, 2
        %v3677 = vor.u32 %v3673, %v3676
        %v3678 = vsel %vm3517, %v3668, %v3677
        %v3680 = vshrl.u32 %v3516, 16
        %v3682 = vrot.slane %v3680, 1
        %v3683 = vshll.u32 %v3516, 16
        %v3685 = vrot.slane %v3683, 2
        %v3686 = vor.u32 %v3682, %v3685
        %v3687 = vsel %vm3517, %v3677, %v3686
        %v3722 = vunpack.c.l.b16 %v3493
        %v3723 = vunpack.c.l.b16 %v3494
        %v3724 = vunpack.c.l.b16 %v3495
        %v3725 = vunpack.c.l.b16 %v3496
        %v3726 = vunpack.c.l.b16 %v3497
        %v3727 = vunpack.c.l.b16 %v3498
        %v3728 = vunpack.c.l.b16 %v3499
        %v3729 = vunpack.c.l.b16 %v3500
        %v3730 = vunpack.c.l.b16 %v3501
        %v3731 = vunpack.c.l.b16 %v3502
        %v3732 = vunpack.c.l.b16 %v3503
        %v3733 = vunpack.c.l.b16 %v3504
        %v3734 = vunpack.c.l.b16 %v3505
        %v3735 = vunpack.c.l.b16 %v3506
        %v3736 = vunpack.c.l.b16 %v3507
        %v3737 = vunpack.c.l.b16 %v3508
        %v3738 = vpack.c.b16 %v3723, %v3722
        %v3739 = vpack.c.b16 %v3725, %v3724
        %v3740 = vpack.c.b16 %v3727, %v3726
        %v3741 = vpack.c.b16 %v3729, %v3728
        %v3742 = vpack.c.b16 %v3731, %v3730
        %v3743 = vpack.c.b16 %v3733, %v3732
        %v3744 = vpack.c.b16 %v3735, %v3734
        %v3745 = vpack.c.b16 %v3737, %v3736
        %3754 = vmatprep.subr.bf16.mxu0 0
        %3755 = vmatpush1.bf16.msra.mxu0 %v3738
        %3756 = vmatprep.subr.bf16.mxu0 0
        %3757 = vmatpush1.bf16.msra.mxu0 %v3739
        %3758 = vmatprep.subr.bf16.mxu0 0
        %3759 = vmatpush1.bf16.msra.mxu0 %v3740
        %3760 = vmatprep.subr.bf16.mxu0 0
        %3761 = vmatpush1.bf16.msra.mxu0 %v3741
        %3762 = vmatprep.subr.bf16.mxu0 0
        %3763 = vmatpush1.bf16.msra.mxu0 %v3742
        %3764 = vmatprep.subr.bf16.mxu0 0
        %3765 = vmatpush1.bf16.msra.mxu0 %v3743
        %3766 = vmatprep.subr.bf16.mxu0 0
        %3767 = vmatpush1.bf16.msra.mxu0 %v3744
        %3768 = vmatprep.subr.bf16.mxu0 0
        %3769 = vmatpush1.bf16.msra.mxu0 %v3745
        %3770 = vmatprep.subr.bf16.mxu0 0
        %3771 = vmatpush1.bf16.msra.mxu0 0
        %3772 = vmatprep.subr.bf16.mxu0 0
        %3773 = vmatpush1.bf16.msra.mxu0 0
        %3774 = vmatprep.subr.bf16.mxu0 0
        %3775 = vmatpush1.bf16.msra.mxu0 0
        %3776 = vmatprep.subr.bf16.mxu0 0
        %3777 = vmatpush1.bf16.msra.mxu0 0
        %3778 = vmatprep.subr.bf16.mxu0 0
        %3779 = vmatpush1.bf16.msra.mxu0 0
        %3780 = vmatprep.subr.bf16.mxu0 0
        %3781 = vmatpush1.bf16.msra.mxu0 0
        %3782 = vmatprep.subr.bf16.mxu0 0
        %3783 = vmatpush1.bf16.msra.mxu0 0
        %3784 = vmatprep.subr.bf16.mxu0 0
        %3785 = vmatpush1.bf16.msra.mxu0 0
        %3786 = vmatprep.mubr.bf16.mxu0 0
        %3787 = vmatmul.mubr.bf16.gmra.mrb[0].mxu0 %v3534
        %v3788 = vpop.f32.mrb[0].mxu0
        %v3789 = vadd.f32 %v3514, %v3788
        %v3790 = vpop.f32.mrb[0].mxu0
        %v3791 = vpop.f32.mrb[0].mxu0
        %v3792 = vadd.f32 %v3514, %v3791
        %v3793 = vpop.f32.mrb[0].mxu0
        %3794 = vmatprep.mubr.bf16.mxu0 0
        %3795 = vmatmul.mubr.bf16.gmra.mrb[0].mxu0 %v3543
        %v3796 = vpop.f32.mrb[0].mxu0
        %v3797 = vadd.f32 %v3514, %v3796
        %v3798 = vpop.f32.mrb[0].mxu0
        %v3799 = vpop.f32.mrb[0].mxu0
        %v3800 = vadd.f32 %v3514, %v3799
        %v3801 = vpop.f32.mrb[0].mxu0
        %3802 = vmatprep.mubr.bf16.mxu0 0
        %3803 = vmatmul.mubr.bf16.gmra.mrb[0].mxu0 %v3552
        %v3804 = vpop.f32.mrb[0].mxu0
        %v3805 = vadd.f32 %v3514, %v3804
        %v3806 = vpop.f32.mrb[0].mxu0
        %v3807 = vpop.f32.mrb[0].mxu0
        %v3808 = vadd.f32 %v3514, %v3807
        %v3809 = vpop.f32.mrb[0].mxu0
        %3810 = vmatprep.mubr.bf16.mxu0 0
        %3811 = vmatmul.mubr.bf16.gmra.mrb[0].mxu0 %v3561
        %v3812 = vpop.f32.mrb[0].mxu0
        %v3813 = vadd.f32 %v3514, %v3812
        %v3814 = vpop.f32.mrb[0].mxu0
        %v3815 = vpop.f32.mrb[0].mxu0
        %v3816 = vadd.f32 %v3514, %v3815
        %v3817 = vpop.f32.mrb[0].mxu0
        %3818 = vmatprep.mubr.bf16.mxu0 0
        %3819 = vmatmul.mubr.bf16.gmra.mrb[0].mxu0 %v3570
        %v3820 = vpop.f32.mrb[0].mxu0
        %v3821 = vadd.f32 %v3514, %v3820
        %v3822 = vpop.f32.mrb[0].mxu0
        %v3823 = vpop.f32.mrb[0].mxu0
        %v3824 = vadd.f32 %v3514, %v3823
        %v3825 = vpop.f32.mrb[0].mxu0
        %3826 = vmatprep.mubr.bf16.mxu0 0
        %3827 = vmatmul.mubr.bf16.gmra.mrb[0].mxu0 %v3579
        %v3828 = vpop.f32.mrb[0].mxu0
        %v3829 = vadd.f32 %v3514, %v3828
        %v3830 = vpop.f32.mrb[0].mxu0
        %v3831 = vpop.f32.mrb[0].mxu0
        %v3832 = vadd.f32 %v3514, %v3831
        %v3833 = vpop.f32.mrb[0].mxu0
        %3834 = vmatprep.mubr.bf16.mxu0 0
        %3835 = vmatmul.mubr.bf16.gmra.mrb[0].mxu0 %v3588
        %v3836 = vpop.f32.mrb[0].mxu0
        %v3837 = vadd.f32 %v3514, %v3836
        %v3838 = vpop.f32.mrb[0].mxu0
        %v3839 = vpop.f32.mrb[0].mxu0
        %v3840 = vadd.f32 %v3514, %v3839
        %v3841 = vpop.f32.mrb[0].mxu0
        %3842 = vmatprep.mubr.bf16.mxu0 0
        %3843 = vmatmul.mubr.bf16.gmra.mrb[0].mxu0 %v3597
        %v3844 = vpop.f32.mrb[0].mxu0
        %v3845 = vadd.f32 %v3514, %v3844
        %v3846 = vpop.f32.mrb[0].mxu0
        %v3847 = vpop.f32.mrb[0].mxu0
        %v3848 = vadd.f32 %v3514, %v3847
        %v3849 = vpop.f32.mrb[0].mxu0
        %3850 = vmatprep.mubr.bf16.mxu0 0
        %3851 = vmatmul.mubr.bf16.gmra.mrb[0].mxu0 %v3606
        %v3852 = vpop.f32.mrb[0].mxu0
        %v3853 = vadd.f32 %v3514, %v3852
        %v3854 = vpop.f32.mrb[0].mxu0
        %v3855 = vpop.f32.mrb[0].mxu0
        %v3856 = vadd.f32 %v3514, %v3855
        %v3857 = vpop.f32.mrb[0].mxu0
        %3858 = vmatprep.mubr.bf16.mxu0 0
        %3859 = vmatmul.mubr.bf16.gmra.mrb[0].mxu0 %v3615
        %v3860 = vpop.f32.mrb[0].mxu0
        %v3861 = vadd.f32 %v3514, %v3860
        %v3862 = vpop.f32.mrb[0].mxu0
        %v3863 = vpop.f32.mrb[0].mxu0
        %v3864 = vadd.f32 %v3514, %v3863
        %v3865 = vpop.f32.mrb[0].mxu0
        %3866 = vmatprep.mubr.bf16.mxu0 0
        %3867 = vmatmul.mubr.bf16.gmra.mrb[0].mxu0 %v3624
        %v3868 = vpop.f32.mrb[0].mxu0
        %v3869 = vadd.f32 %v3514, %v3868
        %v3870 = vpop.f32.mrb[0].mxu0
        %v3871 = vpop.f32.mrb[0].mxu0
        %v3872 = vadd.f32 %v3514, %v3871
        %v3873 = vpop.f32.mrb[0].mxu0
        %3874 = vmatprep.mubr.bf16.mxu0 0
        %3875 = vmatmul.mubr.bf16.gmra.mrb[0].mxu0 %v3633
        %v3876 = vpop.f32.mrb[0].mxu0
        %v3877 = vadd.f32 %v3514, %v3876
        %v3878 = vpop.f32.mrb[0].mxu0
        %v3879 = vpop.f32.mrb[0].mxu0
        %v3880 = vadd.f32 %v3514, %v3879
        %v3881 = vpop.f32.mrb[0].mxu0
        %3882 = vmatprep.mubr.bf16.mxu0 0
        %3883 = vmatmul.mubr.bf16.gmra.mrb[0].mxu0 %v3642
        %v3884 = vpop.f32.mrb[0].mxu0
        %v3885 = vadd.f32 %v3514, %v3884
        %v3886 = vpop.f32.mrb[0].mxu0
        %v3887 = vpop.f32.mrb[0].mxu0
        %v3888 = vadd.f32 %v3514, %v3887
        %v3889 = vpop.f32.mrb[0].mxu0
        %3890 = vmatprep.mubr.bf16.mxu0 0
        %3891 = vmatmul.mubr.bf16.gmra.mrb[0].mxu0 %v3651
        %v3892 = vpop.f32.mrb[0].mxu0
        %v3893 = vadd.f32 %v3514, %v3892
        %v3894 = vpop.f32.mrb[0].mxu0
        %v3895 = vpop.f32.mrb[0].mxu0
        %v3896 = vadd.f32 %v3514, %v3895
        %v3897 = vpop.f32.mrb[0].mxu0
        %3898 = vmatprep.mubr.bf16.mxu0 0
        %3899 = vmatmul.mubr.bf16.gmra.mrb[0].mxu0 %v3660
        %v3900 = vpop.f32.mrb[0].mxu0
        %v3901 = vadd.f32 %v3514, %v3900
        %v3902 = vpop.f32.mrb[0].mxu0
        %v3903 = vpop.f32.mrb[0].mxu0
        %v3904 = vadd.f32 %v3514, %v3903
        %v3905 = vpop.f32.mrb[0].mxu0
        %3906 = vmatprep.mubr.bf16.mxu0 0
        %3907 = vmatmul.mubr.bf16.gmra.mrb[0].mxu0 %v3669
        %v3908 = vpop.f32.mrb[0].mxu0
        %v3909 = vadd.f32 %v3514, %v3908
        %v3910 = vpop.f32.mrb[0].mxu0
        %v3911 = vpop.f32.mrb[0].mxu0
        %v3912 = vadd.f32 %v3514, %v3911
        %v3913 = vpop.f32.mrb[0].mxu0
        %3914 = vmatprep.mubr.bf16.mxu0 0
        %3915 = vmatmul.mubr.bf16.gmra.mrb[0].mxu0 %v3678
        %v3916 = vpop.f32.mrb[0].mxu0
        %v3917 = vadd.f32 %v3514, %v3916
        %v3918 = vpop.f32.mrb[0].mxu0
        %v3919 = vpop.f32.mrb[0].mxu0
        %v3920 = vadd.f32 %v3514, %v3919
        %v3921 = vpop.f32.mrb[0].mxu0
        %3922 = vmatprep.mubr.bf16.mxu0 0
        %3923 = vmatmul.mubr.bf16.gmra.mrb[0].mxu0 %v3687
        %v3924 = vpop.f32.mrb[0].mxu0
        %v3925 = vadd.f32 %v3514, %v3924
        %v3926 = vpop.f32.mrb[0].mxu0
        %v3927 = vpop.f32.mrb[0].mxu0
        %v3928 = vadd.f32 %v3514, %v3927
        %v3929 = vpop.f32.mrb[0].mxu0
        %3930 = vdwg.mxu0
        %v3931 = vadd.f32 %v3351, %v3789
        %v3932 = vadd.f32 %v3354, %v3792
        %v3933 = vadd.f32 %v3359, %v3797
        %v3934 = vadd.f32 %v3362, %v3800
        %v3935 = vadd.f32 %v3367, %v3805
        %v3936 = vadd.f32 %v3370, %v3808
        %v3937 = vadd.f32 %v3375, %v3813
        %v3938 = vadd.f32 %v3378, %v3816
        %v3939 = vadd.f32 %v3383, %v3821
        %v3940 = vadd.f32 %v3386, %v3824
        %v3941 = vadd.f32 %v3391, %v3829
        %v3942 = vadd.f32 %v3394, %v3832
        %v3943 = vadd.f32 %v3399, %v3837
        %v3944 = vadd.f32 %v3402, %v3840
        %v3945 = vadd.f32 %v3407, %v3845
        %v3946 = vadd.f32 %v3410, %v3848
        %v3947 = vadd.f32 %v3415, %v3853
        %v3948 = vadd.f32 %v3418, %v3856
        %v3949 = vadd.f32 %v3423, %v3861
        %v3950 = vadd.f32 %v3426, %v3864
        %v3951 = vadd.f32 %v3431, %v3869
        %v3952 = vadd.f32 %v3434, %v3872
        %v3953 = vadd.f32 %v3439, %v3877
        %v3954 = vadd.f32 %v3442, %v3880
        %v3955 = vadd.f32 %v3447, %v3885
        %v3956 = vadd.f32 %v3450, %v3888
        %v3957 = vadd.f32 %v3455, %v3893
        %v3958 = vadd.f32 %v3458, %v3896
        %v3959 = vadd.f32 %v3463, %v3901
        %v3960 = vadd.f32 %v3466, %v3904
        %v3961 = vadd.f32 %v3471, %v3909
        %v3962 = vadd.f32 %v3474, %v3912
        %v3963 = vadd.f32 %v3479, %v3917
        %v3964 = vadd.f32 %v3482, %v3920
        %v3965 = vadd.f32 %v3487, %v3925
        %v3966 = vadd.f32 %v3490, %v3928
        %v3967 = vmax.f32 %v3931, 0.0
        %v3968 = vmax.f32 %v3932, 0.0
        %v3969 = vmax.f32 %v3933, 0.0
        %v3970 = vmax.f32 %v3934, 0.0
        %v3971 = vmax.f32 %v3935, 0.0
        %v3972 = vmax.f32 %v3936, 0.0
        %v3973 = vmax.f32 %v3937, 0.0
        %v3974 = vmax.f32 %v3938, 0.0
        %v3975 = vmax.f32 %v3939, 0.0
        %v3976 = vmax.f32 %v3940, 0.0
        %v3977 = vmax.f32 %v3941, 0.0
        %v3978 = vmax.f32 %v3942, 0.0
        %v3979 = vmax.f32 %v3943, 0.0
        %v3980 = vmax.f32 %v3944, 0.0
        %v3981 = vmax.f32 %v3945, 0.0
        %v3982 = vmax.f32 %v3946, 0.0
        %v3983 = vmax.f32 %v3947, 0.0
        %v3984 = vmax.f32 %v3948, 0.0
        %v3985 = vmax.f32 %v3949, 0.0
        %v3986 = vmax.f32 %v3950, 0.0
        %v3987 = vmax.f32 %v3951, 0.0
        %v3988 = vmax.f32 %v3952, 0.0
        %v3989 = vmax.f32 %v3953, 0.0
        %v3990 = vmax.f32 %v3954, 0.0
        %v3991 = vmax.f32 %v3955, 0.0
        %v3992 = vmax.f32 %v3956, 0.0
        %v3993 = vmax.f32 %v3957, 0.0
        %v3994 = vmax.f32 %v3958, 0.0
        %v3995 = vmax.f32 %v3959, 0.0
        %v3996 = vmax.f32 %v3960, 0.0
        %v3997 = vmax.f32 %v3961, 0.0
        %v3998 = vmax.f32 %v3962, 0.0
        %v3999 = vmax.f32 %v3963, 0.0
        %v4000 = vmax.f32 %v3964, 0.0
        %v4001 = vmax.f32 %v3965, 0.0
        %v4002 = vmax.f32 %v3966, 0.0
        %v4003 = vpack.c.bf16 %v3968, %v3967
        %v4004 = vpack.c.bf16 %v3970, %v3969
        %v4005 = vpack.c.bf16 %v3972, %v3971
        %v4006 = vpack.c.bf16 %v3974, %v3973
        %v4007 = vpack.c.bf16 %v3976, %v3975
        %v4008 = vpack.c.bf16 %v3978, %v3977
        %v4009 = vpack.c.bf16 %v3980, %v3979
        %v4010 = vpack.c.bf16 %v3982, %v3981
        %v4011 = vpack.c.bf16 %v3984, %v3983
        %v4012 = vpack.c.bf16 %v3986, %v3985
        %v4013 = vpack.c.bf16 %v3988, %v3987
        %v4014 = vpack.c.bf16 %v3990, %v3989
        %v4015 = vpack.c.bf16 %v3992, %v3991
        %v4016 = vpack.c.bf16 %v3994, %v3993
        %v4017 = vpack.c.bf16 %v3996, %v3995
        %v4018 = vpack.c.bf16 %v3998, %v3997
        %v4019 = vpack.c.bf16 %v4000, %v3999
        %v4020 = vpack.c.bf16 %v4002, %v4001
        %v4039 = vcombine.high %v4003, %v4003
        %v4041 = vunpack.c.l.s4 1966171168
        %v4042 = vunpack.c.0.s8 %v4041
        %v4043 = vlaneseq
        %v4044 = vshrl.u32 %v4043, 7
        %v4045 = vsub.s32 %v4042, %v4044
        %v4046 = vrot.slane %v4003, %v4045
        %v4048 = vunpack.c.l.s4 1966171168
        %v4049 = vunpack.c.0.s8 %v4048
        %v4050 = vlaneseq
        %v4051 = vshrl.u32 %v4050, 7
        %v4052 = vsub.s32 %v4049, %v4051
        %v4053 = vrot.slane %v4039, %v4052
        %v4054 = vcombine.high %v4046, %v4046
        %v4055 = vcombine.high %v4053, %v4053
        %v4057 = vunpack.c.l.s4 1966171168
        %v4058 = vunpack.c.0.s8 %v4057
        %v4059 = vlaneseq
        %v4060 = vshrl.u32 %v4059, 7
        %v4061 = vsub.s32 %v4058, %v4060
        %v4062 = vrot.slane %v4046, %v4061
        %v4064 = vunpack.c.l.s4 1966171168
        %v4065 = vunpack.c.0.s8 %v4064
        %v4066 = vlaneseq
        %v4067 = vshrl.u32 %v4066, 7
        %v4068 = vsub.s32 %v4065, %v4067
        %v4069 = vrot.slane %v4053, %v4068
        %v4071 = vunpack.c.l.s4 1966171168
        %v4072 = vunpack.c.0.s8 %v4071
        %v4073 = vlaneseq
        %v4074 = vshrl.u32 %v4073, 7
        %v4075 = vsub.s32 %v4072, %v4074
        %v4076 = vrot.slane %v4054, %v4075
        %v4078 = vunpack.c.l.s4 1966171168
        %v4079 = vunpack.c.0.s8 %v4078
        %v4080 = vlaneseq
        %v4081 = vshrl.u32 %v4080, 7
        %v4082 = vsub.s32 %v4079, %v4081
        %v4083 = vrot.slane %v4055, %v4082
        %v4084 = vcombine.high %v4062, %v4062
        %v4085 = vcombine.high %v4069, %v4069
        %v4086 = vcombine.high %v4076, %v4076
        %v4087 = vcombine.high %v4083, %v4083
        %v4088 = vcombine.high %v4004, %v4004
        %v4090 = vunpack.c.l.s4 1966171168
        %v4091 = vunpack.c.0.s8 %v4090
        %v4092 = vlaneseq
        %v4093 = vshrl.u32 %v4092, 7
        %v4094 = vsub.s32 %v4091, %v4093
        %v4095 = vrot.slane %v4004, %v4094
        %v4097 = vunpack.c.l.s4 1966171168
        %v4098 = vunpack.c.0.s8 %v4097
        %v4099 = vlaneseq
        %v4100 = vshrl.u32 %v4099, 7
        %v4101 = vsub.s32 %v4098, %v4100
        %v4102 = vrot.slane %v4088, %v4101
        %v4103 = vcombine.high %v4095, %v4095
        %v4104 = vcombine.high %v4102, %v4102
        %v4106 = vunpack.c.l.s4 1966171168
        %v4107 = vunpack.c.0.s8 %v4106
        %v4108 = vlaneseq
        %v4109 = vshrl.u32 %v4108, 7
        %v4110 = vsub.s32 %v4107, %v4109
        %v4111 = vrot.slane %v4095, %v4110
        %v4113 = vunpack.c.l.s4 1966171168
        %v4114 = vunpack.c.0.s8 %v4113
        %v4115 = vlaneseq
        %v4116 = vshrl.u32 %v4115, 7
        %v4117 = vsub.s32 %v4114, %v4116
        %v4118 = vrot.slane %v4102, %v4117
        %v4120 = vunpack.c.l.s4 1966171168
        %v4121 = vunpack.c.0.s8 %v4120
        %v4122 = vlaneseq
        %v4123 = vshrl.u32 %v4122, 7
        %v4124 = vsub.s32 %v4121, %v4123
        %v4125 = vrot.slane %v4103, %v4124
        %v4127 = vunpack.c.l.s4 1966171168
        %v4128 = vunpack.c.0.s8 %v4127
        %v4129 = vlaneseq
        %v4130 = vshrl.u32 %v4129, 7
        %v4131 = vsub.s32 %v4128, %v4130
        %v4132 = vrot.slane %v4104, %v4131
        %v4133 = vcombine.high %v4111, %v4111
        %v4134 = vcombine.high %v4118, %v4118
        %v4135 = vcombine.high %v4125, %v4125
        %v4136 = vcombine.high %v4132, %v4132
        %v4137 = vcombine.high %v4005, %v4005
        %v4139 = vunpack.c.l.s4 1966171168
        %v4140 = vunpack.c.0.s8 %v4139
        %v4141 = vlaneseq
        %v4142 = vshrl.u32 %v4141, 7
        %v4143 = vsub.s32 %v4140, %v4142
        %v4144 = vrot.slane %v4005, %v4143
        %v4146 = vunpack.c.l.s4 1966171168
        %v4147 = vunpack.c.0.s8 %v4146
        %v4148 = vlaneseq
        %v4149 = vshrl.u32 %v4148, 7
        %v4150 = vsub.s32 %v4147, %v4149
        %v4151 = vrot.slane %v4137, %v4150
        %v4152 = vcombine.high %v4144, %v4144
        %v4153 = vcombine.high %v4151, %v4151
        %v4155 = vunpack.c.l.s4 1966171168
        %v4156 = vunpack.c.0.s8 %v4155
        %v4157 = vlaneseq
        %v4158 = vshrl.u32 %v4157, 7
        %v4159 = vsub.s32 %v4156, %v4158
        %v4160 = vrot.slane %v4144, %v4159
        %v4162 = vunpack.c.l.s4 1966171168
        %v4163 = vunpack.c.0.s8 %v4162
        %v4164 = vlaneseq
        %v4165 = vshrl.u32 %v4164, 7
        %v4166 = vsub.s32 %v4163, %v4165
        %v4167 = vrot.slane %v4151, %v4166
        %v4169 = vunpack.c.l.s4 1966171168
        %v4170 = vunpack.c.0.s8 %v4169
        %v4171 = vlaneseq
        %v4172 = vshrl.u32 %v4171, 7
        %v4173 = vsub.s32 %v4170, %v4172
        %v4174 = vrot.slane %v4152, %v4173
        %v4176 = vunpack.c.l.s4 1966171168
        %v4177 = vunpack.c.0.s8 %v4176
        %v4178 = vlaneseq
        %v4179 = vshrl.u32 %v4178, 7
        %v4180 = vsub.s32 %v4177, %v4179
        %v4181 = vrot.slane %v4153, %v4180
        %v4182 = vcombine.high %v4160, %v4160
        %v4183 = vcombine.high %v4167, %v4167
        %v4184 = vcombine.high %v4174, %v4174
        %v4185 = vcombine.high %v4181, %v4181
        %v4186 = vcombine.high %v4006, %v4006
        %v4188 = vunpack.c.l.s4 1966171168
        %v4189 = vunpack.c.0.s8 %v4188
        %v4190 = vlaneseq
        %v4191 = vshrl.u32 %v4190, 7
        %v4192 = vsub.s32 %v4189, %v4191
        %v4193 = vrot.slane %v4006, %v4192
        %v4195 = vunpack.c.l.s4 1966171168
        %v4196 = vunpack.c.0.s8 %v4195
        %v4197 = vlaneseq
        %v4198 = vshrl.u32 %v4197, 7
        %v4199 = vsub.s32 %v4196, %v4198
        %v4200 = vrot.slane %v4186, %v4199
        %v4201 = vcombine.high %v4193, %v4193
        %v4202 = vcombine.high %v4200, %v4200
        %v4204 = vunpack.c.l.s4 1966171168
        %v4205 = vunpack.c.0.s8 %v4204
        %v4206 = vlaneseq
        %v4207 = vshrl.u32 %v4206, 7
        %v4208 = vsub.s32 %v4205, %v4207
        %v4209 = vrot.slane %v4193, %v4208
        %v4211 = vunpack.c.l.s4 1966171168
        %v4212 = vunpack.c.0.s8 %v4211
        %v4213 = vlaneseq
        %v4214 = vshrl.u32 %v4213, 7
        %v4215 = vsub.s32 %v4212, %v4214
        %v4216 = vrot.slane %v4200, %v4215
        %v4218 = vunpack.c.l.s4 1966171168
        %v4219 = vunpack.c.0.s8 %v4218
        %v4220 = vlaneseq
        %v4221 = vshrl.u32 %v4220, 7
        %v4222 = vsub.s32 %v4219, %v4221
        %v4223 = vrot.slane %v4201, %v4222
        %v4225 = vunpack.c.l.s4 1966171168
        %v4226 = vunpack.c.0.s8 %v4225
        %v4227 = vlaneseq
        %v4228 = vshrl.u32 %v4227, 7
        %v4229 = vsub.s32 %v4226, %v4228
        %v4230 = vrot.slane %v4202, %v4229
        %v4231 = vcombine.high %v4216, %v4216
        %v4232 = vcombine.high %v4223, %v4223
        %v4233 = vcombine.high %v4230, %v4230
        %v4234 = vcombine.high %v4007, %v4007
        %v4236 = vunpack.c.l.s4 1966171168
        %v4237 = vunpack.c.0.s8 %v4236
        %v4238 = vlaneseq
        %v4239 = vshrl.u32 %v4238, 7
        %v4240 = vsub.s32 %v4237, %v4239
        %v4241 = vrot.slane %v4007, %v4240
        %v4243 = vunpack.c.l.s4 1966171168
        %v4244 = vunpack.c.0.s8 %v4243
        %v4245 = vlaneseq
        %v4246 = vshrl.u32 %v4245, 7
        %v4247 = vsub.s32 %v4244, %v4246
        %v4248 = vrot.slane %v4234, %v4247
        %v4249 = vcombine.high %v4241, %v4241
        %v4250 = vcombine.high %v4248, %v4248
        %v4252 = vunpack.c.l.s4 1966171168
        %v4253 = vunpack.c.0.s8 %v4252
        %v4254 = vlaneseq
        %v4255 = vshrl.u32 %v4254, 7
        %v4256 = vsub.s32 %v4253, %v4255
        %v4257 = vrot.slane %v4241, %v4256
        %v4259 = vunpack.c.l.s4 1966171168
        %v4260 = vunpack.c.0.s8 %v4259
        %v4261 = vlaneseq
        %v4262 = vshrl.u32 %v4261, 7
        %v4263 = vsub.s32 %v4260, %v4262
        %v4264 = vrot.slane %v4248, %v4263
        %v4266 = vunpack.c.l.s4 1966171168
        %v4267 = vunpack.c.0.s8 %v4266
        %v4268 = vlaneseq
        %v4269 = vshrl.u32 %v4268, 7
        %v4270 = vsub.s32 %v4267, %v4269
        %v4271 = vrot.slane %v4249, %v4270
        %v4273 = vunpack.c.l.s4 1966171168
        %v4274 = vunpack.c.0.s8 %v4273
        %v4275 = vlaneseq
        %v4276 = vshrl.u32 %v4275, 7
        %v4277 = vsub.s32 %v4274, %v4276
        %v4278 = vrot.slane %v4250, %v4277
        %v4279 = vcombine.high %v4257, %v4257
        %v4280 = vcombine.high %v4264, %v4264
        %v4281 = vcombine.high %v4278, %v4278
        %v4282 = vcombine.high %v4008, %v4008
        %v4284 = vunpack.c.l.s4 1966171168
        %v4285 = vunpack.c.0.s8 %v4284
        %v4286 = vlaneseq
        %v4287 = vshrl.u32 %v4286, 7
        %v4288 = vsub.s32 %v4285, %v4287
        %v4289 = vrot.slane %v4008, %v4288
        %v4291 = vunpack.c.l.s4 1966171168
        %v4292 = vunpack.c.0.s8 %v4291
        %v4293 = vlaneseq
        %v4294 = vshrl.u32 %v4293, 7
        %v4295 = vsub.s32 %v4292, %v4294
        %v4296 = vrot.slane %v4282, %v4295
        %v4297 = vcombine.high %v4289, %v4289
        %v4298 = vcombine.high %v4296, %v4296
        %v4300 = vunpack.c.l.s4 1966171168
        %v4301 = vunpack.c.0.s8 %v4300
        %v4302 = vlaneseq
        %v4303 = vshrl.u32 %v4302, 7
        %v4304 = vsub.s32 %v4301, %v4303
        %v4305 = vrot.slane %v4289, %v4304
        %v4307 = vunpack.c.l.s4 1966171168
        %v4308 = vunpack.c.0.s8 %v4307
        %v4309 = vlaneseq
        %v4310 = vshrl.u32 %v4309, 7
        %v4311 = vsub.s32 %v4308, %v4310
        %v4312 = vrot.slane %v4296, %v4311
        %v4314 = vunpack.c.l.s4 1966171168
        %v4315 = vunpack.c.0.s8 %v4314
        %v4316 = vlaneseq
        %v4317 = vshrl.u32 %v4316, 7
        %v4318 = vsub.s32 %v4315, %v4317
        %v4319 = vrot.slane %v4297, %v4318
        %v4321 = vunpack.c.l.s4 1966171168
        %v4322 = vunpack.c.0.s8 %v4321
        %v4323 = vlaneseq
        %v4324 = vshrl.u32 %v4323, 7
        %v4325 = vsub.s32 %v4322, %v4324
        %v4326 = vrot.slane %v4298, %v4325
        %v4327 = vcombine.high %v4305, %v4305
        %v4328 = vcombine.high %v4312, %v4312
        %v4329 = vcombine.high %v4319, %v4319
        %v4330 = vcombine.high %v4326, %v4326
        %v4331 = vcombine.high %v4009, %v4009
        %v4333 = vunpack.c.l.s4 1966171168
        %v4334 = vunpack.c.0.s8 %v4333
        %v4335 = vlaneseq
        %v4336 = vshrl.u32 %v4335, 7
        %v4337 = vsub.s32 %v4334, %v4336
        %v4338 = vrot.slane %v4009, %v4337
        %v4340 = vunpack.c.l.s4 1966171168
        %v4341 = vunpack.c.0.s8 %v4340
        %v4342 = vlaneseq
        %v4343 = vshrl.u32 %v4342, 7
        %v4344 = vsub.s32 %v4341, %v4343
        %v4345 = vrot.slane %v4331, %v4344
        %v4346 = vcombine.high %v4338, %v4338
        %v4347 = vcombine.high %v4345, %v4345
        %v4349 = vunpack.c.l.s4 1966171168
        %v4350 = vunpack.c.0.s8 %v4349
        %v4351 = vlaneseq
        %v4352 = vshrl.u32 %v4351, 7
        %v4353 = vsub.s32 %v4350, %v4352
        %v4354 = vrot.slane %v4338, %v4353
        %v4356 = vunpack.c.l.s4 1966171168
        %v4357 = vunpack.c.0.s8 %v4356
        %v4358 = vlaneseq
        %v4359 = vshrl.u32 %v4358, 7
        %v4360 = vsub.s32 %v4357, %v4359
        %v4361 = vrot.slane %v4345, %v4360
        %v4363 = vunpack.c.l.s4 1966171168
        %v4364 = vunpack.c.0.s8 %v4363
        %v4365 = vlaneseq
        %v4366 = vshrl.u32 %v4365, 7
        %v4367 = vsub.s32 %v4364, %v4366
        %v4368 = vrot.slane %v4346, %v4367
        %v4370 = vunpack.c.l.s4 1966171168
        %v4371 = vunpack.c.0.s8 %v4370
        %v4372 = vlaneseq
        %v4373 = vshrl.u32 %v4372, 7
        %v4374 = vsub.s32 %v4371, %v4373
        %v4375 = vrot.slane %v4347, %v4374
        %v4376 = vcombine.high %v4354, %v4354
        %v4377 = vcombine.high %v4361, %v4361
        %v4378 = vcombine.high %v4368, %v4368
        %v4379 = vcombine.high %v4375, %v4375
        %v4380 = vcombine.high %v4010, %v4010
        %v4382 = vunpack.c.l.s4 1966171168
        %v4383 = vunpack.c.0.s8 %v4382
        %v4384 = vlaneseq
        %v4385 = vshrl.u32 %v4384, 7
        %v4386 = vsub.s32 %v4383, %v4385
        %v4387 = vrot.slane %v4010, %v4386
        %v4389 = vunpack.c.l.s4 1966171168
        %v4390 = vunpack.c.0.s8 %v4389
        %v4391 = vlaneseq
        %v4392 = vshrl.u32 %v4391, 7
        %v4393 = vsub.s32 %v4390, %v4392
        %v4394 = vrot.slane %v4380, %v4393
        %v4395 = vcombine.high %v4387, %v4387
        %v4396 = vcombine.high %v4394, %v4394
        %v4398 = vunpack.c.l.s4 1966171168
        %v4399 = vunpack.c.0.s8 %v4398
        %v4400 = vlaneseq
        %v4401 = vshrl.u32 %v4400, 7
        %v4402 = vsub.s32 %v4399, %v4401
        %v4403 = vrot.slane %v4387, %v4402
        %v4405 = vunpack.c.l.s4 1966171168
        %v4406 = vunpack.c.0.s8 %v4405
        %v4407 = vlaneseq
        %v4408 = vshrl.u32 %v4407, 7
        %v4409 = vsub.s32 %v4406, %v4408
        %v4410 = vrot.slane %v4394, %v4409
        %v4412 = vunpack.c.l.s4 1966171168
        %v4413 = vunpack.c.0.s8 %v4412
        %v4414 = vlaneseq
        %v4415 = vshrl.u32 %v4414, 7
        %v4416 = vsub.s32 %v4413, %v4415
        %v4417 = vrot.slane %v4395, %v4416
        %v4419 = vunpack.c.l.s4 1966171168
        %v4420 = vunpack.c.0.s8 %v4419
        %v4421 = vlaneseq
        %v4422 = vshrl.u32 %v4421, 7
        %v4423 = vsub.s32 %v4420, %v4422
        %v4424 = vrot.slane %v4396, %v4423
        %v4425 = vcombine.high %v4403, %v4403
        %v4426 = vcombine.high %v4417, %v4417
        %v4427 = vcombine.high %v4424, %v4424
        %v4428 = vcombine.high %v4011, %v4011
        %v4430 = vunpack.c.l.s4 1966171168
        %v4431 = vunpack.c.0.s8 %v4430
        %v4432 = vlaneseq
        %v4433 = vshrl.u32 %v4432, 7
        %v4434 = vsub.s32 %v4431, %v4433
        %v4435 = vrot.slane %v4011, %v4434
        %v4437 = vunpack.c.l.s4 1966171168
        %v4438 = vunpack.c.0.s8 %v4437
        %v4439 = vlaneseq
        %v4440 = vshrl.u32 %v4439, 7
        %v4441 = vsub.s32 %v4438, %v4440
        %v4442 = vrot.slane %v4428, %v4441
        %v4443 = vcombine.high %v4435, %v4435
        %v4444 = vcombine.high %v4442, %v4442
        %v4446 = vunpack.c.l.s4 1966171168
        %v4447 = vunpack.c.0.s8 %v4446
        %v4448 = vlaneseq
        %v4449 = vshrl.u32 %v4448, 7
        %v4450 = vsub.s32 %v4447, %v4449
        %v4451 = vrot.slane %v4435, %v4450
        %v4453 = vunpack.c.l.s4 1966171168
        %v4454 = vunpack.c.0.s8 %v4453
        %v4455 = vlaneseq
        %v4456 = vshrl.u32 %v4455, 7
        %v4457 = vsub.s32 %v4454, %v4456
        %v4458 = vrot.slane %v4442, %v4457
        %v4460 = vunpack.c.l.s4 1966171168
        %v4461 = vunpack.c.0.s8 %v4460
        %v4462 = vlaneseq
        %v4463 = vshrl.u32 %v4462, 7
        %v4464 = vsub.s32 %v4461, %v4463
        %v4465 = vrot.slane %v4443, %v4464
        %v4467 = vunpack.c.l.s4 1966171168
        %v4468 = vunpack.c.0.s8 %v4467
        %v4469 = vlaneseq
        %v4470 = vshrl.u32 %v4469, 7
        %v4471 = vsub.s32 %v4468, %v4470
        %v4472 = vrot.slane %v4444, %v4471
        %v4473 = vcombine.high %v4451, %v4451
        %v4474 = vcombine.high %v4458, %v4458
        %v4475 = vcombine.high %v4465, %v4465
        %v4476 = vcombine.high %v4012, %v4012
        %v4478 = vunpack.c.l.s4 1966171168
        %v4479 = vunpack.c.0.s8 %v4478
        %v4480 = vlaneseq
        %v4481 = vshrl.u32 %v4480, 7
        %v4482 = vsub.s32 %v4479, %v4481
        %v4483 = vrot.slane %v4012, %v4482
        %v4485 = vunpack.c.l.s4 1966171168
        %v4486 = vunpack.c.0.s8 %v4485
        %v4487 = vlaneseq
        %v4488 = vshrl.u32 %v4487, 7
        %v4489 = vsub.s32 %v4486, %v4488
        %v4490 = vrot.slane %v4476, %v4489
        %v4491 = vcombine.high %v4483, %v4483
        %v4492 = vcombine.high %v4490, %v4490
        %v4494 = vunpack.c.l.s4 1966171168
        %v4495 = vunpack.c.0.s8 %v4494
        %v4496 = vlaneseq
        %v4497 = vshrl.u32 %v4496, 7
        %v4498 = vsub.s32 %v4495, %v4497
        %v4499 = vrot.slane %v4483, %v4498
        %v4501 = vunpack.c.l.s4 1966171168
        %v4502 = vunpack.c.0.s8 %v4501
        %v4503 = vlaneseq
        %v4504 = vshrl.u32 %v4503, 7
        %v4505 = vsub.s32 %v4502, %v4504
        %v4506 = vrot.slane %v4490, %v4505
        %v4508 = vunpack.c.l.s4 1966171168
        %v4509 = vunpack.c.0.s8 %v4508
        %v4510 = vlaneseq
        %v4511 = vshrl.u32 %v4510, 7
        %v4512 = vsub.s32 %v4509, %v4511
        %v4513 = vrot.slane %v4491, %v4512
        %v4515 = vunpack.c.l.s4 1966171168
        %v4516 = vunpack.c.0.s8 %v4515
        %v4517 = vlaneseq
        %v4518 = vshrl.u32 %v4517, 7
        %v4519 = vsub.s32 %v4516, %v4518
        %v4520 = vrot.slane %v4492, %v4519
        %v4521 = vcombine.high %v4499, %v4499
        %v4522 = vcombine.high %v4506, %v4506
        %v4523 = vcombine.high %v4513, %v4513
        %v4524 = vcombine.high %v4520, %v4520
        %v4525 = vcombine.high %v4013, %v4013
        %v4527 = vunpack.c.l.s4 1966171168
        %v4528 = vunpack.c.0.s8 %v4527
        %v4529 = vlaneseq
        %v4530 = vshrl.u32 %v4529, 7
        %v4531 = vsub.s32 %v4528, %v4530
        %v4532 = vrot.slane %v4013, %v4531
        %v4534 = vunpack.c.l.s4 1966171168
        %v4535 = vunpack.c.0.s8 %v4534
        %v4536 = vlaneseq
        %v4537 = vshrl.u32 %v4536, 7
        %v4538 = vsub.s32 %v4535, %v4537
        %v4539 = vrot.slane %v4525, %v4538
        %v4540 = vcombine.high %v4532, %v4532
        %v4541 = vcombine.high %v4539, %v4539
        %v4543 = vunpack.c.l.s4 1966171168
        %v4544 = vunpack.c.0.s8 %v4543
        %v4545 = vlaneseq
        %v4546 = vshrl.u32 %v4545, 7
        %v4547 = vsub.s32 %v4544, %v4546
        %v4548 = vrot.slane %v4532, %v4547
        %v4550 = vunpack.c.l.s4 1966171168
        %v4551 = vunpack.c.0.s8 %v4550
        %v4552 = vlaneseq
        %v4553 = vshrl.u32 %v4552, 7
        %v4554 = vsub.s32 %v4551, %v4553
        %v4555 = vrot.slane %v4539, %v4554
        %v4557 = vunpack.c.l.s4 1966171168
        %v4558 = vunpack.c.0.s8 %v4557
        %v4559 = vlaneseq
        %v4560 = vshrl.u32 %v4559, 7
        %v4561 = vsub.s32 %v4558, %v4560
        %v4562 = vrot.slane %v4540, %v4561
        %v4564 = vunpack.c.l.s4 1966171168
        %v4565 = vunpack.c.0.s8 %v4564
        %v4566 = vlaneseq
        %v4567 = vshrl.u32 %v4566, 7
        %v4568 = vsub.s32 %v4565, %v4567
        %v4569 = vrot.slane %v4541, %v4568
        %v4570 = vcombine.high %v4548, %v4548
        %v4571 = vcombine.high %v4555, %v4555
        %v4572 = vcombine.high %v4562, %v4562
        %v4573 = vcombine.high %v4569, %v4569
        %v4574 = vcombine.high %v4014, %v4014
        %v4576 = vunpack.c.l.s4 1966171168
        %v4577 = vunpack.c.0.s8 %v4576
        %v4578 = vlaneseq
        %v4579 = vshrl.u32 %v4578, 7
        %v4580 = vsub.s32 %v4577, %v4579
        %v4581 = vrot.slane %v4014, %v4580
        %v4583 = vunpack.c.l.s4 1966171168
        %v4584 = vunpack.c.0.s8 %v4583
        %v4585 = vlaneseq
        %v4586 = vshrl.u32 %v4585, 7
        %v4587 = vsub.s32 %v4584, %v4586
        %v4588 = vrot.slane %v4574, %v4587
        %v4589 = vcombine.high %v4581, %v4581
        %v4590 = vcombine.high %v4588, %v4588
        %v4592 = vunpack.c.l.s4 1966171168
        %v4593 = vunpack.c.0.s8 %v4592
        %v4594 = vlaneseq
        %v4595 = vshrl.u32 %v4594, 7
        %v4596 = vsub.s32 %v4593, %v4595
        %v4597 = vrot.slane %v4581, %v4596
        %v4599 = vunpack.c.l.s4 1966171168
        %v4600 = vunpack.c.0.s8 %v4599
        %v4601 = vlaneseq
        %v4602 = vshrl.u32 %v4601, 7
        %v4603 = vsub.s32 %v4600, %v4602
        %v4604 = vrot.slane %v4588, %v4603
        %v4606 = vunpack.c.l.s4 1966171168
        %v4607 = vunpack.c.0.s8 %v4606
        %v4608 = vlaneseq
        %v4609 = vshrl.u32 %v4608, 7
        %v4610 = vsub.s32 %v4607, %v4609
        %v4611 = vrot.slane %v4589, %v4610
        %v4613 = vunpack.c.l.s4 1966171168
        %v4614 = vunpack.c.0.s8 %v4613
        %v4615 = vlaneseq
        %v4616 = vshrl.u32 %v4615, 7
        %v4617 = vsub.s32 %v4614, %v4616
        %v4618 = vrot.slane %v4590, %v4617
        %v4619 = vcombine.high %v4597, %v4597
        %v4620 = vcombine.high %v4604, %v4604
        %v4621 = vcombine.high %v4611, %v4611
        %v4622 = vcombine.high %v4618, %v4618
        %v4623 = vcombine.high %v4015, %v4015
        %v4625 = vunpack.c.l.s4 1966171168
        %v4626 = vunpack.c.0.s8 %v4625
        %v4627 = vlaneseq
        %v4628 = vshrl.u32 %v4627, 7
        %v4629 = vsub.s32 %v4626, %v4628
        %v4630 = vrot.slane %v4015, %v4629
        %v4632 = vunpack.c.l.s4 1966171168
        %v4633 = vunpack.c.0.s8 %v4632
        %v4634 = vlaneseq
        %v4635 = vshrl.u32 %v4634, 7
        %v4636 = vsub.s32 %v4633, %v4635
        %v4637 = vrot.slane %v4623, %v4636
        %v4638 = vcombine.high %v4630, %v4630
        %v4639 = vcombine.high %v4637, %v4637
        %v4641 = vunpack.c.l.s4 1966171168
        %v4642 = vunpack.c.0.s8 %v4641
        %v4643 = vlaneseq
        %v4644 = vshrl.u32 %v4643, 7
        %v4645 = vsub.s32 %v4642, %v4644
        %v4646 = vrot.slane %v4630, %v4645
        %v4648 = vunpack.c.l.s4 1966171168
        %v4649 = vunpack.c.0.s8 %v4648
        %v4650 = vlaneseq
        %v4651 = vshrl.u32 %v4650, 7
        %v4652 = vsub.s32 %v4649, %v4651
        %v4653 = vrot.slane %v4637, %v4652
        %v4655 = vunpack.c.l.s4 1966171168
        %v4656 = vunpack.c.0.s8 %v4655
        %v4657 = vlaneseq
        %v4658 = vshrl.u32 %v4657, 7
        %v4659 = vsub.s32 %v4656, %v4658
        %v4660 = vrot.slane %v4638, %v4659
        %v4662 = vunpack.c.l.s4 1966171168
        %v4663 = vunpack.c.0.s8 %v4662
        %v4664 = vlaneseq
        %v4665 = vshrl.u32 %v4664, 7
        %v4666 = vsub.s32 %v4663, %v4665
        %v4667 = vrot.slane %v4639, %v4666
        %v4668 = vcombine.high %v4653, %v4653
        %v4669 = vcombine.high %v4660, %v4660
        %v4670 = vcombine.high %v4667, %v4667
        %v4671 = vcombine.high %v4016, %v4016
        %v4673 = vunpack.c.l.s4 1966171168
        %v4674 = vunpack.c.0.s8 %v4673
        %v4675 = vlaneseq
        %v4676 = vshrl.u32 %v4675, 7
        %v4677 = vsub.s32 %v4674, %v4676
        %v4678 = vrot.slane %v4016, %v4677
        %v4680 = vunpack.c.l.s4 1966171168
        %v4681 = vunpack.c.0.s8 %v4680
        %v4682 = vlaneseq
        %v4683 = vshrl.u32 %v4682, 7
        %v4684 = vsub.s32 %v4681, %v4683
        %v4685 = vrot.slane %v4671, %v4684
        %v4686 = vcombine.high %v4678, %v4678
        %v4687 = vcombine.high %v4685, %v4685
        %v4689 = vunpack.c.l.s4 1966171168
        %v4690 = vunpack.c.0.s8 %v4689
        %v4691 = vlaneseq
        %v4692 = vshrl.u32 %v4691, 7
        %v4693 = vsub.s32 %v4690, %v4692
        %v4694 = vrot.slane %v4678, %v4693
        %v4696 = vunpack.c.l.s4 1966171168
        %v4697 = vunpack.c.0.s8 %v4696
        %v4698 = vlaneseq
        %v4699 = vshrl.u32 %v4698, 7
        %v4700 = vsub.s32 %v4697, %v4699
        %v4701 = vrot.slane %v4685, %v4700
        %v4703 = vunpack.c.l.s4 1966171168
        %v4704 = vunpack.c.0.s8 %v4703
        %v4705 = vlaneseq
        %v4706 = vshrl.u32 %v4705, 7
        %v4707 = vsub.s32 %v4704, %v4706
        %v4708 = vrot.slane %v4686, %v4707
        %v4710 = vunpack.c.l.s4 1966171168
        %v4711 = vunpack.c.0.s8 %v4710
        %v4712 = vlaneseq
        %v4713 = vshrl.u32 %v4712, 7
        %v4714 = vsub.s32 %v4711, %v4713
        %v4715 = vrot.slane %v4687, %v4714
        %v4716 = vcombine.high %v4694, %v4694
        %v4717 = vcombine.high %v4701, %v4701
        %v4718 = vcombine.high %v4715, %v4715
        %v4719 = vcombine.high %v4017, %v4017
        %v4721 = vunpack.c.l.s4 1966171168
        %v4722 = vunpack.c.0.s8 %v4721
        %v4723 = vlaneseq
        %v4724 = vshrl.u32 %v4723, 7
        %v4725 = vsub.s32 %v4722, %v4724
        %v4726 = vrot.slane %v4017, %v4725
        %v4728 = vunpack.c.l.s4 1966171168
        %v4729 = vunpack.c.0.s8 %v4728
        %v4730 = vlaneseq
        %v4731 = vshrl.u32 %v4730, 7
        %v4732 = vsub.s32 %v4729, %v4731
        %v4733 = vrot.slane %v4719, %v4732
        %v4734 = vcombine.high %v4726, %v4726
        %v4735 = vcombine.high %v4733, %v4733
        %v4737 = vunpack.c.l.s4 1966171168
        %v4738 = vunpack.c.0.s8 %v4737
        %v4739 = vlaneseq
        %v4740 = vshrl.u32 %v4739, 7
        %v4741 = vsub.s32 %v4738, %v4740
        %v4742 = vrot.slane %v4726, %v4741
        %v4744 = vunpack.c.l.s4 1966171168
        %v4745 = vunpack.c.0.s8 %v4744
        %v4746 = vlaneseq
        %v4747 = vshrl.u32 %v4746, 7
        %v4748 = vsub.s32 %v4745, %v4747
        %v4749 = vrot.slane %v4733, %v4748
        %v4751 = vunpack.c.l.s4 1966171168
        %v4752 = vunpack.c.0.s8 %v4751
        %v4753 = vlaneseq
        %v4754 = vshrl.u32 %v4753, 7
        %v4755 = vsub.s32 %v4752, %v4754
        %v4756 = vrot.slane %v4734, %v4755
        %v4758 = vunpack.c.l.s4 1966171168
        %v4759 = vunpack.c.0.s8 %v4758
        %v4760 = vlaneseq
        %v4761 = vshrl.u32 %v4760, 7
        %v4762 = vsub.s32 %v4759, %v4761
        %v4763 = vrot.slane %v4735, %v4762
        %v4764 = vcombine.high %v4742, %v4742
        %v4765 = vcombine.high %v4749, %v4749
        %v4766 = vcombine.high %v4756, %v4756
        %v4767 = vcombine.high %v4763, %v4763
        %v4768 = vcombine.high %v4018, %v4018
        %v4770 = vunpack.c.l.s4 1966171168
        %v4771 = vunpack.c.0.s8 %v4770
        %v4772 = vlaneseq
        %v4773 = vshrl.u32 %v4772, 7
        %v4774 = vsub.s32 %v4771, %v4773
        %v4775 = vrot.slane %v4018, %v4774
        %v4777 = vunpack.c.l.s4 1966171168
        %v4778 = vunpack.c.0.s8 %v4777
        %v4779 = vlaneseq
        %v4780 = vshrl.u32 %v4779, 7
        %v4781 = vsub.s32 %v4778, %v4780
        %v4782 = vrot.slane %v4768, %v4781
        %v4783 = vcombine.high %v4775, %v4775
        %v4784 = vcombine.high %v4782, %v4782
        %v4786 = vunpack.c.l.s4 1966171168
        %v4787 = vunpack.c.0.s8 %v4786
        %v4788 = vlaneseq
        %v4789 = vshrl.u32 %v4788, 7
        %v4790 = vsub.s32 %v4787, %v4789
        %v4791 = vrot.slane %v4775, %v4790
        %v4793 = vunpack.c.l.s4 1966171168
        %v4794 = vunpack.c.0.s8 %v4793
        %v4795 = vlaneseq
        %v4796 = vshrl.u32 %v4795, 7
        %v4797 = vsub.s32 %v4794, %v4796
        %v4798 = vrot.slane %v4782, %v4797
        %v4800 = vunpack.c.l.s4 1966171168
        %v4801 = vunpack.c.0.s8 %v4800
        %v4802 = vlaneseq
        %v4803 = vshrl.u32 %v4802, 7
        %v4804 = vsub.s32 %v4801, %v4803
        %v4805 = vrot.slane %v4783, %v4804
        %v4807 = vunpack.c.l.s4 1966171168
        %v4808 = vunpack.c.0.s8 %v4807
        %v4809 = vlaneseq
        %v4810 = vshrl.u32 %v4809, 7
        %v4811 = vsub.s32 %v4808, %v4810
        %v4812 = vrot.slane %v4784, %v4811
        %v4813 = vcombine.high %v4791, %v4791
        %v4814 = vcombine.high %v4798, %v4798
        %v4815 = vcombine.high %v4805, %v4805
        %v4816 = vcombine.high %v4812, %v4812
        %v4817 = vcombine.high %v4019, %v4019
        %v4819 = vunpack.c.l.s4 1966171168
        %v4820 = vunpack.c.0.s8 %v4819
        %v4821 = vlaneseq
        %v4822 = vshrl.u32 %v4821, 7
        %v4823 = vsub.s32 %v4820, %v4822
        %v4824 = vrot.slane %v4019, %v4823
        %v4826 = vunpack.c.l.s4 1966171168
        %v4827 = vunpack.c.0.s8 %v4826
        %v4828 = vlaneseq
        %v4829 = vshrl.u32 %v4828, 7
        %v4830 = vsub.s32 %v4827, %v4829
        %v4831 = vrot.slane %v4817, %v4830
        %v4832 = vcombine.high %v4824, %v4824
        %v4833 = vcombine.high %v4831, %v4831
        %v4835 = vunpack.c.l.s4 1966171168
        %v4836 = vunpack.c.0.s8 %v4835
        %v4837 = vlaneseq
        %v4838 = vshrl.u32 %v4837, 7
        %v4839 = vsub.s32 %v4836, %v4838
        %v4840 = vrot.slane %v4824, %v4839
        %v4842 = vunpack.c.l.s4 1966171168
        %v4843 = vunpack.c.0.s8 %v4842
        %v4844 = vlaneseq
        %v4845 = vshrl.u32 %v4844, 7
        %v4846 = vsub.s32 %v4843, %v4845
        %v4847 = vrot.slane %v4831, %v4846
        %v4849 = vunpack.c.l.s4 1966171168
        %v4850 = vunpack.c.0.s8 %v4849
        %v4851 = vlaneseq
        %v4852 = vshrl.u32 %v4851, 7
        %v4853 = vsub.s32 %v4850, %v4852
        %v4854 = vrot.slane %v4832, %v4853
        %v4856 = vunpack.c.l.s4 1966171168
        %v4857 = vunpack.c.0.s8 %v4856
        %v4858 = vlaneseq
        %v4859 = vshrl.u32 %v4858, 7
        %v4860 = vsub.s32 %v4857, %v4859
        %v4861 = vrot.slane %v4833, %v4860
        %v4862 = vcombine.high %v4840, %v4840
        %v4863 = vcombine.high %v4854, %v4854
        %v4864 = vcombine.high %v4861, %v4861
        %v4865 = vcombine.high %v4020, %v4020
        %v4867 = vunpack.c.l.s4 1966171168
        %v4868 = vunpack.c.0.s8 %v4867
        %v4869 = vlaneseq
        %v4870 = vshrl.u32 %v4869, 7
        %v4871 = vsub.s32 %v4868, %v4870
        %v4872 = vrot.slane %v4020, %v4871
        %v4874 = vunpack.c.l.s4 1966171168
        %v4875 = vunpack.c.0.s8 %v4874
        %v4876 = vlaneseq
        %v4877 = vshrl.u32 %v4876, 7
        %v4878 = vsub.s32 %v4875, %v4877
        %v4879 = vrot.slane %v4865, %v4878
        %v4880 = vcombine.high %v4872, %v4872
        %v4881 = vcombine.high %v4879, %v4879
        %v4883 = vunpack.c.l.s4 1966171168
        %v4884 = vunpack.c.0.s8 %v4883
        %v4885 = vlaneseq
        %v4886 = vshrl.u32 %v4885, 7
        %v4887 = vsub.s32 %v4884, %v4886
        %v4888 = vrot.slane %v4872, %v4887
        %v4890 = vunpack.c.l.s4 1966171168
        %v4891 = vunpack.c.0.s8 %v4890
        %v4892 = vlaneseq
        %v4893 = vshrl.u32 %v4892, 7
        %v4894 = vsub.s32 %v4891, %v4893
        %v4895 = vrot.slane %v4879, %v4894
        %v4897 = vunpack.c.l.s4 1966171168
        %v4898 = vunpack.c.0.s8 %v4897
        %v4899 = vlaneseq
        %v4900 = vshrl.u32 %v4899, 7
        %v4901 = vsub.s32 %v4898, %v4900
        %v4902 = vrot.slane %v4880, %v4901
        %v4904 = vunpack.c.l.s4 1966171168
        %v4905 = vunpack.c.0.s8 %v4904
        %v4906 = vlaneseq
        %v4907 = vshrl.u32 %v4906, 7
        %v4908 = vsub.s32 %v4905, %v4907
        %v4909 = vrot.slane %v4881, %v4908
        %v4910 = vcombine.high %v4888, %v4888
        %v4911 = vcombine.high %v4895, %v4895
        %v4912 = vcombine.high %v4902, %v4902
        %v4913 = vcombine.low %v4062, %v4084
        %v4914 = vcombine.low %v4076, %v4086
        %v4916 = vunpack.c.l.s4 1935823168
        %v4917 = vunpack.c.0.s8 %v4916
        %v4918 = vlaneseq
        %v4919 = vshrl.u32 %v4918, 7
        %v4920 = vsub.s32 %v4917, %v4919
        %v4921 = vrot.slane %v4913, %v4920
        %v4923 = vunpack.c.l.s4 1935823168
        %v4924 = vunpack.c.0.s8 %v4923
        %v4925 = vlaneseq
        %v4926 = vshrl.u32 %v4925, 7
        %v4927 = vsub.s32 %v4924, %v4926
        %v4928 = vrot.slane %v4914, %v4927
        %v4929 = vcombine.low %v4921, %v4928
        %v4931 = vunpack.c.l.s4 1935823168
        %v4932 = vunpack.c.0.s8 %v4931
        %v4933 = vlaneseq
        %v4934 = vshrl.u32 %v4933, 7
        %v4935 = vsub.s32 %v4932, %v4934
        %v4936 = vrot.slane %v4929, %v4935
        %v4937 = vcombine.low %v4069, %v4085
        %v4938 = vcombine.low %v4083, %v4087
        %v4940 = vunpack.c.l.s4 1935823168
        %v4941 = vunpack.c.0.s8 %v4940
        %v4942 = vlaneseq
        %v4943 = vshrl.u32 %v4942, 7
        %v4944 = vsub.s32 %v4941, %v4943
        %v4945 = vrot.slane %v4937, %v4944
        %v4947 = vunpack.c.l.s4 1935823168
        %v4948 = vunpack.c.0.s8 %v4947
        %v4949 = vlaneseq
        %v4950 = vshrl.u32 %v4949, 7
        %v4951 = vsub.s32 %v4948, %v4950
        %v4952 = vrot.slane %v4938, %v4951
        %v4953 = vcombine.low %v4945, %v4952
        %v4955 = vunpack.c.l.s4 1935823168
        %v4956 = vunpack.c.0.s8 %v4955
        %v4957 = vlaneseq
        %v4958 = vshrl.u32 %v4957, 7
        %v4959 = vsub.s32 %v4956, %v4958
        %v4960 = vrot.slane %v4953, %v4959
        %v4961 = vcombine.low %v4125, %v4135
        %v4962 = vcombine.low %v4133, %v4118
        %v4964 = vunpack.c.l.s4 1935823168
        %v4965 = vunpack.c.0.s8 %v4964
        %v4966 = vlaneseq
        %v4967 = vshrl.u32 %v4966, 7
        %v4968 = vsub.s32 %v4965, %v4967
        %v4969 = vrot.slane %v4961, %v4968
        %v4971 = vunpack.c.l.s4 1935823168
        %v4972 = vunpack.c.0.s8 %v4971
        %v4973 = vlaneseq
        %v4974 = vshrl.u32 %v4973, 7
        %v4975 = vsub.s32 %v4972, %v4974
        %v4976 = vrot.slane %v4962, %v4975
        %v4977 = vcombine.low %v4969, %v4976
        %v4979 = vunpack.c.l.s4 1935823168
        %v4980 = vunpack.c.0.s8 %v4979
        %v4981 = vlaneseq
        %v4982 = vshrl.u32 %v4981, 7
        %v4983 = vsub.s32 %v4980, %v4982
        %v4984 = vrot.slane %v4977, %v4983
        %v4985 = vcombine.low %v4132, %v4136
        %v4986 = vcombine.low %v4134, %v4160
        %v4988 = vunpack.c.l.s4 1935823168
        %v4989 = vunpack.c.0.s8 %v4988
        %v4990 = vlaneseq
        %v4991 = vshrl.u32 %v4990, 7
        %v4992 = vsub.s32 %v4989, %v4991
        %v4993 = vrot.slane %v4985, %v4992
        %v4995 = vunpack.c.l.s4 1935823168
        %v4996 = vunpack.c.0.s8 %v4995
        %v4997 = vlaneseq
        %v4998 = vshrl.u32 %v4997, 7
        %v4999 = vsub.s32 %v4996, %v4998
        %v5000 = vrot.slane %v4986, %v4999
        %v5001 = vcombine.low %v4993, %v5000
        %v5003 = vunpack.c.l.s4 1935823168
        %v5004 = vunpack.c.0.s8 %v5003
        %v5005 = vlaneseq
        %v5006 = vshrl.u32 %v5005, 7
        %v5007 = vsub.s32 %v5004, %v5006
        %v5008 = vrot.slane %v5001, %v5007
        %v5009 = vcombine.low %v4182, %v4167
        %v5010 = vcombine.low %v4184, %v4181
        %v5012 = vunpack.c.l.s4 1935823168
        %v5013 = vunpack.c.0.s8 %v5012
        %v5014 = vlaneseq
        %v5015 = vshrl.u32 %v5014, 7
        %v5016 = vsub.s32 %v5013, %v5015
        %v5017 = vrot.slane %v5009, %v5016
        %v5019 = vunpack.c.l.s4 1935823168
        %v5020 = vunpack.c.0.s8 %v5019
        %v5021 = vlaneseq
        %v5022 = vshrl.u32 %v5021, 7
        %v5023 = vsub.s32 %v5020, %v5022
        %v5024 = vrot.slane %v5010, %v5023
        %v5025 = vcombine.low %v5017, %v5024
        %v5027 = vunpack.c.l.s4 1935823168
        %v5028 = vunpack.c.0.s8 %v5027
        %v5029 = vlaneseq
        %v5030 = vshrl.u32 %v5029, 7
        %v5031 = vsub.s32 %v5028, %v5030
        %v5032 = vrot.slane %v5025, %v5031
        %v5033 = vcombine.low %v4183, %v4209
        %v5034 = vcombine.low %v4185, %v4223
        %v5036 = vunpack.c.l.s4 1935823168
        %v5037 = vunpack.c.0.s8 %v5036
        %v5038 = vlaneseq
        %v5039 = vshrl.u32 %v5038, 7
        %v5040 = vsub.s32 %v5037, %v5039
        %v5041 = vrot.slane %v5033, %v5040
        %v5043 = vunpack.c.l.s4 1935823168
        %v5044 = vunpack.c.0.s8 %v5043
        %v5045 = vlaneseq
        %v5046 = vshrl.u32 %v5045, 7
        %v5047 = vsub.s32 %v5044, %v5046
        %v5048 = vrot.slane %v5034, %v5047
        %v5049 = vcombine.low %v5041, %v5048
        %v5051 = vunpack.c.l.s4 1935823168
        %v5052 = vunpack.c.0.s8 %v5051
        %v5053 = vlaneseq
        %v5054 = vshrl.u32 %v5053, 7
        %v5055 = vsub.s32 %v5052, %v5054
        %v5056 = vrot.slane %v5049, %v5055
        %v5057 = vcombine.low %v4232, %v4230
        %v5058 = vcombine.low %v4216, %v4231
        %v5060 = vunpack.c.l.s4 1935823168
        %v5061 = vunpack.c.0.s8 %v5060
        %v5062 = vlaneseq
        %v5063 = vshrl.u32 %v5062, 7
        %v5064 = vsub.s32 %v5061, %v5063
        %v5065 = vrot.slane %v5057, %v5064
        %v5067 = vunpack.c.l.s4 1935823168
        %v5068 = vunpack.c.0.s8 %v5067
        %v5069 = vlaneseq
        %v5070 = vshrl.u32 %v5069, 7
        %v5071 = vsub.s32 %v5068, %v5070
        %v5072 = vrot.slane %v5058, %v5071
        %v5073 = vcombine.low %v5065, %v5072
        %v5075 = vunpack.c.l.s4 1935823168
        %v5076 = vunpack.c.0.s8 %v5075
        %v5077 = vlaneseq
        %v5078 = vshrl.u32 %v5077, 7
        %v5079 = vsub.s32 %v5076, %v5078
        %v5080 = vrot.slane %v5073, %v5079
        %v5081 = vcombine.low %v4233, %v4271
        %v5082 = vcombine.low %v4257, %v4279
        %v5084 = vunpack.c.l.s4 1935823168
        %v5085 = vunpack.c.0.s8 %v5084
        %v5086 = vlaneseq
        %v5087 = vshrl.u32 %v5086, 7
        %v5088 = vsub.s32 %v5085, %v5087
        %v5089 = vrot.slane %v5081, %v5088
        %v5091 = vunpack.c.l.s4 1935823168
        %v5092 = vunpack.c.0.s8 %v5091
        %v5093 = vlaneseq
        %v5094 = vshrl.u32 %v5093, 7
        %v5095 = vsub.s32 %v5092, %v5094
        %v5096 = vrot.slane %v5082, %v5095
        %v5097 = vcombine.low %v5089, %v5096
        %v5099 = vunpack.c.l.s4 1935823168
        %v5100 = vunpack.c.0.s8 %v5099
        %v5101 = vlaneseq
        %v5102 = vshrl.u32 %v5101, 7
        %v5103 = vsub.s32 %v5100, %v5102
        %v5104 = vrot.slane %v5097, %v5103
        %v5105 = vcombine.low %v4264, %v4280
        %v5106 = vcombine.low %v4278, %v4281
        %v5108 = vunpack.c.l.s4 1935823168
        %v5109 = vunpack.c.0.s8 %v5108
        %v5110 = vlaneseq
        %v5111 = vshrl.u32 %v5110, 7
        %v5112 = vsub.s32 %v5109, %v5111
        %v5113 = vrot.slane %v5105, %v5112
        %v5115 = vunpack.c.l.s4 1935823168
        %v5116 = vunpack.c.0.s8 %v5115
        %v5117 = vlaneseq
        %v5118 = vshrl.u32 %v5117, 7
        %v5119 = vsub.s32 %v5116, %v5118
        %v5120 = vrot.slane %v5106, %v5119
        %v5121 = vcombine.low %v5113, %v5120
        %v5123 = vunpack.c.l.s4 1935823168
        %v5124 = vunpack.c.0.s8 %v5123
        %v5125 = vlaneseq
        %v5126 = vshrl.u32 %v5125, 7
        %v5127 = vsub.s32 %v5124, %v5126
        %v5128 = vrot.slane %v5121, %v5127
        %v5129 = vcombine.low %v4305, %v4327
        %v5130 = vcombine.low %v4319, %v4329
        %v5132 = vunpack.c.l.s4 1935823168
        %v5133 = vunpack.c.0.s8 %v5132
        %v5134 = vlaneseq
        %v5135 = vshrl.u32 %v5134, 7
        %v5136 = vsub.s32 %v5133, %v5135
        %v5137 = vrot.slane %v5129, %v5136
        %v5139 = vunpack.c.l.s4 1935823168
        %v5140 = vunpack.c.0.s8 %v5139
        %v5141 = vlaneseq
        %v5142 = vshrl.u32 %v5141, 7
        %v5143 = vsub.s32 %v5140, %v5142
        %v5144 = vrot.slane %v5130, %v5143
        %v5145 = vcombine.low %v5137, %v5144
        %v5147 = vunpack.c.l.s4 1935823168
        %v5148 = vunpack.c.0.s8 %v5147
        %v5149 = vlaneseq
        %v5150 = vshrl.u32 %v5149, 7
        %v5151 = vsub.s32 %v5148, %v5150
        %v5152 = vrot.slane %v5145, %v5151
        %v5153 = vcombine.low %v4326, %v4330
        %v5154 = vcombine.low %v4328, %v4354
        %v5156 = vunpack.c.l.s4 1935823168
        %v5157 = vunpack.c.0.s8 %v5156
        %v5158 = vlaneseq
        %v5159 = vshrl.u32 %v5158, 7
        %v5160 = vsub.s32 %v5157, %v5159
        %v5161 = vrot.slane %v5153, %v5160
        %v5163 = vunpack.c.l.s4 1935823168
        %v5164 = vunpack.c.0.s8 %v5163
        %v5165 = vlaneseq
        %v5166 = vshrl.u32 %v5165, 7
        %v5167 = vsub.s32 %v5164, %v5166
        %v5168 = vrot.slane %v5154, %v5167
        %v5169 = vcombine.low %v5161, %v5168
        %v5171 = vunpack.c.l.s4 1935823168
        %v5172 = vunpack.c.0.s8 %v5171
        %v5173 = vlaneseq
        %v5174 = vshrl.u32 %v5173, 7
        %v5175 = vsub.s32 %v5172, %v5174
        %v5176 = vrot.slane %v5169, %v5175
        %v5177 = vcombine.low %v4368, %v4378
        %v5178 = vcombine.low %v4376, %v4361
        %v5180 = vunpack.c.l.s4 1935823168
        %v5181 = vunpack.c.0.s8 %v5180
        %v5182 = vlaneseq
        %v5183 = vshrl.u32 %v5182, 7
        %v5184 = vsub.s32 %v5181, %v5183
        %v5185 = vrot.slane %v5177, %v5184
        %v5187 = vunpack.c.l.s4 1935823168
        %v5188 = vunpack.c.0.s8 %v5187
        %v5189 = vlaneseq
        %v5190 = vshrl.u32 %v5189, 7
        %v5191 = vsub.s32 %v5188, %v5190
        %v5192 = vrot.slane %v5178, %v5191
        %v5193 = vcombine.low %v5185, %v5192
        %v5195 = vunpack.c.l.s4 1935823168
        %v5196 = vunpack.c.0.s8 %v5195
        %v5197 = vlaneseq
        %v5198 = vshrl.u32 %v5197, 7
        %v5199 = vsub.s32 %v5196, %v5198
        %v5200 = vrot.slane %v5193, %v5199
        %v5201 = vcombine.low %v4377, %v4403
        %v5202 = vcombine.low %v4379, %v4417
        %v5204 = vunpack.c.l.s4 1935823168
        %v5205 = vunpack.c.0.s8 %v5204
        %v5206 = vlaneseq
        %v5207 = vshrl.u32 %v5206, 7
        %v5208 = vsub.s32 %v5205, %v5207
        %v5209 = vrot.slane %v5201, %v5208
        %v5211 = vunpack.c.l.s4 1935823168
        %v5212 = vunpack.c.0.s8 %v5211
        %v5213 = vlaneseq
        %v5214 = vshrl.u32 %v5213, 7
        %v5215 = vsub.s32 %v5212, %v5214
        %v5216 = vrot.slane %v5202, %v5215
        %v5217 = vcombine.low %v5209, %v5216
        %v5219 = vunpack.c.l.s4 1935823168
        %v5220 = vunpack.c.0.s8 %v5219
        %v5221 = vlaneseq
        %v5222 = vshrl.u32 %v5221, 7
        %v5223 = vsub.s32 %v5220, %v5222
        %v5224 = vrot.slane %v5217, %v5223
        %v5225 = vcombine.low %v4425, %v4410
        %v5226 = vcombine.low %v4426, %v4424
        %v5228 = vunpack.c.l.s4 1935823168
        %v5229 = vunpack.c.0.s8 %v5228
        %v5230 = vlaneseq
        %v5231 = vshrl.u32 %v5230, 7
        %v5232 = vsub.s32 %v5229, %v5231
        %v5233 = vrot.slane %v5225, %v5232
        %v5235 = vunpack.c.l.s4 1935823168
        %v5236 = vunpack.c.0.s8 %v5235
        %v5237 = vlaneseq
        %v5238 = vshrl.u32 %v5237, 7
        %v5239 = vsub.s32 %v5236, %v5238
        %v5240 = vrot.slane %v5226, %v5239
        %v5241 = vcombine.low %v5233, %v5240
        %v5243 = vunpack.c.l.s4 1935823168
        %v5244 = vunpack.c.0.s8 %v5243
        %v5245 = vlaneseq
        %v5246 = vshrl.u32 %v5245, 7
        %v5247 = vsub.s32 %v5244, %v5246
        %v5248 = vrot.slane %v5241, %v5247
        %v5249 = vcombine.low %v4427, %v4465
        %v5250 = vcombine.low %v4451, %v4473
        %v5252 = vunpack.c.l.s4 1935823168
        %v5253 = vunpack.c.0.s8 %v5252
        %v5254 = vlaneseq
        %v5255 = vshrl.u32 %v5254, 7
        %v5256 = vsub.s32 %v5253, %v5255
        %v5257 = vrot.slane %v5249, %v5256
        %v5259 = vunpack.c.l.s4 1935823168
        %v5260 = vunpack.c.0.s8 %v5259
        %v5261 = vlaneseq
        %v5262 = vshrl.u32 %v5261, 7
        %v5263 = vsub.s32 %v5260, %v5262
        %v5264 = vrot.slane %v5250, %v5263
        %v5265 = vcombine.low %v5257, %v5264
        %v5267 = vunpack.c.l.s4 1935823168
        %v5268 = vunpack.c.0.s8 %v5267
        %v5269 = vlaneseq
        %v5270 = vshrl.u32 %v5269, 7
        %v5271 = vsub.s32 %v5268, %v5270
        %v5272 = vrot.slane %v5265, %v5271
        %v5273 = vcombine.low %v4475, %v4472
        %v5274 = vcombine.low %v4458, %v4474
        %v5276 = vunpack.c.l.s4 1935823168
        %v5277 = vunpack.c.0.s8 %v5276
        %v5278 = vlaneseq
        %v5279 = vshrl.u32 %v5278, 7
        %v5280 = vsub.s32 %v5277, %v5279
        %v5281 = vrot.slane %v5273, %v5280
        %v5283 = vunpack.c.l.s4 1935823168
        %v5284 = vunpack.c.0.s8 %v5283
        %v5285 = vlaneseq
        %v5286 = vshrl.u32 %v5285, 7
        %v5287 = vsub.s32 %v5284, %v5286
        %v5288 = vrot.slane %v5274, %v5287
        %v5289 = vcombine.low %v5281, %v5288
        %v5291 = vunpack.c.l.s4 1935823168
        %v5292 = vunpack.c.0.s8 %v5291
        %v5293 = vlaneseq
        %v5294 = vshrl.u32 %v5293, 7
        %v5295 = vsub.s32 %v5292, %v5294
        %v5296 = vrot.slane %v5289, %v5295
        %v5297 = vcombine.low %v4499, %v4521
        %v5298 = vcombine.low %v4513, %v4523
        %v5300 = vunpack.c.l.s4 1935823168
        %v5301 = vunpack.c.0.s8 %v5300
        %v5302 = vlaneseq
        %v5303 = vshrl.u32 %v5302, 7
        %v5304 = vsub.s32 %v5301, %v5303
        %v5305 = vrot.slane %v5297, %v5304
        %v5307 = vunpack.c.l.s4 1935823168
        %v5308 = vunpack.c.0.s8 %v5307
        %v5309 = vlaneseq
        %v5310 = vshrl.u32 %v5309, 7
        %v5311 = vsub.s32 %v5308, %v5310
        %v5312 = vrot.slane %v5298, %v5311
        %v5313 = vcombine.low %v5305, %v5312
        %v5315 = vunpack.c.l.s4 1935823168
        %v5316 = vunpack.c.0.s8 %v5315
        %v5317 = vlaneseq
        %v5318 = vshrl.u32 %v5317, 7
        %v5319 = vsub.s32 %v5316, %v5318
        %v5320 = vrot.slane %v5313, %v5319
        %v5321 = vcombine.low %v4506, %v4522
        %v5322 = vcombine.low %v4520, %v4524
        %v5324 = vunpack.c.l.s4 1935823168
        %v5325 = vunpack.c.0.s8 %v5324
        %v5326 = vlaneseq
        %v5327 = vshrl.u32 %v5326, 7
        %v5328 = vsub.s32 %v5325, %v5327
        %v5329 = vrot.slane %v5321, %v5328
        %v5331 = vunpack.c.l.s4 1935823168
        %v5332 = vunpack.c.0.s8 %v5331
        %v5333 = vlaneseq
        %v5334 = vshrl.u32 %v5333, 7
        %v5335 = vsub.s32 %v5332, %v5334
        %v5336 = vrot.slane %v5322, %v5335
        %v5337 = vcombine.low %v5329, %v5336
        %v5339 = vunpack.c.l.s4 1935823168
        %v5340 = vunpack.c.0.s8 %v5339
        %v5341 = vlaneseq
        %v5342 = vshrl.u32 %v5341, 7
        %v5343 = vsub.s32 %v5340, %v5342
        %v5344 = vrot.slane %v5337, %v5343
        %v5345 = vcombine.low %v4562, %v4572
        %v5346 = vcombine.low %v4570, %v4555
        %v5348 = vunpack.c.l.s4 1935823168
        %v5349 = vunpack.c.0.s8 %v5348
        %v5350 = vlaneseq
        %v5351 = vshrl.u32 %v5350, 7
        %v5352 = vsub.s32 %v5349, %v5351
        %v5353 = vrot.slane %v5345, %v5352
        %v5355 = vunpack.c.l.s4 1935823168
        %v5356 = vunpack.c.0.s8 %v5355
        %v5357 = vlaneseq
        %v5358 = vshrl.u32 %v5357, 7
        %v5359 = vsub.s32 %v5356, %v5358
        %v5360 = vrot.slane %v5346, %v5359
        %v5361 = vcombine.low %v5353, %v5360
        %v5363 = vunpack.c.l.s4 1935823168
        %v5364 = vunpack.c.0.s8 %v5363
        %v5365 = vlaneseq
        %v5366 = vshrl.u32 %v5365, 7
        %v5367 = vsub.s32 %v5364, %v5366
        %v5368 = vrot.slane %v5361, %v5367
        %v5369 = vcombine.low %v4569, %v4573
        %v5370 = vcombine.low %v4571, %v4597
        %v5372 = vunpack.c.l.s4 1935823168
        %v5373 = vunpack.c.0.s8 %v5372
        %v5374 = vlaneseq
        %v5375 = vshrl.u32 %v5374, 7
        %v5376 = vsub.s32 %v5373, %v5375
        %v5377 = vrot.slane %v5369, %v5376
        %v5379 = vunpack.c.l.s4 1935823168
        %v5380 = vunpack.c.0.s8 %v5379
        %v5381 = vlaneseq
        %v5382 = vshrl.u32 %v5381, 7
        %v5383 = vsub.s32 %v5380, %v5382
        %v5384 = vrot.slane %v5370, %v5383
        %v5385 = vcombine.low %v5377, %v5384
        %v5387 = vunpack.c.l.s4 1935823168
        %v5388 = vunpack.c.0.s8 %v5387
        %v5389 = vlaneseq
        %v5390 = vshrl.u32 %v5389, 7
        %v5391 = vsub.s32 %v5388, %v5390
        %v5392 = vrot.slane %v5385, %v5391
        %v5393 = vcombine.low %v4619, %v4604
        %v5394 = vcombine.low %v4621, %v4618
        %v5396 = vunpack.c.l.s4 1935823168
        %v5397 = vunpack.c.0.s8 %v5396
        %v5398 = vlaneseq
        %v5399 = vshrl.u32 %v5398, 7
        %v5400 = vsub.s32 %v5397, %v5399
        %v5401 = vrot.slane %v5393, %v5400
        %v5403 = vunpack.c.l.s4 1935823168
        %v5404 = vunpack.c.0.s8 %v5403
        %v5405 = vlaneseq
        %v5406 = vshrl.u32 %v5405, 7
        %v5407 = vsub.s32 %v5404, %v5406
        %v5408 = vrot.slane %v5394, %v5407
        %v5409 = vcombine.low %v5401, %v5408
        %v5411 = vunpack.c.l.s4 1935823168
        %v5412 = vunpack.c.0.s8 %v5411
        %v5413 = vlaneseq
        %v5414 = vshrl.u32 %v5413, 7
        %v5415 = vsub.s32 %v5412, %v5414
        %v5416 = vrot.slane %v5409, %v5415
        %v5417 = vcombine.low %v4620, %v4646
        %v5418 = vcombine.low %v4622, %v4660
        %v5420 = vunpack.c.l.s4 1935823168
        %v5421 = vunpack.c.0.s8 %v5420
        %v5422 = vlaneseq
        %v5423 = vshrl.u32 %v5422, 7
        %v5424 = vsub.s32 %v5421, %v5423
        %v5425 = vrot.slane %v5417, %v5424
        %v5427 = vunpack.c.l.s4 1935823168
        %v5428 = vunpack.c.0.s8 %v5427
        %v5429 = vlaneseq
        %v5430 = vshrl.u32 %v5429, 7
        %v5431 = vsub.s32 %v5428, %v5430
        %v5432 = vrot.slane %v5418, %v5431
        %v5433 = vcombine.low %v5425, %v5432
        %v5435 = vunpack.c.l.s4 1935823168
        %v5436 = vunpack.c.0.s8 %v5435
        %v5437 = vlaneseq
        %v5438 = vshrl.u32 %v5437, 7
        %v5439 = vsub.s32 %v5436, %v5438
        %v5440 = vrot.slane %v5433, %v5439
        %v5441 = vcombine.low %v4669, %v4667
        %v5442 = vcombine.low %v4653, %v4668
        %v5444 = vunpack.c.l.s4 1935823168
        %v5445 = vunpack.c.0.s8 %v5444
        %v5446 = vlaneseq
        %v5447 = vshrl.u32 %v5446, 7
        %v5448 = vsub.s32 %v5445, %v5447
        %v5449 = vrot.slane %v5441, %v5448
        %v5451 = vunpack.c.l.s4 1935823168
        %v5452 = vunpack.c.0.s8 %v5451
        %v5453 = vlaneseq
        %v5454 = vshrl.u32 %v5453, 7
        %v5455 = vsub.s32 %v5452, %v5454
        %v5456 = vrot.slane %v5442, %v5455
        %v5457 = vcombine.low %v5449, %v5456
        %v5459 = vunpack.c.l.s4 1935823168
        %v5460 = vunpack.c.0.s8 %v5459
        %v5461 = vlaneseq
        %v5462 = vshrl.u32 %v5461, 7
        %v5463 = vsub.s32 %v5460, %v5462
        %v5464 = vrot.slane %v5457, %v5463
        %v5465 = vcombine.low %v4670, %v4708
        %v5466 = vcombine.low %v4694, %v4716
        %v5468 = vunpack.c.l.s4 1935823168
        %v5469 = vunpack.c.0.s8 %v5468
        %v5470 = vlaneseq
        %v5471 = vshrl.u32 %v5470, 7
        %v5472 = vsub.s32 %v5469, %v5471
        %v5473 = vrot.slane %v5465, %v5472
        %v5475 = vunpack.c.l.s4 1935823168
        %v5476 = vunpack.c.0.s8 %v5475
        %v5477 = vlaneseq
        %v5478 = vshrl.u32 %v5477, 7
        %v5479 = vsub.s32 %v5476, %v5478
        %v5480 = vrot.slane %v5466, %v5479
        %v5481 = vcombine.low %v5473, %v5480
        %v5483 = vunpack.c.l.s4 1935823168
        %v5484 = vunpack.c.0.s8 %v5483
        %v5485 = vlaneseq
        %v5486 = vshrl.u32 %v5485, 7
        %v5487 = vsub.s32 %v5484, %v5486
        %v5488 = vrot.slane %v5481, %v5487
        %v5489 = vcombine.low %v4701, %v4717
        %v5490 = vcombine.low %v4715, %v4718
        %v5492 = vunpack.c.l.s4 1935823168
        %v5493 = vunpack.c.0.s8 %v5492
        %v5494 = vlaneseq
        %v5495 = vshrl.u32 %v5494, 7
        %v5496 = vsub.s32 %v5493, %v5495
        %v5497 = vrot.slane %v5489, %v5496
        %v5499 = vunpack.c.l.s4 1935823168
        %v5500 = vunpack.c.0.s8 %v5499
        %v5501 = vlaneseq
        %v5502 = vshrl.u32 %v5501, 7
        %v5503 = vsub.s32 %v5500, %v5502
        %v5504 = vrot.slane %v5490, %v5503
        %v5505 = vcombine.low %v5497, %v5504
        %v5507 = vunpack.c.l.s4 1935823168
        %v5508 = vunpack.c.0.s8 %v5507
        %v5509 = vlaneseq
        %v5510 = vshrl.u32 %v5509, 7
        %v5511 = vsub.s32 %v5508, %v5510
        %v5512 = vrot.slane %v5505, %v5511
        %v5513 = vcombine.low %v4742, %v4764
        %v5514 = vcombine.low %v4756, %v4766
        %v5516 = vunpack.c.l.s4 1935823168
        %v5517 = vunpack.c.0.s8 %v5516
        %v5518 = vlaneseq
        %v5519 = vshrl.u32 %v5518, 7
        %v5520 = vsub.s32 %v5517, %v5519
        %v5521 = vrot.slane %v5513, %v5520
        %v5523 = vunpack.c.l.s4 1935823168
        %v5524 = vunpack.c.0.s8 %v5523
        %v5525 = vlaneseq
        %v5526 = vshrl.u32 %v5525, 7
        %v5527 = vsub.s32 %v5524, %v5526
        %v5528 = vrot.slane %v5514, %v5527
        %v5529 = vcombine.low %v5521, %v5528
        %v5531 = vunpack.c.l.s4 1935823168
        %v5532 = vunpack.c.0.s8 %v5531
        %v5533 = vlaneseq
        %v5534 = vshrl.u32 %v5533, 7
        %v5535 = vsub.s32 %v5532, %v5534
        %v5536 = vrot.slane %v5529, %v5535
        %v5537 = vcombine.low %v4763, %v4767
        %v5538 = vcombine.low %v4765, %v4791
        %v5540 = vunpack.c.l.s4 1935823168
        %v5541 = vunpack.c.0.s8 %v5540
        %v5542 = vlaneseq
        %v5543 = vshrl.u32 %v5542, 7
        %v5544 = vsub.s32 %v5541, %v5543
        %v5545 = vrot.slane %v5537, %v5544
        %v5547 = vunpack.c.l.s4 1935823168
        %v5548 = vunpack.c.0.s8 %v5547
        %v5549 = vlaneseq
        %v5550 = vshrl.u32 %v5549, 7
        %v5551 = vsub.s32 %v5548, %v5550
        %v5552 = vrot.slane %v5538, %v5551
        %v5553 = vcombine.low %v5545, %v5552
        %v5555 = vunpack.c.l.s4 1935823168
        %v5556 = vunpack.c.0.s8 %v5555
        %v5557 = vlaneseq
        %v5558 = vshrl.u32 %v5557, 7
        %v5559 = vsub.s32 %v5556, %v5558
        %v5560 = vrot.slane %v5553, %v5559
        %v5561 = vcombine.low %v4805, %v4815
        %v5562 = vcombine.low %v4813, %v4798
        %v5564 = vunpack.c.l.s4 1935823168
        %v5565 = vunpack.c.0.s8 %v5564
        %v5566 = vlaneseq
        %v5567 = vshrl.u32 %v5566, 7
        %v5568 = vsub.s32 %v5565, %v5567
        %v5569 = vrot.slane %v5561, %v5568
        %v5571 = vunpack.c.l.s4 1935823168
        %v5572 = vunpack.c.0.s8 %v5571
        %v5573 = vlaneseq
        %v5574 = vshrl.u32 %v5573, 7
        %v5575 = vsub.s32 %v5572, %v5574
        %v5576 = vrot.slane %v5562, %v5575
        %v5577 = vcombine.low %v5569, %v5576
        %v5579 = vunpack.c.l.s4 1935823168
        %v5580 = vunpack.c.0.s8 %v5579
        %v5581 = vlaneseq
        %v5582 = vshrl.u32 %v5581, 7
        %v5583 = vsub.s32 %v5580, %v5582
        %v5584 = vrot.slane %v5577, %v5583
        %v5585 = vcombine.low %v4814, %v4840
        %v5586 = vcombine.low %v4816, %v4854
        %v5588 = vunpack.c.l.s4 1935823168
        %v5589 = vunpack.c.0.s8 %v5588
        %v5590 = vlaneseq
        %v5591 = vshrl.u32 %v5590, 7
        %v5592 = vsub.s32 %v5589, %v5591
        %v5593 = vrot.slane %v5585, %v5592
        %v5595 = vunpack.c.l.s4 1935823168
        %v5596 = vunpack.c.0.s8 %v5595
        %v5597 = vlaneseq
        %v5598 = vshrl.u32 %v5597, 7
        %v5599 = vsub.s32 %v5596, %v5598
        %v5600 = vrot.slane %v5586, %v5599
        %v5601 = vcombine.low %v5593, %v5600
        %v5603 = vunpack.c.l.s4 1935823168
        %v5604 = vunpack.c.0.s8 %v5603
        %v5605 = vlaneseq
        %v5606 = vshrl.u32 %v5605, 7
        %v5607 = vsub.s32 %v5604, %v5606
        %v5608 = vrot.slane %v5601, %v5607
        %v5609 = vcombine.low %v4862, %v4847
        %v5610 = vcombine.low %v4863, %v4861
        %v5612 = vunpack.c.l.s4 1935823168
        %v5613 = vunpack.c.0.s8 %v5612
        %v5614 = vlaneseq
        %v5615 = vshrl.u32 %v5614, 7
        %v5616 = vsub.s32 %v5613, %v5615
        %v5617 = vrot.slane %v5609, %v5616
        %v5619 = vunpack.c.l.s4 1935823168
        %v5620 = vunpack.c.0.s8 %v5619
        %v5621 = vlaneseq
        %v5622 = vshrl.u32 %v5621, 7
        %v5623 = vsub.s32 %v5620, %v5622
        %v5624 = vrot.slane %v5610, %v5623
        %v5625 = vcombine.low %v5617, %v5624
        %v5627 = vunpack.c.l.s4 1935823168
        %v5628 = vunpack.c.0.s8 %v5627
        %v5629 = vlaneseq
        %v5630 = vshrl.u32 %v5629, 7
        %v5631 = vsub.s32 %v5628, %v5630
        %v5632 = vrot.slane %v5625, %v5631
        %v5633 = vcombine.low %v4864, %v4902
        %v5634 = vcombine.low %v4888, %v4910
        %v5636 = vunpack.c.l.s4 1935823168
        %v5637 = vunpack.c.0.s8 %v5636
        %v5638 = vlaneseq
        %v5639 = vshrl.u32 %v5638, 7
        %v5640 = vsub.s32 %v5637, %v5639
        %v5641 = vrot.slane %v5633, %v5640
        %v5643 = vunpack.c.l.s4 1935823168
        %v5644 = vunpack.c.0.s8 %v5643
        %v5645 = vlaneseq
        %v5646 = vshrl.u32 %v5645, 7
        %v5647 = vsub.s32 %v5644, %v5646
        %v5648 = vrot.slane %v5634, %v5647
        %v5649 = vcombine.low %v5641, %v5648
        %v5651 = vunpack.c.l.s4 1935823168
        %v5652 = vunpack.c.0.s8 %v5651
        %v5653 = vlaneseq
        %v5654 = vshrl.u32 %v5653, 7
        %v5655 = vsub.s32 %v5652, %v5654
        %v5656 = vrot.slane %v5649, %v5655
        %v5657 = vcombine.low %v4912, %v4909
        %v5658 = vcombine.low %v4895, %v4911
        %v5660 = vunpack.c.l.s4 1935823168
        %v5661 = vunpack.c.0.s8 %v5660
        %v5662 = vlaneseq
        %v5663 = vshrl.u32 %v5662, 7
        %v5664 = vsub.s32 %v5661, %v5663
        %v5665 = vrot.slane %v5657, %v5664
        %v5667 = vunpack.c.l.s4 1935823168
        %v5668 = vunpack.c.0.s8 %v5667
        %v5669 = vlaneseq
        %v5670 = vshrl.u32 %v5669, 7
        %v5671 = vsub.s32 %v5668, %v5670
        %v5672 = vrot.slane %v5658, %v5671
        %v5673 = vcombine.low %v5665, %v5672
        %v5675 = vunpack.c.l.s4 1935823168
        %v5676 = vunpack.c.0.s8 %v5675
        %v5677 = vlaneseq
        %v5678 = vshrl.u32 %v5677, 7
        %v5679 = vsub.s32 %v5676, %v5678
        %v5680 = vrot.slane %v5673, %v5679
        %5713 = vst [vmem:[%s419] sm:$0xf] %v4936
        %5714 = vst [vmem:[%s419 + $0x4] sm:$0xf] %v4960
        %5715 = vst [vmem:[%s419 + $0x8] sm:$0xf] %v4984
        %5716 = vst [vmem:[%s419 + $0xc] sm:$0xf] %v5008
        %5717 = vst [vmem:[%s419 + $0x10] sm:$0xf] %v5032
        %5718 = vst [vmem:[%s419 + $0x14] sm:$0xf] %v5056
        %5719 = vst [vmem:[%s419 + $0x18] sm:$0xf] %v5080
        %5720 = vst [vmem:[%s419 + $0x1c] sm:$0xf] %v5104
        %5721 = vst [vmem:[%s419 + $0x20] sm:$0xf] %v5128
        %5722 = vst [vmem:[%s419 + $0x24] sm:$0xf] %v5152
        %5723 = vst [vmem:[%s419 + $0x28] sm:$0xf] %v5176
        %5724 = vst [vmem:[%s419 + $0x2c] sm:$0xf] %v5200
        %5725 = vst [vmem:[%s419 + $0x30] sm:$0xf] %v5224
        %5726 = vst [vmem:[%s419 + $0x34] sm:$0xf] %v5248
        %5727 = vst [vmem:[%s419 + $0x38] sm:$0xf] %v5272
        %5728 = vst [vmem:[%s419 + $0x3c] sm:$0xf] %v5296
        %5729 = vst [vmem:[%s419 + $0x40] sm:$0xf] %v5320
        %5730 = vst [vmem:[%s419 + $0x44] sm:$0xf] %v5344
        %5731 = vst [vmem:[%s419 + $0x48] sm:$0xf] %v5368
        %5732 = vst [vmem:[%s419 + $0x4c] sm:$0xf] %v5392
        %5733 = vst [vmem:[%s419 + $0x50] sm:$0xf] %v5416
        %5734 = vst [vmem:[%s419 + $0x54] sm:$0xf] %v5440
        %5735 = vst [vmem:[%s419 + $0x58] sm:$0xf] %v5464
        %5736 = vst [vmem:[%s419 + $0x5c] sm:$0xf] %v5488
        %5737 = vst [vmem:[%s419 + $0x60] sm:$0xf] %v5512
        %5738 = vst [vmem:[%s419 + $0x64] sm:$0xf] %v5536
        %5739 = vst [vmem:[%s419 + $0x68] sm:$0xf] %v5560
        %5740 = vst [vmem:[%s419 + $0x6c] sm:$0xf] %v5584
        %5741 = vst [vmem:[%s419 + $0x70] sm:$0xf] %v5608
        %5742 = vst [vmem:[%s419 + $0x74] sm:$0xf] %v5632
        %5743 = vst [vmem:[%s419 + $0x78] sm:$0xf] %v5656
        %5744 = vst [vmem:[%s419 + $0x7c] sm:$0xf] %v5680
        %s5745 = sand.u32 %s210, 1
        %s5746 = scalar_lea.sflag [#allocation4], %s5745
        %s5747 = sand.u32 %s210, 1
        %s5748 = smul.addr %s5747, 128
        %s5749 = scalar_lea.vmem [#allocation16], %s5748
        // Predicated region
        $region85: #{bottleneck_forward.1} parent=51 // pred_check
          %p5750 = pneg %p220
        $region86: #{bottleneck_forward.1} parent=51 // pred_check_branch
          %5752 = sbr.rel (%p5750) target = $region88
        $region87: #{bottleneck_forward.1} parent=51 // pred_region
          %s5754 = ssub.s32 2048, 2048
          %5755 = vsyncadd %s5746, %s5754
          %s5756 = smul.addr %s29, 32
          %s5757 = smul.addr %s5756, 64
          %s5758 = scalar_lea.hbm %s8, %s5757
          %s5759 = sshll.u32 %s5749, 4
          %s5760 = int_to_ptr.vmem [resolvable:$true] %s5759
          %5765 = dma.vmem_to_hbm [thread:$0]  %s5760, 2048, %s5758, %s5746, 64, 64, 4
        $region88: #{bottleneck_forward.1} parent=51 // pred_fallthru
          _
      $region52: #{bottleneck_forward.1} parent=5 // pred_fallthru
        _
      %p5766 = scmp.le.s32.totalorder 2, %s24
      // Predicated region
      $region89: #{bottleneck_forward.1} parent=5 // pred_check
        %p5767 = pneg %p5766
      $region90: #{bottleneck_forward.1} parent=5 // pred_check_branch
        %5769 = sbr.rel (%p5767) target = $region92
      $region91: #{bottleneck_forward.1} parent=5 // pred_region
        %s5770 = ssub.s32 %s24, 2
        // Predicated region
        $region93: #{bottleneck_forward.1} parent=91 // pred_check
          %p5771 = pneg %p226
        $region94: #{bottleneck_forward.1} parent=91 // pred_check_branch
          %5773 = sbr.rel (%p5771) target = $region96
        $region95: #{bottleneck_forward.1} parent=91 // pred_region
          %s5774 = sand.u32 %s211, 1
          %s5775 = scalar_lea.sflag [#allocation4], %s5774
          %s5776 = sand.u32 %s211, 1
          %s5777 = smul.addr %s5776, 128
          %s5778 = scalar_lea.vmem [#allocation16], %s5777
          %5779 = dma.done %s5775, 2048
        $region96: #{bottleneck_forward.1} parent=91 // pred_fallthru
          _
      $region92: #{bottleneck_forward.1} parent=5 // pred_fallthru
        _
    $region6: #{bottleneck_forward.1} parent=1 // loop_footer
      %s28 = sadd.s32 1, %s24
    $region7: #{bottleneck_forward.1} parent=1 // loop_footer_branch
      %23 = sbr.rel target = $region3
    $region8: #{bottleneck_forward.1} parent=1 // loop_exit
      _
    %5780 = vsyncpa [#allocation3], 1
    %s5781 = scalar_lea.sflag [#allocation3], 1
    %5782 = vsyncpa %s5781, 1
    %5783 = vsyncpa [#allocation6], 1
    %5784 = vsyncpa [#allocation9], 1
    %5785 = vsyncpa [#allocation12], 1
    %5786 = vsyncpa [#allocation15], 1
    %5787 = vsyncpa [#allocation4], 1
    %s5788 = scalar_lea.sflag [#allocation4], 1
    %5789 = vsyncpa %s5788, 1

</llo_original>
